<compile_context>
chip_gen: v7x
topology: tpu7x:2x2x1
jax: 0.10.0
libtpu: 0.0.40
codegen_flags: <defaults>
</compile_context>

<pallas_src>
import functools

import jax
import jax.numpy as jnp
from jax.experimental import pallas as pl
from jax.experimental.pallas import tpu as pltpu


# ----------------------------- Pallas kernel ------------------------------ #
def _thermo_kernel(x_ref, w_ref, b_ref, o_ref, xpad_ref):
    """x_ref:    (Nb, Cin, H, W)        f32  unpadded NCHW image block
       w_ref:    (9, Cout, Cin)         f32  tap-major folded/merged conv weights
       b_ref:    (Cout, 1)              f32  folded bias
       o_ref:    (Nb, Cout, H*W)        f32  output (lane-dense last dim)
       xpad_ref: (Nb, Cin, H+2, W+2)    f32  VMEM scratch for SAME zero-padding"""
    nb, cin, h, w = x_ref.shape
    cout = o_ref.shape[1]

    # Zero-pad inside the kernel (avoids a separate wrapper-side jnp.pad HBM pass).
    xpad_ref[...] = jnp.zeros(xpad_ref.shape, xpad_ref.dtype)
    xpad_ref[:, :, 1:h + 1, 1:w + 1] = x_ref[...]

    bias = b_ref[...]                                     # (Cout, 1)

    for b in range(nb):                                   # static unroll over images
        xi = xpad_ref[b]                                  # (Cin, H+2, W+2)
        acc = jnp.zeros((cout, h * w), jnp.float32)
        # Accumulated matmul over the 9 taps (no im2col materialization, no concat).
        for dh in range(3):
            for dw in range(3):
                tap = xi[:, dh:dh + h, dw:dw + w].reshape(cin, h * w)   # (Cin, H*W)
                acc += jnp.dot(w_ref[dh * 3 + dw], tap,
                               preferred_element_type=jnp.float32)       # (Cout, H*W)
        o_ref[b] = acc + bias                              # lane-dense store


def _pallas_thermo(x_nchw, w9, bc):
    n, cin, h, w = x_nchw.shape
    cout = w9.shape[1]

    # Pack several images per grid step (amortizes per-step overhead for small maps).
    nb = 1
    for cand in range(min(n, 8), 0, -1):
        if n % cand == 0:
            nb = cand
            break

    return pl.pallas_call(
        _thermo_kernel,
        out_shape=jax.ShapeDtypeStruct((n, cout, h * w), jnp.float32),
        grid_spec=pltpu.PrefetchScalarGridSpec(
            num_scalar_prefetch=0,
            grid=(n // nb,),
            in_specs=[
                pl.BlockSpec((nb, cin, h, w), lambda i: (i, 0, 0, 0)),   # images
                pl.BlockSpec((9, cout, cin), lambda i: (0, 0, 0)),       # folded weights
                pl.BlockSpec((cout, 1), lambda i: (0, 0)),               # folded bias
            ],
            out_specs=pl.BlockSpec((nb, cout, h * w), lambda i: (i, 0, 0)),
            scratch_shapes=[pltpu.VMEM((nb, cin, h + 2, w + 2), jnp.float32)],
        ),
        compiler_params=pltpu.CompilerParams(
            dimension_semantics=("parallel",)),            # shards steps across v7x TCs
    )(x_nchw, w9, bc)


# ------------------------------- wrapper ----------------------------------- #
@functools.partial(jax.jit, static_argnames=("thermometric",))
def thermometric_module_forward(x_nchw, params, thermometric=True):
    """Forward of ThermometricModule with two Conv2d alternatives.

    x_nchw: (N, Cin, H, W) float32 (PyTorch convention)
    returns: (N, Cout, H, W) float32
    """
    w3x3, b3x3, w1x1, b1x1, alpha = (
        params["w3x3"], params["b3x3"], params["w1x1"], params["b1x1"],
        params["alpha"])
    n, cin, h, w = x_nchw.shape
    cout = w3x3.shape[0]

    # ThermometricCombiner channel weights.
    if thermometric:
        cum = jnp.cumsum(jax.nn.softmax(alpha))            # thermometric encoding
        m0, m1 = cum, 1.0 - cum                            # (Cout,) each
    else:
        t2 = jax.nn.softmax(alpha[:2])
        m0 = jnp.full((cout,), t2[0])
        m1 = jnp.full((cout,), t2[1])

    # Fold masks/biases into the weights (tap-major (9, Cout, Cin)) and merge the
    # 1x1 conv into the centre tap (dh=1, dw=1 -> tap index 4). The kernel body is
    # then a single accumulated matmul + bias add.
    w9 = jnp.transpose(w3x3, (2, 3, 0, 1)).reshape(9, cout, cin) * m0[None, :, None]
    w9 = w9.at[4].add(w1x1[:, :, 0, 0] * m1[:, None])
    bc = (b3x3 * m0 + b1x1 * m1).reshape(cout, 1)

    # x is read in its native NCHW f32 layout: no wrapper pad/transpose/cast pass.
    out = _pallas_thermo(x_nchw.astype(jnp.float32),
                         w9.astype(jnp.float32),
                         bc.astype(jnp.float32))           # (N, Cout, H*W) f32
    return out.reshape(n, cout, h, w)                      # already NCHW order


# ------------------------------- reference --------------------------------- #
def _reference_forward(x_nchw, params):
    w3x3, b3x3, w1x1, b1x1, alpha = (
        params["w3x3"], params["b3x3"], params["w1x1"], params["b1x1"],
        params["alpha"])
    x_nhwc = jnp.transpose(x_nchw, (0, 2, 3, 1))
    y0 = jax.lax.conv_general_dilated(
        x_nhwc, jnp.transpose(w3x3, (2, 3, 1, 0)), (1, 1), "SAME",
        dimension_numbers=("NHWC", "HWIO", "NHWC")) + b3x3
    y1 = jax.lax.conv_general_dilated(
        x_nhwc, jnp.transpose(w1x1, (2, 3, 1, 0)), (1, 1), "SAME",
        dimension_numbers=("NHWC", "HWIO", "NHWC")) + b1x1
    cum = jnp.cumsum(jax.nn.softmax(alpha))
    out = y0 * cum + y1 * (1.0 - cum)
    return jnp.transpose(out, (0, 3, 1, 2))


# --------------------------------- main ------------------------------------ #
if __name__ == "__main__":
    key = jax.random.PRNGKey(0)
    k_x, k_w3, k_b3, k_w1, k_b1, k_a = jax.random.split(key, 6)

    N, CIN, H, W = 2, 4, 16, 16
    COUT = 8

    x = jax.random.normal(k_x, (N, CIN, H, W), dtype=jnp.float32)
    params = {
        "w3x3": 0.1 * jax.random.normal(k_w3, (COUT, CIN, 3, 3), jnp.float32),
        "b3x3": 0.1 * jax.random.normal(k_b3, (COUT,), jnp.float32),
        "w1x1": 0.1 * jax.random.normal(k_w1, (COUT, CIN, 1, 1), jnp.float32),
        "b1x1": 0.1 * jax.random.normal(k_b1, (COUT,), jnp.float32),
        "alpha": jax.random.normal(k_a, (COUT,), jnp.float32),
    }

    out = thermometric_module_forward(x, params, thermometric=True)
    out = jax.block_until_ready(out)

    ref = jax.block_until_ready(_reference_forward(x, params))
    assert out.shape == (N, COUT, H, W)
    # Everything is f32 end-to-end now -> tight tolerance.
    assert jnp.allclose(out, ref, atol=1e-3, rtol=1e-3), "mismatch vs reference"

    print("KERNEL_OK")
</pallas_src>

<mosaic_0001>
module attributes {stable_mosaic.version = 11 : i64} {
  func.func @_thermo_kernel(%arg0: i32, %arg1: memref<2x4x16x16xf32, #tpu.memory_space<vmem>>, %arg2: memref<9x8x4xf32, #tpu.memory_space<vmem>>, %arg3: memref<8x1xf32, #tpu.memory_space<vmem>>, %arg4: memref<2x8x256xf32, #tpu.memory_space<vmem>>, %arg5: memref<2x4x18x18xf32, #tpu.memory_space<vmem>>) attributes {dimension_semantics = [#tpu.dimension_semantics<parallel>], iteration_bounds = array<i64: 1>, scalar_prefetch = 0 : i64, scratch_operands = 1 : i64, tpu.core_type = #tpu.core_type<tc>, window_params = [{transform_indices = @transform_0, window_bounds = array<i64: 2, 4, 16, 16>}, {pipeline_mode = #tpu.pipeline_mode<synchronous>, transform_indices = @transform_1, window_bounds = array<i64: 9, 8, 4>}, {pipeline_mode = #tpu.pipeline_mode<synchronous>, transform_indices = @transform_2, window_bounds = array<i64: 8, 1>}, {transform_indices = @transform_3, window_bounds = array<i64: 2, 8, 256>}]} {
    %cst = arith.constant 0.000000e+00 : f32
    %0 = vector.broadcast %cst : f32 to vector<2x4x18x18xf32>
    %c0 = arith.constant 0 : index
    %c0_0 = arith.constant 0 : index
    %c0_1 = arith.constant 0 : index
    %c0_2 = arith.constant 0 : index
    %1 = vector.load %arg5[%c0, %c0_0, %c0_1, %c0_2] : memref<2x4x18x18xf32, #tpu.memory_space<vmem>>, vector<2x4x18x18xf32>
    tpu.vector_store %arg5[%c0, %c0_0, %c0_1, %c0_2], %0 {strides = array<i32>} : memref<2x4x18x18xf32, #tpu.memory_space<vmem>>, vector<2x4x18x18xf32>,
    %c0_3 = arith.constant 0 : index
    %c0_4 = arith.constant 0 : index
    %c0_5 = arith.constant 0 : index
    %c0_6 = arith.constant 0 : index
    %2 = vector.load %arg1[%c0_3, %c0_4, %c0_5, %c0_6] : memref<2x4x16x16xf32, #tpu.memory_space<vmem>>, vector<2x4x16x16xf32>
    %c0_7 = arith.constant 0 : index
    %c0_8 = arith.constant 0 : index
    %c1 = arith.constant 1 : index
    %c1_9 = arith.constant 1 : index
    %3 = vector.load %arg5[%c0_7, %c0_8, %c1, %c1_9] : memref<2x4x18x18xf32, #tpu.memory_space<vmem>>, vector<2x4x16x16xf32>
    tpu.vector_store %arg5[%c0_7, %c0_8, %c1, %c1_9], %2 {strides = array<i32>} : memref<2x4x18x18xf32, #tpu.memory_space<vmem>>, vector<2x4x16x16xf32>,
    %c0_10 = arith.constant 0 : index
    %c0_11 = arith.constant 0 : index
    %4 = vector.load %arg3[%c0_10, %c0_11] : memref<8x1xf32, #tpu.memory_space<vmem>>, vector<8x1xf32>
    %c0_12 = arith.constant 0 : index
    %c0_13 = arith.constant 0 : index
    %c0_14 = arith.constant 0 : index
    %c0_15 = arith.constant 0 : index
    %5 = vector.load %arg5[%c0_12, %c0_13, %c0_14, %c0_15] : memref<2x4x18x18xf32, #tpu.memory_space<vmem>>, vector<1x4x18x18xf32>
    %6 = vector.shape_cast %5 : vector<1x4x18x18xf32> to vector<4x18x18xf32>
    %cst_16 = arith.constant 0.000000e+00 : f32
    %7 = vector.broadcast %cst_16 : f32 to vector<8x256xf32>
    %8 = vector.extract_strided_slice %6 {offsets = [0, 0, 0], sizes = [4, 16, 16], strides = [1, 1, 1]} : vector<4x18x18xf32> to vector<4x16x16xf32>
    %9 = vector.shape_cast %8 : vector<4x16x16xf32> to vector<4x256xf32>
    %c0_17 = arith.constant 0 : index
    %c0_18 = arith.constant 0 : index
    %c0_19 = arith.constant 0 : index
    %10 = vector.load %arg2[%c0_17, %c0_18, %c0_19] : memref<9x8x4xf32, #tpu.memory_space<vmem>>, vector<1x8x4xf32>
    %11 = vector.shape_cast %10 : vector<1x8x4xf32> to vector<8x4xf32>
    %cst_20 = arith.constant dense<0.000000e+00> : vector<8x256xf32>
    %12 = tpu.matmul %11, %9, %cst_20 {dimension_numbers = #tpu.dot_dimension_numbers<[1], [0], [0], [1], [0, 0, 1, 1], [], []>} : vector<8x4xf32>, vector<4x256xf32>, vector<8x256xf32> -> vector<8x256xf32>
    %13 = arith.addf %7, %12 : vector<8x256xf32>
    %14 = vector.extract_strided_slice %6 {offsets = [0, 0, 1], sizes = [4, 16, 16], strides = [1, 1, 1]} : vector<4x18x18xf32> to vector<4x16x16xf32>
    %15 = vector.shape_cast %14 : vector<4x16x16xf32> to vector<4x256xf32>
    %c1_21 = arith.constant 1 : index
    %c0_22 = arith.constant 0 : index
    %c0_23 = arith.constant 0 : index
    %16 = vector.load %arg2[%c1_21, %c0_22, %c0_23] : memref<9x8x4xf32, #tpu.memory_space<vmem>>, vector<1x8x4xf32>
    %17 = vector.shape_cast %16 : vector<1x8x4xf32> to vector<8x4xf32>
    %cst_24 = arith.constant dense<0.000000e+00> : vector<8x256xf32>
    %18 = tpu.matmul %17, %15, %cst_24 {dimension_numbers = #tpu.dot_dimension_numbers<[1], [0], [0], [1], [0, 0, 1, 1], [], []>} : vector<8x4xf32>, vector<4x256xf32>, vector<8x256xf32> -> vector<8x256xf32>
    %19 = arith.addf %13, %18 : vector<8x256xf32>
    %20 = vector.extract_strided_slice %6 {offsets = [0, 0, 2], sizes = [4, 16, 16], strides = [1, 1, 1]} : vector<4x18x18xf32> to vector<4x16x16xf32>
    %21 = vector.shape_cast %20 : vector<4x16x16xf32> to vector<4x256xf32>
    %c2 = arith.constant 2 : index
    %c0_25 = arith.constant 0 : index
    %c0_26 = arith.constant 0 : index
    %22 = vector.load %arg2[%c2, %c0_25, %c0_26] : memref<9x8x4xf32, #tpu.memory_space<vmem>>, vector<1x8x4xf32>
    %23 = vector.shape_cast %22 : vector<1x8x4xf32> to vector<8x4xf32>
    %cst_27 = arith.constant dense<0.000000e+00> : vector<8x256xf32>
    %24 = tpu.matmul %23, %21, %cst_27 {dimension_numbers = #tpu.dot_dimension_numbers<[1], [0], [0], [1], [0, 0, 1, 1], [], []>} : vector<8x4xf32>, vector<4x256xf32>, vector<8x256xf32> -> vector<8x256xf32>
    %25 = arith.addf %19, %24 : vector<8x256xf32>
    %26 = vector.extract_strided_slice %6 {offsets = [0, 1, 0], sizes = [4, 16, 16], strides = [1, 1, 1]} : vector<4x18x18xf32> to vector<4x16x16xf32>
    %27 = vector.shape_cast %26 : vector<4x16x16xf32> to vector<4x256xf32>
    %c3 = arith.constant 3 : index
    %c0_28 = arith.constant 0 : index
    %c0_29 = arith.constant 0 : index
    %28 = vector.load %arg2[%c3, %c0_28, %c0_29] : memref<9x8x4xf32, #tpu.memory_space<vmem>>, vector<1x8x4xf32>
    %29 = vector.shape_cast %28 : vector<1x8x4xf32> to vector<8x4xf32>
    %cst_30 = arith.constant dense<0.000000e+00> : vector<8x256xf32>
    %30 = tpu.matmul %29, %27, %cst_30 {dimension_numbers = #tpu.dot_dimension_numbers<[1], [0], [0], [1], [0, 0, 1, 1], [], []>} : vector<8x4xf32>, vector<4x256xf32>, vector<8x256xf32> -> vector<8x256xf32>
    %31 = arith.addf %25, %30 : vector<8x256xf32>
    %32 = vector.extract_strided_slice %6 {offsets = [0, 1, 1], sizes = [4, 16, 16], strides = [1, 1, 1]} : vector<4x18x18xf32> to vector<4x16x16xf32>
    %33 = vector.shape_cast %32 : vector<4x16x16xf32> to vector<4x256xf32>
    %c4 = arith.constant 4 : index
    %c0_31 = arith.constant 0 : index
    %c0_32 = arith.constant 0 : index
    %34 = vector.load %arg2[%c4, %c0_31, %c0_32] : memref<9x8x4xf32, #tpu.memory_space<vmem>>, vector<1x8x4xf32>
    %35 = vector.shape_cast %34 : vector<1x8x4xf32> to vector<8x4xf32>
    %cst_33 = arith.constant dense<0.000000e+00> : vector<8x256xf32>
    %36 = tpu.matmul %35, %33, %cst_33 {dimension_numbers = #tpu.dot_dimension_numbers<[1], [0], [0], [1], [0, 0, 1, 1], [], []>} : vector<8x4xf32>, vector<4x256xf32>, vector<8x256xf32> -> vector<8x256xf32>
    %37 = arith.addf %31, %36 : vector<8x256xf32>
    %38 = vector.extract_strided_slice %6 {offsets = [0, 1, 2], sizes = [4, 16, 16], strides = [1, 1, 1]} : vector<4x18x18xf32> to vector<4x16x16xf32>
    %39 = vector.shape_cast %38 : vector<4x16x16xf32> to vector<4x256xf32>
    %c5 = arith.constant 5 : index
    %c0_34 = arith.constant 0 : index
    %c0_35 = arith.constant 0 : index
    %40 = vector.load %arg2[%c5, %c0_34, %c0_35] : memref<9x8x4xf32, #tpu.memory_space<vmem>>, vector<1x8x4xf32>
    %41 = vector.shape_cast %40 : vector<1x8x4xf32> to vector<8x4xf32>
    %cst_36 = arith.constant dense<0.000000e+00> : vector<8x256xf32>
    %42 = tpu.matmul %41, %39, %cst_36 {dimension_numbers = #tpu.dot_dimension_numbers<[1], [0], [0], [1], [0, 0, 1, 1], [], []>} : vector<8x4xf32>, vector<4x256xf32>, vector<8x256xf32> -> vector<8x256xf32>
    %43 = arith.addf %37, %42 : vector<8x256xf32>
    %44 = vector.extract_strided_slice %6 {offsets = [0, 2, 0], sizes = [4, 16, 16], strides = [1, 1, 1]} : vector<4x18x18xf32> to vector<4x16x16xf32>
    %45 = vector.shape_cast %44 : vector<4x16x16xf32> to vector<4x256xf32>
    %c6 = arith.constant 6 : index
    %c0_37 = arith.constant 0 : index
    %c0_38 = arith.constant 0 : index
    %46 = vector.load %arg2[%c6, %c0_37, %c0_38] : memref<9x8x4xf32, #tpu.memory_space<vmem>>, vector<1x8x4xf32>
    %47 = vector.shape_cast %46 : vector<1x8x4xf32> to vector<8x4xf32>
    %cst_39 = arith.constant dense<0.000000e+00> : vector<8x256xf32>
    %48 = tpu.matmul %47, %45, %cst_39 {dimension_numbers = #tpu.dot_dimension_numbers<[1], [0], [0], [1], [0, 0, 1, 1], [], []>} : vector<8x4xf32>, vector<4x256xf32>, vector<8x256xf32> -> vector<8x256xf32>
    %49 = arith.addf %43, %48 : vector<8x256xf32>
    %50 = vector.extract_strided_slice %6 {offsets = [0, 2, 1], sizes = [4, 16, 16], strides = [1, 1, 1]} : vector<4x18x18xf32> to vector<4x16x16xf32>
    %51 = vector.shape_cast %50 : vector<4x16x16xf32> to vector<4x256xf32>
    %c7 = arith.constant 7 : index
    %c0_40 = arith.constant 0 : index
    %c0_41 = arith.constant 0 : index
    %52 = vector.load %arg2[%c7, %c0_40, %c0_41] : memref<9x8x4xf32, #tpu.memory_space<vmem>>, vector<1x8x4xf32>
    %53 = vector.shape_cast %52 : vector<1x8x4xf32> to vector<8x4xf32>
    %cst_42 = arith.constant dense<0.000000e+00> : vector<8x256xf32>
    %54 = tpu.matmul %53, %51, %cst_42 {dimension_numbers = #tpu.dot_dimension_numbers<[1], [0], [0], [1], [0, 0, 1, 1], [], []>} : vector<8x4xf32>, vector<4x256xf32>, vector<8x256xf32> -> vector<8x256xf32>
    %55 = arith.addf %49, %54 : vector<8x256xf32>
    %56 = vector.extract_strided_slice %6 {offsets = [0, 2, 2], sizes = [4, 16, 16], strides = [1, 1, 1]} : vector<4x18x18xf32> to vector<4x16x16xf32>
    %57 = vector.shape_cast %56 : vector<4x16x16xf32> to vector<4x256xf32>
    %c8 = arith.constant 8 : index
    %c0_43 = arith.constant 0 : index
    %c0_44 = arith.constant 0 : index
    %58 = vector.load %arg2[%c8, %c0_43, %c0_44] : memref<9x8x4xf32, #tpu.memory_space<vmem>>, vector<1x8x4xf32>
    %59 = vector.shape_cast %58 : vector<1x8x4xf32> to vector<8x4xf32>
    %cst_45 = arith.constant dense<0.000000e+00> : vector<8x256xf32>
    %60 = tpu.matmul %59, %57, %cst_45 {dimension_numbers = #tpu.dot_dimension_numbers<[1], [0], [0], [1], [0, 0, 1, 1], [], []>} : vector<8x4xf32>, vector<4x256xf32>, vector<8x256xf32> -> vector<8x256xf32>
    %61 = arith.addf %55, %60 : vector<8x256xf32>
    %62 = vector.broadcast %4 : vector<8x1xf32> to vector<8x256xf32>
    %63 = arith.addf %61, %62 : vector<8x256xf32>
    %c0_46 = arith.constant 0 : index
    %c0_47 = arith.constant 0 : index
    %c0_48 = arith.constant 0 : index
    %64 = vector.load %arg4[%c0_46, %c0_47, %c0_48] : memref<2x8x256xf32, #tpu.memory_space<vmem>>, vector<1x8x256xf32>
    %65 = vector.shape_cast %64 : vector<1x8x256xf32> to vector<8x256xf32>
    %66 = vector.shape_cast %63 : vector<8x256xf32> to vector<1x8x256xf32>
    tpu.vector_store %arg4[%c0_46, %c0_47, %c0_48], %66 {strides = array<i32>} : memref<2x8x256xf32, #tpu.memory_space<vmem>>, vector<1x8x256xf32>,
    %c1_49 = arith.constant 1 : index
    %c0_50 = arith.constant 0 : index
    %c0_51 = arith.constant 0 : index
    %c0_52 = arith.constant 0 : index
    %67 = vector.load %arg5[%c1_49, %c0_50, %c0_51, %c0_52] : memref<2x4x18x18xf32, #tpu.memory_space<vmem>>, vector<1x4x18x18xf32>
    %68 = vector.shape_cast %67 : vector<1x4x18x18xf32> to vector<4x18x18xf32>
    %cst_53 = arith.constant 0.000000e+00 : f32
    %69 = vector.broadcast %cst_53 : f32 to vector<8x256xf32>
    %70 = vector.extract_strided_slice %68 {offsets = [0, 0, 0], sizes = [4, 16, 16], strides = [1, 1, 1]} : vector<4x18x18xf32> to vector<4x16x16xf32>
    %71 = vector.shape_cast %70 : vector<4x16x16xf32> to vector<4x256xf32>
    %c0_54 = arith.constant 0 : index
    %c0_55 = arith.constant 0 : index
    %c0_56 = arith.constant 0 : index
    %72 = vector.load %arg2[%c0_54, %c0_55, %c0_56] : memref<9x8x4xf32, #tpu.memory_space<vmem>>, vector<1x8x4xf32>
    %73 = vector.shape_cast %72 : vector<1x8x4xf32> to vector<8x4xf32>
    %cst_57 = arith.constant dense<0.000000e+00> : vector<8x256xf32>
    %74 = tpu.matmul %73, %71, %cst_57 {dimension_numbers = #tpu.dot_dimension_numbers<[1], [0], [0], [1], [0, 0, 1, 1], [], []>} : vector<8x4xf32>, vector<4x256xf32>, vector<8x256xf32> -> vector<8x256xf32>
    %75 = arith.addf %69, %74 : vector<8x256xf32>
    %76 = vector.extract_strided_slice %68 {offsets = [0, 0, 1], sizes = [4, 16, 16], strides = [1, 1, 1]} : vector<4x18x18xf32> to vector<4x16x16xf32>
    %77 = vector.shape_cast %76 : vector<4x16x16xf32> to vector<4x256xf32>
    %c1_58 = arith.constant 1 : index
    %c0_59 = arith.constant 0 : index
    %c0_60 = arith.constant 0 : index
    %78 = vector.load %arg2[%c1_58, %c0_59, %c0_60] : memref<9x8x4xf32, #tpu.memory_space<vmem>>, vector<1x8x4xf32>
    %79 = vector.shape_cast %78 : vector<1x8x4xf32> to vector<8x4xf32>
    %cst_61 = arith.constant dense<0.000000e+00> : vector<8x256xf32>
    %80 = tpu.matmul %79, %77, %cst_61 {dimension_numbers = #tpu.dot_dimension_numbers<[1], [0], [0], [1], [0, 0, 1, 1], [], []>} : vector<8x4xf32>, vector<4x256xf32>, vector<8x256xf32> -> vector<8x256xf32>
    %81 = arith.addf %75, %80 : vector<8x256xf32>
    %82 = vector.extract_strided_slice %68 {offsets = [0, 0, 2], sizes = [4, 16, 16], strides = [1, 1, 1]} : vector<4x18x18xf32> to vector<4x16x16xf32>
    %83 = vector.shape_cast %82 : vector<4x16x16xf32> to vector<4x256xf32>
    %c2_62 = arith.constant 2 : index
    %c0_63 = arith.constant 0 : index
    %c0_64 = arith.constant 0 : index
    %84 = vector.load %arg2[%c2_62, %c0_63, %c0_64] : memref<9x8x4xf32, #tpu.memory_space<vmem>>, vector<1x8x4xf32>
    %85 = vector.shape_cast %84 : vector<1x8x4xf32> to vector<8x4xf32>
    %cst_65 = arith.constant dense<0.000000e+00> : vector<8x256xf32>
    %86 = tpu.matmul %85, %83, %cst_65 {dimension_numbers = #tpu.dot_dimension_numbers<[1], [0], [0], [1], [0, 0, 1, 1], [], []>} : vector<8x4xf32>, vector<4x256xf32>, vector<8x256xf32> -> vector<8x256xf32>
    %87 = arith.addf %81, %86 : vector<8x256xf32>
    %88 = vector.extract_strided_slice %68 {offsets = [0, 1, 0], sizes = [4, 16, 16], strides = [1, 1, 1]} : vector<4x18x18xf32> to vector<4x16x16xf32>
    %89 = vector.shape_cast %88 : vector<4x16x16xf32> to vector<4x256xf32>
    %c3_66 = arith.constant 3 : index
    %c0_67 = arith.constant 0 : index
    %c0_68 = arith.constant 0 : index
    %90 = vector.load %arg2[%c3_66, %c0_67, %c0_68] : memref<9x8x4xf32, #tpu.memory_space<vmem>>, vector<1x8x4xf32>
    %91 = vector.shape_cast %90 : vector<1x8x4xf32> to vector<8x4xf32>
    %cst_69 = arith.constant dense<0.000000e+00> : vector<8x256xf32>
    %92 = tpu.matmul %91, %89, %cst_69 {dimension_numbers = #tpu.dot_dimension_numbers<[1], [0], [0], [1], [0, 0, 1, 1], [], []>} : vector<8x4xf32>, vector<4x256xf32>, vector<8x256xf32> -> vector<8x256xf32>
    %93 = arith.addf %87, %92 : vector<8x256xf32>
    %94 = vector.extract_strided_slice %68 {offsets = [0, 1, 1], sizes = [4, 16, 16], strides = [1, 1, 1]} : vector<4x18x18xf32> to vector<4x16x16xf32>
    %95 = vector.shape_cast %94 : vector<4x16x16xf32> to vector<4x256xf32>
    %c4_70 = arith.constant 4 : index
    %c0_71 = arith.constant 0 : index
    %c0_72 = arith.constant 0 : index
    %96 = vector.load %arg2[%c4_70, %c0_71, %c0_72] : memref<9x8x4xf32, #tpu.memory_space<vmem>>, vector<1x8x4xf32>
    %97 = vector.shape_cast %96 : vector<1x8x4xf32> to vector<8x4xf32>
    %cst_73 = arith.constant dense<0.000000e+00> : vector<8x256xf32>
    %98 = tpu.matmul %97, %95, %cst_73 {dimension_numbers = #tpu.dot_dimension_numbers<[1], [0], [0], [1], [0, 0, 1, 1], [], []>} : vector<8x4xf32>, vector<4x256xf32>, vector<8x256xf32> -> vector<8x256xf32>
    %99 = arith.addf %93, %98 : vector<8x256xf32>
    %100 = vector.extract_strided_slice %68 {offsets = [0, 1, 2], sizes = [4, 16, 16], strides = [1, 1, 1]} : vector<4x18x18xf32> to vector<4x16x16xf32>
    %101 = vector.shape_cast %100 : vector<4x16x16xf32> to vector<4x256xf32>
    %c5_74 = arith.constant 5 : index
    %c0_75 = arith.constant 0 : index
    %c0_76 = arith.constant 0 : index
    %102 = vector.load %arg2[%c5_74, %c0_75, %c0_76] : memref<9x8x4xf32, #tpu.memory_space<vmem>>, vector<1x8x4xf32>
    %103 = vector.shape_cast %102 : vector<1x8x4xf32> to vector<8x4xf32>
    %cst_77 = arith.constant dense<0.000000e+00> : vector<8x256xf32>
    %104 = tpu.matmul %103, %101, %cst_77 {dimension_numbers = #tpu.dot_dimension_numbers<[1], [0], [0], [1], [0, 0, 1, 1], [], []>} : vector<8x4xf32>, vector<4x256xf32>, vector<8x256xf32> -> vector<8x256xf32>
    %105 = arith.addf %99, %104 : vector<8x256xf32>
    %106 = vector.extract_strided_slice %68 {offsets = [0, 2, 0], sizes = [4, 16, 16], strides = [1, 1, 1]} : vector<4x18x18xf32> to vector<4x16x16xf32>
    %107 = vector.shape_cast %106 : vector<4x16x16xf32> to vector<4x256xf32>
    %c6_78 = arith.constant 6 : index
    %c0_79 = arith.constant 0 : index
    %c0_80 = arith.constant 0 : index
    %108 = vector.load %arg2[%c6_78, %c0_79, %c0_80] : memref<9x8x4xf32, #tpu.memory_space<vmem>>, vector<1x8x4xf32>
    %109 = vector.shape_cast %108 : vector<1x8x4xf32> to vector<8x4xf32>
    %cst_81 = arith.constant dense<0.000000e+00> : vector<8x256xf32>
    %110 = tpu.matmul %109, %107, %cst_81 {dimension_numbers = #tpu.dot_dimension_numbers<[1], [0], [0], [1], [0, 0, 1, 1], [], []>} : vector<8x4xf32>, vector<4x256xf32>, vector<8x256xf32> -> vector<8x256xf32>
    %111 = arith.addf %105, %110 : vector<8x256xf32>
    %112 = vector.extract_strided_slice %68 {offsets = [0, 2, 1], sizes = [4, 16, 16], strides = [1, 1, 1]} : vector<4x18x18xf32> to vector<4x16x16xf32>
    %113 = vector.shape_cast %112 : vector<4x16x16xf32> to vector<4x256xf32>
    %c7_82 = arith.constant 7 : index
    %c0_83 = arith.constant 0 : index
    %c0_84 = arith.constant 0 : index
    %114 = vector.load %arg2[%c7_82, %c0_83, %c0_84] : memref<9x8x4xf32, #tpu.memory_space<vmem>>, vector<1x8x4xf32>
    %115 = vector.shape_cast %114 : vector<1x8x4xf32> to vector<8x4xf32>
    %cst_85 = arith.constant dense<0.000000e+00> : vector<8x256xf32>
    %116 = tpu.matmul %115, %113, %cst_85 {dimension_numbers = #tpu.dot_dimension_numbers<[1], [0], [0], [1], [0, 0, 1, 1], [], []>} : vector<8x4xf32>, vector<4x256xf32>, vector<8x256xf32> -> vector<8x256xf32>
    %117 = arith.addf %111, %116 : vector<8x256xf32>
    %118 = vector.extract_strided_slice %68 {offsets = [0, 2, 2], sizes = [4, 16, 16], strides = [1, 1, 1]} : vector<4x18x18xf32> to vector<4x16x16xf32>
    %119 = vector.shape_cast %118 : vector<4x16x16xf32> to vector<4x256xf32>
    %c8_86 = arith.constant 8 : index
    %c0_87 = arith.constant 0 : index
    %c0_88 = arith.constant 0 : index
    %120 = vector.load %arg2[%c8_86, %c0_87, %c0_88] : memref<9x8x4xf32, #tpu.memory_space<vmem>>, vector<1x8x4xf32>
    %121 = vector.shape_cast %120 : vector<1x8x4xf32> to vector<8x4xf32>
    %cst_89 = arith.constant dense<0.000000e+00> : vector<8x256xf32>
    %122 = tpu.matmul %121, %119, %cst_89 {dimension_numbers = #tpu.dot_dimension_numbers<[1], [0], [0], [1], [0, 0, 1, 1], [], []>} : vector<8x4xf32>, vector<4x256xf32>, vector<8x256xf32> -> vector<8x256xf32>
    %123 = arith.addf %117, %122 : vector<8x256xf32>
    %124 = vector.broadcast %4 : vector<8x1xf32> to vector<8x256xf32>
    %125 = arith.addf %123, %124 : vector<8x256xf32>
    %c1_90 = arith.constant 1 : index
    %c0_91 = arith.constant 0 : index
    %c0_92 = arith.constant 0 : index
    %126 = vector.load %arg4[%c1_90, %c0_91, %c0_92] : memref<2x8x256xf32, #tpu.memory_space<vmem>>, vector<1x8x256xf32>
    %127 = vector.shape_cast %126 : vector<1x8x256xf32> to vector<8x256xf32>
    %128 = vector.shape_cast %125 : vector<8x256xf32> to vector<1x8x256xf32>
    tpu.vector_store %arg4[%c1_90, %c0_91, %c0_92], %128 {strides = array<i32>} : memref<2x8x256xf32, #tpu.memory_space<vmem>>, vector<1x8x256xf32>,
    return
  }
  func.func @transform_0(%arg0: i32) -> (i32, i32, i32, i32) {
    %c0_i32 = arith.constant 0 : i32
    %c0_i32_0 = arith.constant 0 : i32
    %c0_i32_1 = arith.constant 0 : i32
    %c0_i32_2 = arith.constant 0 : i32
    return %arg0, %c0_i32, %c0_i32_0, %c0_i32_1 : i32, i32, i32, i32
  }
  func.func @transform_1(%arg0: i32) -> (i32, i32, i32) {
    %c0_i32 = arith.constant 0 : i32
    %c0_i32_0 = arith.constant 0 : i32
    %c0_i32_1 = arith.constant 0 : i32
    %c0_i32_2 = arith.constant 0 : i32
    return %c0_i32, %c0_i32_0, %c0_i32_1 : i32, i32, i32
  }
  func.func @transform_2(%arg0: i32) -> (i32, i32) {
    %c0_i32 = arith.constant 0 : i32
    %c0_i32_0 = arith.constant 0 : i32
    %c0_i32_1 = arith.constant 0 : i32
    return %c0_i32, %c0_i32_0 : i32, i32
  }
  func.func @transform_3(%arg0: i32) -> (i32, i32, i32) {
    %c0_i32 = arith.constant 0 : i32
    %c0_i32_0 = arith.constant 0 : i32
    %c0_i32_1 = arith.constant 0 : i32
    return %arg0, %c0_i32, %c0_i32_0 : i32, i32, i32
  }
}

</mosaic_0001>

<llo_original>
// kernel: thermometric_module_forward.1
$region0: #{thermometric_module_forward.1}
  #allocation0 [shape = 'u32[]', space=smem, size = 0x4, offset = 0x4, fixed_abs, tag = 'smem constant byte address 0x4 - core index']
  #allocation1 [shape = 'u32[144,128]{1,0:T(1,128)}', space=vmem, size = 0x12000, scoped, tag = 'internal scratch']
  #allocation2 [shape = 'f32[2,4,18,18]{3,2,1,0:T(8,128)}', space=vmem, size = 0x18000, scoped, tag = 'scratch operand']
  %s0 = inlined_call_operand.vmem [shape: f32[2,4,16,16], index: 0, kind: input, shape index: {}]
  %s1 = inlined_call_operand.vmem [shape: f32[9,8,4], index: 1, kind: input, shape index: {}]
  %s2 = inlined_call_operand.vmem [shape: f32[8,1], index: 2, kind: input, shape index: {}]
  %s3 = inlined_call_operand.vmem [shape: f32[2,8,256], index: 3, kind: output, shape index: {}]
  %s4 = sld [smem:[#allocation0]]
  $region22: #{thermometric_module_forward.1} parent=0
    _
  %s6 = ssub.s32 1, %s4
  %s7 = scalar_select 0, %s6, %s4
  // Predicated region
  $region2: #{thermometric_module_forward.1} parent=0 // pred_check
    _
  $region3: #{thermometric_module_forward.1} parent=0 // pred_check_branch
    %9 = sbr.rel (0) target = $region5
  $region4: #{thermometric_module_forward.1} parent=0 // pred_region
    _
  $region5: #{thermometric_module_forward.1} parent=0 // pred_fallthru
    _
  // Predicated region
  $region6: #{thermometric_module_forward.1} parent=0 // pred_check
    _
  $region7: #{thermometric_module_forward.1} parent=0 // pred_check_branch
    %11 = sbr.rel (0) target = $region9
  $region8: #{thermometric_module_forward.1} parent=0 // pred_region
    _
  $region9: #{thermometric_module_forward.1} parent=0 // pred_fallthru
    _
  // Predicated region
  $region10: #{thermometric_module_forward.1} parent=0 // pred_check
    _
  $region11: #{thermometric_module_forward.1} parent=0 // pred_check_branch
    %13 = sbr.rel (0) target = $region13
  $region12: #{thermometric_module_forward.1} parent=0 // pred_region
    _
  $region13: #{thermometric_module_forward.1} parent=0 // pred_fallthru
    _
  %vm14 = vcmask 146432
  %15 = vst.msk [vmem:[#allocation2] sm:$0xff] %vm14, 0.0
  %16 = vst.msk [vmem:[#allocation2 + $0x8] sm:$0xff] %vm14, 0.0
  %vm17 = vcmask 140288
  %18 = vst.msk [vmem:[#allocation2 + $0x10] sm:$0x3] %vm17, 0.0
  %19 = vst.msk [vmem:[#allocation2 + $0x18] sm:$0xff] %vm14, 0.0
  %20 = vst.msk [vmem:[#allocation2 + $0x20] sm:$0xff] %vm14, 0.0
  %21 = vst.msk [vmem:[#allocation2 + $0x28] sm:$0x3] %vm17, 0.0
  %22 = vst.msk [vmem:[#allocation2 + $0x30] sm:$0xff] %vm14, 0.0
  %23 = vst.msk [vmem:[#allocation2 + $0x38] sm:$0xff] %vm14, 0.0
  %24 = vst.msk [vmem:[#allocation2 + $0x40] sm:$0x3] %vm17, 0.0
  %25 = vst.msk [vmem:[#allocation2 + $0x48] sm:$0xff] %vm14, 0.0
  %26 = vst.msk [vmem:[#allocation2 + $0x50] sm:$0xff] %vm14, 0.0
  %27 = vst.msk [vmem:[#allocation2 + $0x58] sm:$0x3] %vm17, 0.0
  %28 = vst.msk [vmem:[#allocation2 + $0x60] sm:$0xff] %vm14, 0.0
  %29 = vst.msk [vmem:[#allocation2 + $0x68] sm:$0xff] %vm14, 0.0
  %30 = vst.msk [vmem:[#allocation2 + $0x70] sm:$0x3] %vm17, 0.0
  %31 = vst.msk [vmem:[#allocation2 + $0x78] sm:$0xff] %vm14, 0.0
  %32 = vst.msk [vmem:[#allocation2 + $0x80] sm:$0xff] %vm14, 0.0
  %33 = vst.msk [vmem:[#allocation2 + $0x88] sm:$0x3] %vm17, 0.0
  %34 = vst.msk [vmem:[#allocation2 + $0x90] sm:$0xff] %vm14, 0.0
  %35 = vst.msk [vmem:[#allocation2 + $0x98] sm:$0xff] %vm14, 0.0
  %36 = vst.msk [vmem:[#allocation2 + $0xa0] sm:$0x3] %vm17, 0.0
  %37 = vst.msk [vmem:[#allocation2 + $0xa8] sm:$0xff] %vm14, 0.0
  %38 = vst.msk [vmem:[#allocation2 + $0xb0] sm:$0xff] %vm14, 0.0
  %39 = vst.msk [vmem:[#allocation2 + $0xb8] sm:$0x3] %vm17, 0.0
  %v40 = vld [vmem:[%s0] sm:$0xff]
  %v41 = vld [vmem:[%s0 + $0x8] sm:$0xff]
  %v42 = vld [vmem:[%s0 + $0x10] sm:$0xff]
  %v43 = vld [vmem:[%s0 + $0x18] sm:$0xff]
  %v44 = vld [vmem:[%s0 + $0x20] sm:$0xff]
  %v45 = vld [vmem:[%s0 + $0x28] sm:$0xff]
  %v46 = vld [vmem:[%s0 + $0x30] sm:$0xff]
  %v47 = vld [vmem:[%s0 + $0x38] sm:$0xff]
  %v48 = vld [vmem:[%s0 + $0x40] sm:$0xff]
  %v49 = vld [vmem:[%s0 + $0x48] sm:$0xff]
  %v50 = vld [vmem:[%s0 + $0x50] sm:$0xff]
  %v51 = vld [vmem:[%s0 + $0x58] sm:$0xff]
  %v52 = vld [vmem:[%s0 + $0x60] sm:$0xff]
  %v53 = vld [vmem:[%s0 + $0x68] sm:$0xff]
  %v54 = vld [vmem:[%s0 + $0x70] sm:$0xff]
  %v55 = vld [vmem:[%s0 + $0x78] sm:$0xff]
  %72 = vrot.lane.b32.xlu0 %v40, 1
  %v73 = vpop.permute.xlu0 %72
  %74 = vrot.lane.b32.xlu0 %v41, 1
  %v75 = vpop.permute.xlu0 %74
  %76 = vrot.lane.b32.xlu0 %v42, 1
  %v77 = vpop.permute.xlu0 %76
  %78 = vrot.lane.b32.xlu0 %v43, 1
  %v79 = vpop.permute.xlu0 %78
  %80 = vrot.lane.b32.xlu0 %v44, 1
  %v81 = vpop.permute.xlu0 %80
  %82 = vrot.lane.b32.xlu0 %v45, 1
  %v83 = vpop.permute.xlu0 %82
  %84 = vrot.lane.b32.xlu0 %v46, 1
  %v85 = vpop.permute.xlu0 %84
  %86 = vrot.lane.b32.xlu0 %v47, 1
  %v87 = vpop.permute.xlu0 %86
  %88 = vrot.lane.b32.xlu0 %v48, 1
  %v89 = vpop.permute.xlu0 %88
  %90 = vrot.lane.b32.xlu0 %v49, 1
  %v91 = vpop.permute.xlu0 %90
  %92 = vrot.lane.b32.xlu0 %v50, 1
  %v93 = vpop.permute.xlu0 %92
  %94 = vrot.lane.b32.xlu0 %v51, 1
  %v95 = vpop.permute.xlu0 %94
  %96 = vrot.lane.b32.xlu0 %v52, 1
  %v97 = vpop.permute.xlu0 %96
  %98 = vrot.lane.b32.xlu0 %v53, 1
  %v99 = vpop.permute.xlu0 %98
  %100 = vrot.lane.b32.xlu0 %v54, 1
  %v101 = vpop.permute.xlu0 %100
  %102 = vrot.lane.b32.xlu0 %v55, 1
  %v103 = vpop.permute.xlu0 %102
  %vm120 = vcmask 138248
  %121 = vst.msk [vmem:[#allocation2 + $0x1] sm:$0xff] %vm120, %v73
  %122 = vst.msk [vmem:[#allocation2 + $0x9] sm:$0xff] %vm120, %v75
  %123 = vst.msk [vmem:[#allocation2 + $0x19] sm:$0xff] %vm120, %v77
  %124 = vst.msk [vmem:[#allocation2 + $0x21] sm:$0xff] %vm120, %v79
  %125 = vst.msk [vmem:[#allocation2 + $0x31] sm:$0xff] %vm120, %v81
  %126 = vst.msk [vmem:[#allocation2 + $0x39] sm:$0xff] %vm120, %v83
  %127 = vst.msk [vmem:[#allocation2 + $0x49] sm:$0xff] %vm120, %v85
  %128 = vst.msk [vmem:[#allocation2 + $0x51] sm:$0xff] %vm120, %v87
  %129 = vst.msk [vmem:[#allocation2 + $0x61] sm:$0xff] %vm120, %v89
  %130 = vst.msk [vmem:[#allocation2 + $0x69] sm:$0xff] %vm120, %v91
  %131 = vst.msk [vmem:[#allocation2 + $0x79] sm:$0xff] %vm120, %v93
  %132 = vst.msk [vmem:[#allocation2 + $0x81] sm:$0xff] %vm120, %v95
  %133 = vst.msk [vmem:[#allocation2 + $0x91] sm:$0xff] %vm120, %v97
  %134 = vst.msk [vmem:[#allocation2 + $0x99] sm:$0xff] %vm120, %v99
  %135 = vst.msk [vmem:[#allocation2 + $0xa9] sm:$0xff] %vm120, %v101
  %136 = vst.msk [vmem:[#allocation2 + $0xb1] sm:$0xff] %vm120, %v103
  %v137 = vld [vmem:[%s2] sm:$0xff]
  %v138 = vld [vmem:[#allocation2] sm:$0xff]
  %v139 = vld [vmem:[#allocation2 + $0x8] sm:$0xff]
  %v140 = vld [vmem:[#allocation2 + $0x10] sm:$0x3]
  %v141 = vld [vmem:[#allocation2 + $0x18] sm:$0xff]
  %v142 = vld [vmem:[#allocation2 + $0x20] sm:$0xff]
  %v143 = vld [vmem:[#allocation2 + $0x28] sm:$0x3]
  %v144 = vld [vmem:[#allocation2 + $0x30] sm:$0xff]
  %v145 = vld [vmem:[#allocation2 + $0x38] sm:$0xff]
  %v146 = vld [vmem:[#allocation2 + $0x40] sm:$0x3]
  %v147 = vld [vmem:[#allocation2 + $0x48] sm:$0xff]
  %v148 = vld [vmem:[#allocation2 + $0x50] sm:$0xff]
  %v149 = vld [vmem:[#allocation2 + $0x58] sm:$0x3]
  %v150 = vcombine.low %v138, %v144
  %v151 = vcombine.high %v138, %v144
  %v153 = vunpack.c.l.s4 1983009808
  %v154 = vunpack.c.0.s8 %v153
  %v155 = vlaneseq
  %v156 = vshrl.u32 %v155, 7
  %v157 = vsub.s32 %v154, %v156
  %v158 = vrot.slane %v150, %v157
  %v160 = vunpack.c.l.s4 1983009808
  %v161 = vunpack.c.0.s8 %v160
  %v162 = vlaneseq
  %v163 = vshrl.u32 %v162, 7
  %v164 = vsub.s32 %v161, %v163
  %v165 = vrot.slane %v151, %v164
  %v166 = vcombine.low %v141, %v147
  %v167 = vcombine.high %v141, %v147
  %v169 = vunpack.c.l.s4 1983009808
  %v170 = vunpack.c.0.s8 %v169
  %v171 = vlaneseq
  %v172 = vshrl.u32 %v171, 7
  %v173 = vsub.s32 %v170, %v172
  %v174 = vrot.slane %v166, %v173
  %v176 = vunpack.c.l.s4 1983009808
  %v177 = vunpack.c.0.s8 %v176
  %v178 = vlaneseq
  %v179 = vshrl.u32 %v178, 7
  %v180 = vsub.s32 %v177, %v179
  %v181 = vrot.slane %v167, %v180
  %v182 = vcombine.low %v158, %v174
  %v183 = vcombine.high %v158, %v174
  %v185 = vunpack.c.l.s4 1934713408
  %v186 = vunpack.c.0.s8 %v185
  %v187 = vlaneseq
  %v188 = vshrl.u32 %v187, 7
  %v189 = vsub.s32 %v186, %v188
  %v190 = vrot.slane %v182, %v189
  %v192 = vunpack.c.l.s4 1934713408
  %v193 = vunpack.c.0.s8 %v192
  %v194 = vlaneseq
  %v195 = vshrl.u32 %v194, 7
  %v196 = vsub.s32 %v193, %v195
  %v197 = vrot.slane %v183, %v196
  %v198 = vcombine.low %v165, %v181
  %v199 = vcombine.high %v165, %v181
  %v201 = vunpack.c.l.s4 1934713408
  %v202 = vunpack.c.0.s8 %v201
  %v203 = vlaneseq
  %v204 = vshrl.u32 %v203, 7
  %v205 = vsub.s32 %v202, %v204
  %v206 = vrot.slane %v198, %v205
  %v208 = vunpack.c.l.s4 1934713408
  %v209 = vunpack.c.0.s8 %v208
  %v210 = vlaneseq
  %v211 = vshrl.u32 %v210, 7
  %v212 = vsub.s32 %v209, %v211
  %v213 = vrot.slane %v199, %v212
  %v214 = vcombine.high %v190, 0.0
  %v215 = vcombine.high %v197, 0.0
  %v216 = vcombine.high %v206, 0.0
  %v217 = vcombine.high %v213, 0.0
  %v218 = vcombine.low %v139, %v145
  %v219 = vcombine.high %v139, %v145
  %v221 = vunpack.c.l.s4 1983009808
  %v222 = vunpack.c.0.s8 %v221
  %v223 = vlaneseq
  %v224 = vshrl.u32 %v223, 7
  %v225 = vsub.s32 %v222, %v224
  %v226 = vrot.slane %v218, %v225
  %v228 = vunpack.c.l.s4 1983009808
  %v229 = vunpack.c.0.s8 %v228
  %v230 = vlaneseq
  %v231 = vshrl.u32 %v230, 7
  %v232 = vsub.s32 %v229, %v231
  %v233 = vrot.slane %v219, %v232
  %v234 = vcombine.low %v142, %v148
  %v235 = vcombine.high %v142, %v148
  %v237 = vunpack.c.l.s4 1983009808
  %v238 = vunpack.c.0.s8 %v237
  %v239 = vlaneseq
  %v240 = vshrl.u32 %v239, 7
  %v241 = vsub.s32 %v238, %v240
  %v242 = vrot.slane %v234, %v241
  %v244 = vunpack.c.l.s4 1983009808
  %v245 = vunpack.c.0.s8 %v244
  %v246 = vlaneseq
  %v247 = vshrl.u32 %v246, 7
  %v248 = vsub.s32 %v245, %v247
  %v249 = vrot.slane %v235, %v248
  %v250 = vcombine.low %v226, %v242
  %v251 = vcombine.high %v226, %v242
  %v253 = vunpack.c.l.s4 1934713408
  %v254 = vunpack.c.0.s8 %v253
  %v255 = vlaneseq
  %v256 = vshrl.u32 %v255, 7
  %v257 = vsub.s32 %v254, %v256
  %v258 = vrot.slane %v250, %v257
  %v260 = vunpack.c.l.s4 1934713408
  %v261 = vunpack.c.0.s8 %v260
  %v262 = vlaneseq
  %v263 = vshrl.u32 %v262, 7
  %v264 = vsub.s32 %v261, %v263
  %v265 = vrot.slane %v251, %v264
  %v266 = vcombine.low %v233, %v249
  %v267 = vcombine.high %v233, %v249
  %v269 = vunpack.c.l.s4 1934713408
  %v270 = vunpack.c.0.s8 %v269
  %v271 = vlaneseq
  %v272 = vshrl.u32 %v271, 7
  %v273 = vsub.s32 %v270, %v272
  %v274 = vrot.slane %v266, %v273
  %v276 = vunpack.c.l.s4 1934713408
  %v277 = vunpack.c.0.s8 %v276
  %v278 = vlaneseq
  %v279 = vshrl.u32 %v278, 7
  %v280 = vsub.s32 %v277, %v279
  %v281 = vrot.slane %v267, %v280
  %v282 = vcombine.high %v258, 0.0
  %v283 = vcombine.high %v265, 0.0
  %v284 = vcombine.high %v274, 0.0
  %v285 = vcombine.high %v281, 0.0
  %287 = vrot.lane.b32.xlu0 %v214, 16
  %v288 = vpop.permute.xlu0 %287
  %291 = vrot.lane.b32.xlu0 %v197, 32
  %v292 = vpop.permute.xlu0 %291
  %295 = vrot.lane.b32.xlu0 %v215, 48
  %v296 = vpop.permute.xlu0 %295
  %299 = vrot.lane.b32.xlu0 %v206, 64
  %v300 = vpop.permute.xlu0 %299
  %303 = vrot.lane.b32.xlu0 %v216, 80
  %v304 = vpop.permute.xlu0 %303
  %307 = vrot.lane.b32.xlu0 %v213, 96
  %v308 = vpop.permute.xlu0 %307
  %311 = vrot.lane.b32.xlu0 %v217, 112
  %v312 = vpop.permute.xlu0 %311
  %315 = vrot.lane.b32.xlu0 %v282, 16
  %v316 = vpop.permute.xlu0 %315
  %319 = vrot.lane.b32.xlu0 %v265, 32
  %v320 = vpop.permute.xlu0 %319
  %323 = vrot.lane.b32.xlu0 %v283, 48
  %v324 = vpop.permute.xlu0 %323
  %327 = vrot.lane.b32.xlu0 %v274, 64
  %v328 = vpop.permute.xlu0 %327
  %331 = vrot.lane.b32.xlu0 %v284, 80
  %v332 = vpop.permute.xlu0 %331
  %335 = vrot.lane.b32.xlu0 %v281, 96
  %v336 = vpop.permute.xlu0 %335
  %339 = vrot.lane.b32.xlu0 %v285, 112
  %v340 = vpop.permute.xlu0 %339
  %vm342 = vcmask 130048
  %v343 = vsel %vm342, %v190, %v288
  %vm344 = vcmask 261120
  %v345 = vsel %vm344, %v343, %v292
  %vm346 = vcmask 392192
  %v347 = vsel %vm346, %v345, %v296
  %vm348 = vcmask 523264
  %v349 = vsel %vm348, %v347, %v300
  %vm350 = vcmask 654336
  %v351 = vsel %vm350, %v349, %v304
  %vm352 = vcmask 785408
  %v353 = vsel %vm352, %v351, %v308
  %vm354 = vcmask 916480
  %v355 = vsel %vm354, %v353, %v312
  %v356 = vsel %vm342, %v258, %v316
  %v357 = vsel %vm344, %v356, %v320
  %v358 = vsel %vm346, %v357, %v324
  %v359 = vsel %vm348, %v358, %v328
  %v360 = vsel %vm350, %v359, %v332
  %v361 = vsel %vm352, %v360, %v336
  %v362 = vsel %vm354, %v361, %v340
  %v363 = vld [vmem:[%s1] sm:$0xff]
  %372 = vrot.lane.b32.xlu0 %v138, 127
  %v373 = vpop.permute.xlu0 %372
  %374 = vrot.lane.b32.xlu0 %v139, 127
  %v375 = vpop.permute.xlu0 %374
  %376 = vrot.lane.b32.xlu0 %v141, 127
  %v377 = vpop.permute.xlu0 %376
  %378 = vrot.lane.b32.xlu0 %v142, 127
  %v379 = vpop.permute.xlu0 %378
  %380 = vrot.lane.b32.xlu0 %v144, 127
  %v381 = vpop.permute.xlu0 %380
  %382 = vrot.lane.b32.xlu0 %v145, 127
  %v383 = vpop.permute.xlu0 %382
  %384 = vrot.lane.b32.xlu0 %v147, 127
  %v385 = vpop.permute.xlu0 %384
  %386 = vrot.lane.b32.xlu0 %v148, 127
  %v387 = vpop.permute.xlu0 %386
  %v396 = vcombine.low %v373, %v381
  %v397 = vcombine.high %v373, %v381
  %v399 = vunpack.c.l.s4 1983009808
  %v400 = vunpack.c.0.s8 %v399
  %v401 = vlaneseq
  %v402 = vshrl.u32 %v401, 7
  %v403 = vsub.s32 %v400, %v402
  %v404 = vrot.slane %v396, %v403
  %v406 = vunpack.c.l.s4 1983009808
  %v407 = vunpack.c.0.s8 %v406
  %v408 = vlaneseq
  %v409 = vshrl.u32 %v408, 7
  %v410 = vsub.s32 %v407, %v409
  %v411 = vrot.slane %v397, %v410
  %v412 = vcombine.low %v377, %v385
  %v413 = vcombine.high %v377, %v385
  %v415 = vunpack.c.l.s4 1983009808
  %v416 = vunpack.c.0.s8 %v415
  %v417 = vlaneseq
  %v418 = vshrl.u32 %v417, 7
  %v419 = vsub.s32 %v416, %v418
  %v420 = vrot.slane %v412, %v419
  %v422 = vunpack.c.l.s4 1983009808
  %v423 = vunpack.c.0.s8 %v422
  %v424 = vlaneseq
  %v425 = vshrl.u32 %v424, 7
  %v426 = vsub.s32 %v423, %v425
  %v427 = vrot.slane %v413, %v426
  %v428 = vcombine.low %v404, %v420
  %v429 = vcombine.high %v404, %v420
  %v431 = vunpack.c.l.s4 1934713408
  %v432 = vunpack.c.0.s8 %v431
  %v433 = vlaneseq
  %v434 = vshrl.u32 %v433, 7
  %v435 = vsub.s32 %v432, %v434
  %v436 = vrot.slane %v428, %v435
  %v438 = vunpack.c.l.s4 1934713408
  %v439 = vunpack.c.0.s8 %v438
  %v440 = vlaneseq
  %v441 = vshrl.u32 %v440, 7
  %v442 = vsub.s32 %v439, %v441
  %v443 = vrot.slane %v429, %v442
  %v444 = vcombine.low %v411, %v427
  %v445 = vcombine.high %v411, %v427
  %v447 = vunpack.c.l.s4 1934713408
  %v448 = vunpack.c.0.s8 %v447
  %v449 = vlaneseq
  %v450 = vshrl.u32 %v449, 7
  %v451 = vsub.s32 %v448, %v450
  %v452 = vrot.slane %v444, %v451
  %v454 = vunpack.c.l.s4 1934713408
  %v455 = vunpack.c.0.s8 %v454
  %v456 = vlaneseq
  %v457 = vshrl.u32 %v456, 7
  %v458 = vsub.s32 %v455, %v457
  %v459 = vrot.slane %v445, %v458
  %v460 = vcombine.high %v436, 0.0
  %v461 = vcombine.high %v443, 0.0
  %v462 = vcombine.high %v452, 0.0
  %v463 = vcombine.high %v459, 0.0
  %v464 = vcombine.low %v375, %v383
  %v465 = vcombine.high %v375, %v383
  %v467 = vunpack.c.l.s4 1983009808
  %v468 = vunpack.c.0.s8 %v467
  %v469 = vlaneseq
  %v470 = vshrl.u32 %v469, 7
  %v471 = vsub.s32 %v468, %v470
  %v472 = vrot.slane %v464, %v471
  %v474 = vunpack.c.l.s4 1983009808
  %v475 = vunpack.c.0.s8 %v474
  %v476 = vlaneseq
  %v477 = vshrl.u32 %v476, 7
  %v478 = vsub.s32 %v475, %v477
  %v479 = vrot.slane %v465, %v478
  %v480 = vcombine.low %v379, %v387
  %v481 = vcombine.high %v379, %v387
  %v483 = vunpack.c.l.s4 1983009808
  %v484 = vunpack.c.0.s8 %v483
  %v485 = vlaneseq
  %v486 = vshrl.u32 %v485, 7
  %v487 = vsub.s32 %v484, %v486
  %v488 = vrot.slane %v480, %v487
  %v490 = vunpack.c.l.s4 1983009808
  %v491 = vunpack.c.0.s8 %v490
  %v492 = vlaneseq
  %v493 = vshrl.u32 %v492, 7
  %v494 = vsub.s32 %v491, %v493
  %v495 = vrot.slane %v481, %v494
  %v496 = vcombine.low %v472, %v488
  %v497 = vcombine.high %v472, %v488
  %v499 = vunpack.c.l.s4 1934713408
  %v500 = vunpack.c.0.s8 %v499
  %v501 = vlaneseq
  %v502 = vshrl.u32 %v501, 7
  %v503 = vsub.s32 %v500, %v502
  %v504 = vrot.slane %v496, %v503
  %v506 = vunpack.c.l.s4 1934713408
  %v507 = vunpack.c.0.s8 %v506
  %v508 = vlaneseq
  %v509 = vshrl.u32 %v508, 7
  %v510 = vsub.s32 %v507, %v509
  %v511 = vrot.slane %v497, %v510
  %v512 = vcombine.low %v479, %v495
  %v513 = vcombine.high %v479, %v495
  %v515 = vunpack.c.l.s4 1934713408
  %v516 = vunpack.c.0.s8 %v515
  %v517 = vlaneseq
  %v518 = vshrl.u32 %v517, 7
  %v519 = vsub.s32 %v516, %v518
  %v520 = vrot.slane %v512, %v519
  %v522 = vunpack.c.l.s4 1934713408
  %v523 = vunpack.c.0.s8 %v522
  %v524 = vlaneseq
  %v525 = vshrl.u32 %v524, 7
  %v526 = vsub.s32 %v523, %v525
  %v527 = vrot.slane %v513, %v526
  %v528 = vcombine.high %v504, 0.0
  %v529 = vcombine.high %v511, 0.0
  %v530 = vcombine.high %v520, 0.0
  %v531 = vcombine.high %v527, 0.0
  %533 = vrot.lane.b32.xlu0 %v460, 16
  %v534 = vpop.permute.xlu0 %533
  %537 = vrot.lane.b32.xlu0 %v443, 32
  %v538 = vpop.permute.xlu0 %537
  %541 = vrot.lane.b32.xlu0 %v461, 48
  %v542 = vpop.permute.xlu0 %541
  %545 = vrot.lane.b32.xlu0 %v452, 64
  %v546 = vpop.permute.xlu0 %545
  %549 = vrot.lane.b32.xlu0 %v462, 80
  %v550 = vpop.permute.xlu0 %549
  %553 = vrot.lane.b32.xlu0 %v459, 96
  %v554 = vpop.permute.xlu0 %553
  %557 = vrot.lane.b32.xlu0 %v463, 112
  %v558 = vpop.permute.xlu0 %557
  %561 = vrot.lane.b32.xlu0 %v528, 16
  %v562 = vpop.permute.xlu0 %561
  %565 = vrot.lane.b32.xlu0 %v511, 32
  %v566 = vpop.permute.xlu0 %565
  %569 = vrot.lane.b32.xlu0 %v529, 48
  %v570 = vpop.permute.xlu0 %569
  %573 = vrot.lane.b32.xlu0 %v520, 64
  %v574 = vpop.permute.xlu0 %573
  %577 = vrot.lane.b32.xlu0 %v530, 80
  %v578 = vpop.permute.xlu0 %577
  %581 = vrot.lane.b32.xlu0 %v527, 96
  %v582 = vpop.permute.xlu0 %581
  %585 = vrot.lane.b32.xlu0 %v531, 112
  %v586 = vpop.permute.xlu0 %585
  %v588 = vsel %vm342, %v436, %v534
  %v589 = vsel %vm344, %v588, %v538
  %v590 = vsel %vm346, %v589, %v542
  %v591 = vsel %vm348, %v590, %v546
  %v592 = vsel %vm350, %v591, %v550
  %v593 = vsel %vm352, %v592, %v554
  %v594 = vsel %vm354, %v593, %v558
  %v595 = vsel %vm342, %v504, %v562
  %v596 = vsel %vm344, %v595, %v566
  %v597 = vsel %vm346, %v596, %v570
  %v598 = vsel %vm348, %v597, %v574
  %v599 = vsel %vm350, %v598, %v578
  %v600 = vsel %vm352, %v599, %v582
  %v601 = vsel %vm354, %v600, %v586
  %s602 = scalar_lea.vmem %s1, 8
  %v603 = vld [vmem:[%s602] sm:$0xff]
  %vm604 = vcmask 31744
  %v606 = vsel %vm604, %v603, 0
  %vm608 = vcmask 1043456
  %v610 = vsel %vm608, %v594, 0
  %v613 = vsel %vm608, %v601, 0
  %615 = vmatprep.subr.mxu0 %v613
  %616 = vmatpush1.msra.mxu0 %v610
  %617 = vmatprep.subr.mxu0 0.0
  %618 = vmatpush1.msra.mxu0 0.0
  %619 = vmatprep.subr.mxu0 0.0
  %620 = vmatpush1.msra.mxu0 0.0
  %621 = vmatprep.subr.mxu0 0.0
  %622 = vmatpush1.msra.mxu0 0.0
  %623 = vmatprep.subr.mxu0 0.0
  %624 = vmatpush1.msra.mxu0 0.0
  %625 = vmatprep.subr.mxu0 0.0
  %626 = vmatpush1.msra.mxu0 0.0
  %627 = vmatprep.subr.mxu0 0.0
  %628 = vmatpush1.msra.mxu0 0.0
  %629 = vmatprep.subr.mxu0 0.0
  %630 = vmatpush1.msra.mxu0 0.0
  %631 = vmatprep.subr.mxu0 0.0
  %632 = vmatpush1.msra.mxu0 0.0
  %633 = vmatprep.subr.mxu0 0.0
  %634 = vmatpush1.msra.mxu0 0.0
  %635 = vmatprep.subr.mxu0 0.0
  %636 = vmatpush1.msra.mxu0 0.0
  %637 = vmatprep.subr.mxu0 0.0
  %638 = vmatpush1.msra.mxu0 0.0
  %639 = vmatprep.subr.mxu0 0.0
  %640 = vmatpush1.msra.mxu0 0.0
  %641 = vmatprep.subr.mxu0 0.0
  %642 = vmatpush1.msra.mxu0 0.0
  %643 = vmatprep.subr.mxu0 0.0
  %644 = vmatpush1.msra.mxu0 0.0
  %645 = vmatprep.subr.mxu0 0.0
  %646 = vmatpush1.msra.mxu0 0.0
  %647 = vmatprep.subr.mxu0 0.0
  %648 = vmatpush1.msra.mxu0 0.0
  %649 = vmatprep.subr.mxu0 0.0
  %650 = vmatpush1.msra.mxu0 0.0
  %651 = vmatprep.subr.mxu0 0.0
  %652 = vmatpush1.msra.mxu0 0.0
  %653 = vmatprep.subr.mxu0 0.0
  %654 = vmatpush1.msra.mxu0 0.0
  %655 = vmatprep.subr.mxu0 0.0
  %656 = vmatpush1.msra.mxu0 0.0
  %657 = vmatprep.subr.mxu0 0.0
  %658 = vmatpush1.msra.mxu0 0.0
  %659 = vmatprep.subr.mxu0 0.0
  %660 = vmatpush1.msra.mxu0 0.0
  %661 = vmatprep.subr.mxu0 0.0
  %662 = vmatpush1.msra.mxu0 0.0
  %663 = vmatprep.subr.mxu0 0.0
  %664 = vmatpush1.msra.mxu0 0.0
  %665 = vmatprep.subr.mxu0 0.0
  %666 = vmatpush1.msra.mxu0 0.0
  %667 = vmatprep.subr.mxu0 0.0
  %668 = vmatpush1.msra.mxu0 0.0
  %669 = vmatprep.subr.mxu0 0.0
  %670 = vmatpush1.msra.mxu0 0.0
  %671 = vmatprep.subr.mxu0 0.0
  %672 = vmatpush1.msra.mxu0 0.0
  %673 = vmatprep.subr.mxu0 0.0
  %674 = vmatpush1.msra.mxu0 0.0
  %675 = vmatprep.subr.mxu0 0.0
  %676 = vmatpush1.msra.mxu0 0.0
  %677 = vmatprep.subr.mxu0 0.0
  %678 = vmatpush1.msra.mxu0 0.0
  %679 = vmatprep.mubr.f32.mxu0 0.0
  %680 = vmatmul.mubr.f32.gmra.mrb[0].mxu0 %v606
  %v681 = vpop.f32.mrb[0].mxu0
  %v682 = vadd.f32 0.0, %v681
  %v683 = vpop.f32.mrb[0].mxu0
  %v684 = vadd.f32 0.0, %v683
  %685 = vdwg.mxu0
  %v687 = vsel %vm604, %v363, 0
  %v690 = vsel %vm608, %v355, 0
  %v693 = vsel %vm608, %v362, 0
  %695 = vmatprep.subr.mxu0 %v693
  %696 = vmatpush1.msra.mxu0 %v690
  %697 = vmatprep.subr.mxu0 0.0
  %698 = vmatpush1.msra.mxu0 0.0
  %699 = vmatprep.subr.mxu0 0.0
  %700 = vmatpush1.msra.mxu0 0.0
  %701 = vmatprep.subr.mxu0 0.0
  %702 = vmatpush1.msra.mxu0 0.0
  %703 = vmatprep.subr.mxu0 0.0
  %704 = vmatpush1.msra.mxu0 0.0
  %705 = vmatprep.subr.mxu0 0.0
  %706 = vmatpush1.msra.mxu0 0.0
  %707 = vmatprep.subr.mxu0 0.0
  %708 = vmatpush1.msra.mxu0 0.0
  %709 = vmatprep.subr.mxu0 0.0
  %710 = vmatpush1.msra.mxu0 0.0
  %711 = vmatprep.subr.mxu0 0.0
  %712 = vmatpush1.msra.mxu0 0.0
  %713 = vmatprep.subr.mxu0 0.0
  %714 = vmatpush1.msra.mxu0 0.0
  %715 = vmatprep.subr.mxu0 0.0
  %716 = vmatpush1.msra.mxu0 0.0
  %717 = vmatprep.subr.mxu0 0.0
  %718 = vmatpush1.msra.mxu0 0.0
  %719 = vmatprep.subr.mxu0 0.0
  %720 = vmatpush1.msra.mxu0 0.0
  %721 = vmatprep.subr.mxu0 0.0
  %722 = vmatpush1.msra.mxu0 0.0
  %723 = vmatprep.subr.mxu0 0.0
  %724 = vmatpush1.msra.mxu0 0.0
  %725 = vmatprep.subr.mxu0 0.0
  %726 = vmatpush1.msra.mxu0 0.0
  %727 = vmatprep.subr.mxu0 0.0
  %728 = vmatpush1.msra.mxu0 0.0
  %729 = vmatprep.subr.mxu0 0.0
  %730 = vmatpush1.msra.mxu0 0.0
  %731 = vmatprep.subr.mxu0 0.0
  %732 = vmatpush1.msra.mxu0 0.0
  %733 = vmatprep.subr.mxu0 0.0
  %734 = vmatpush1.msra.mxu0 0.0
  %735 = vmatprep.subr.mxu0 0.0
  %736 = vmatpush1.msra.mxu0 0.0
  %737 = vmatprep.subr.mxu0 0.0
  %738 = vmatpush1.msra.mxu0 0.0
  %739 = vmatprep.subr.mxu0 0.0
  %740 = vmatpush1.msra.mxu0 0.0
  %741 = vmatprep.subr.mxu0 0.0
  %742 = vmatpush1.msra.mxu0 0.0
  %743 = vmatprep.subr.mxu0 0.0
  %744 = vmatpush1.msra.mxu0 0.0
  %745 = vmatprep.subr.mxu0 0.0
  %746 = vmatpush1.msra.mxu0 0.0
  %747 = vmatprep.subr.mxu0 0.0
  %748 = vmatpush1.msra.mxu0 0.0
  %749 = vmatprep.subr.mxu0 0.0
  %750 = vmatpush1.msra.mxu0 0.0
  %751 = vmatprep.subr.mxu0 0.0
  %752 = vmatpush1.msra.mxu0 0.0
  %753 = vmatprep.subr.mxu0 0.0
  %754 = vmatpush1.msra.mxu0 0.0
  %755 = vmatprep.subr.mxu0 0.0
  %756 = vmatpush1.msra.mxu0 0.0
  %757 = vmatprep.subr.mxu0 0.0
  %758 = vmatpush1.msra.mxu0 0.0
  %759 = vmatprep.mubr.f32.mxu0 0.0
  %760 = vmatmul.mubr.f32.gmra.mrb[0].mxu0 %v687
  %v761 = vpop.f32.mrb[0].mxu0
  %v762 = vadd.f32 %v682, %v761
  %v763 = vpop.f32.mrb[0].mxu0
  %v764 = vadd.f32 %v684, %v763
  %765 = vdwg.mxu0
  %766 = vrot.lane.b32.xlu0 %v138, 126
  %v767 = vpop.permute.xlu0 %766
  %768 = vrot.lane.b32.xlu0 %v139, 126
  %v769 = vpop.permute.xlu0 %768
  %770 = vrot.lane.b32.xlu0 %v141, 126
  %v771 = vpop.permute.xlu0 %770
  %772 = vrot.lane.b32.xlu0 %v142, 126
  %v773 = vpop.permute.xlu0 %772
  %774 = vrot.lane.b32.xlu0 %v144, 126
  %v775 = vpop.permute.xlu0 %774
  %776 = vrot.lane.b32.xlu0 %v145, 126
  %v777 = vpop.permute.xlu0 %776
  %778 = vrot.lane.b32.xlu0 %v147, 126
  %v779 = vpop.permute.xlu0 %778
  %780 = vrot.lane.b32.xlu0 %v148, 126
  %v781 = vpop.permute.xlu0 %780
  %v790 = vcombine.low %v767, %v775
  %v791 = vcombine.high %v767, %v775
  %v793 = vunpack.c.l.s4 1983009808
  %v794 = vunpack.c.0.s8 %v793
  %v795 = vlaneseq
  %v796 = vshrl.u32 %v795, 7
  %v797 = vsub.s32 %v794, %v796
  %v798 = vrot.slane %v790, %v797
  %v800 = vunpack.c.l.s4 1983009808
  %v801 = vunpack.c.0.s8 %v800
  %v802 = vlaneseq
  %v803 = vshrl.u32 %v802, 7
  %v804 = vsub.s32 %v801, %v803
  %v805 = vrot.slane %v791, %v804
  %v806 = vcombine.low %v771, %v779
  %v807 = vcombine.high %v771, %v779
  %v809 = vunpack.c.l.s4 1983009808
  %v810 = vunpack.c.0.s8 %v809
  %v811 = vlaneseq
  %v812 = vshrl.u32 %v811, 7
  %v813 = vsub.s32 %v810, %v812
  %v814 = vrot.slane %v806, %v813
  %v816 = vunpack.c.l.s4 1983009808
  %v817 = vunpack.c.0.s8 %v816
  %v818 = vlaneseq
  %v819 = vshrl.u32 %v818, 7
  %v820 = vsub.s32 %v817, %v819
  %v821 = vrot.slane %v807, %v820
  %v822 = vcombine.low %v798, %v814
  %v823 = vcombine.high %v798, %v814
  %v825 = vunpack.c.l.s4 1934713408
  %v826 = vunpack.c.0.s8 %v825
  %v827 = vlaneseq
  %v828 = vshrl.u32 %v827, 7
  %v829 = vsub.s32 %v826, %v828
  %v830 = vrot.slane %v822, %v829
  %v832 = vunpack.c.l.s4 1934713408
  %v833 = vunpack.c.0.s8 %v832
  %v834 = vlaneseq
  %v835 = vshrl.u32 %v834, 7
  %v836 = vsub.s32 %v833, %v835
  %v837 = vrot.slane %v823, %v836
  %v838 = vcombine.low %v805, %v821
  %v839 = vcombine.high %v805, %v821
  %v841 = vunpack.c.l.s4 1934713408
  %v842 = vunpack.c.0.s8 %v841
  %v843 = vlaneseq
  %v844 = vshrl.u32 %v843, 7
  %v845 = vsub.s32 %v842, %v844
  %v846 = vrot.slane %v838, %v845
  %v848 = vunpack.c.l.s4 1934713408
  %v849 = vunpack.c.0.s8 %v848
  %v850 = vlaneseq
  %v851 = vshrl.u32 %v850, 7
  %v852 = vsub.s32 %v849, %v851
  %v853 = vrot.slane %v839, %v852
  %v854 = vcombine.high %v830, 0.0
  %v855 = vcombine.high %v837, 0.0
  %v856 = vcombine.high %v846, 0.0
  %v857 = vcombine.high %v853, 0.0
  %v858 = vcombine.low %v769, %v777
  %v859 = vcombine.high %v769, %v777
  %v861 = vunpack.c.l.s4 1983009808
  %v862 = vunpack.c.0.s8 %v861
  %v863 = vlaneseq
  %v864 = vshrl.u32 %v863, 7
  %v865 = vsub.s32 %v862, %v864
  %v866 = vrot.slane %v858, %v865
  %v868 = vunpack.c.l.s4 1983009808
  %v869 = vunpack.c.0.s8 %v868
  %v870 = vlaneseq
  %v871 = vshrl.u32 %v870, 7
  %v872 = vsub.s32 %v869, %v871
  %v873 = vrot.slane %v859, %v872
  %v874 = vcombine.low %v773, %v781
  %v875 = vcombine.high %v773, %v781
  %v877 = vunpack.c.l.s4 1983009808
  %v878 = vunpack.c.0.s8 %v877
  %v879 = vlaneseq
  %v880 = vshrl.u32 %v879, 7
  %v881 = vsub.s32 %v878, %v880
  %v882 = vrot.slane %v874, %v881
  %v884 = vunpack.c.l.s4 1983009808
  %v885 = vunpack.c.0.s8 %v884
  %v886 = vlaneseq
  %v887 = vshrl.u32 %v886, 7
  %v888 = vsub.s32 %v885, %v887
  %v889 = vrot.slane %v875, %v888
  %v890 = vcombine.low %v866, %v882
  %v891 = vcombine.high %v866, %v882
  %v893 = vunpack.c.l.s4 1934713408
  %v894 = vunpack.c.0.s8 %v893
  %v895 = vlaneseq
  %v896 = vshrl.u32 %v895, 7
  %v897 = vsub.s32 %v894, %v896
  %v898 = vrot.slane %v890, %v897
  %v900 = vunpack.c.l.s4 1934713408
  %v901 = vunpack.c.0.s8 %v900
  %v902 = vlaneseq
  %v903 = vshrl.u32 %v902, 7
  %v904 = vsub.s32 %v901, %v903
  %v905 = vrot.slane %v891, %v904
  %v906 = vcombine.low %v873, %v889
  %v907 = vcombine.high %v873, %v889
  %v909 = vunpack.c.l.s4 1934713408
  %v910 = vunpack.c.0.s8 %v909
  %v911 = vlaneseq
  %v912 = vshrl.u32 %v911, 7
  %v913 = vsub.s32 %v910, %v912
  %v914 = vrot.slane %v906, %v913
  %v916 = vunpack.c.l.s4 1934713408
  %v917 = vunpack.c.0.s8 %v916
  %v918 = vlaneseq
  %v919 = vshrl.u32 %v918, 7
  %v920 = vsub.s32 %v917, %v919
  %v921 = vrot.slane %v907, %v920
  %v922 = vcombine.high %v898, 0.0
  %v923 = vcombine.high %v905, 0.0
  %v924 = vcombine.high %v914, 0.0
  %v925 = vcombine.high %v921, 0.0
  %927 = vrot.lane.b32.xlu0 %v854, 16
  %v928 = vpop.permute.xlu0 %927
  %931 = vrot.lane.b32.xlu0 %v837, 32
  %v932 = vpop.permute.xlu0 %931
  %935 = vrot.lane.b32.xlu0 %v855, 48
  %v936 = vpop.permute.xlu0 %935
  %939 = vrot.lane.b32.xlu0 %v846, 64
  %v940 = vpop.permute.xlu0 %939
  %943 = vrot.lane.b32.xlu0 %v856, 80
  %v944 = vpop.permute.xlu0 %943
  %947 = vrot.lane.b32.xlu0 %v853, 96
  %v948 = vpop.permute.xlu0 %947
  %951 = vrot.lane.b32.xlu0 %v857, 112
  %v952 = vpop.permute.xlu0 %951
  %955 = vrot.lane.b32.xlu0 %v922, 16
  %v956 = vpop.permute.xlu0 %955
  %959 = vrot.lane.b32.xlu0 %v905, 32
  %v960 = vpop.permute.xlu0 %959
  %963 = vrot.lane.b32.xlu0 %v923, 48
  %v964 = vpop.permute.xlu0 %963
  %967 = vrot.lane.b32.xlu0 %v914, 64
  %v968 = vpop.permute.xlu0 %967
  %971 = vrot.lane.b32.xlu0 %v924, 80
  %v972 = vpop.permute.xlu0 %971
  %975 = vrot.lane.b32.xlu0 %v921, 96
  %v976 = vpop.permute.xlu0 %975
  %979 = vrot.lane.b32.xlu0 %v925, 112
  %v980 = vpop.permute.xlu0 %979
  %v982 = vsel %vm342, %v830, %v928
  %v983 = vsel %vm344, %v982, %v932
  %v984 = vsel %vm346, %v983, %v936
  %v985 = vsel %vm348, %v984, %v940
  %v986 = vsel %vm350, %v985, %v944
  %v987 = vsel %vm352, %v986, %v948
  %v988 = vsel %vm354, %v987, %v952
  %v989 = vsel %vm342, %v898, %v956
  %v990 = vsel %vm344, %v989, %v960
  %v991 = vsel %vm346, %v990, %v964
  %v992 = vsel %vm348, %v991, %v968
  %v993 = vsel %vm350, %v992, %v972
  %v994 = vsel %vm352, %v993, %v976
  %v995 = vsel %vm354, %v994, %v980
  %s996 = scalar_lea.vmem %s1, 16
  %v997 = vld [vmem:[%s996] sm:$0xff]
  %v999 = vsel %vm604, %v997, 0
  %v1002 = vsel %vm608, %v988, 0
  %v1005 = vsel %vm608, %v995, 0
  %1007 = vmatprep.subr.mxu0 %v1005
  %1008 = vmatpush1.msra.mxu0 %v1002
  %1009 = vmatprep.subr.mxu0 0.0
  %1010 = vmatpush1.msra.mxu0 0.0
  %1011 = vmatprep.subr.mxu0 0.0
  %1012 = vmatpush1.msra.mxu0 0.0
  %1013 = vmatprep.subr.mxu0 0.0
  %1014 = vmatpush1.msra.mxu0 0.0
  %1015 = vmatprep.subr.mxu0 0.0
  %1016 = vmatpush1.msra.mxu0 0.0
  %1017 = vmatprep.subr.mxu0 0.0
  %1018 = vmatpush1.msra.mxu0 0.0
  %1019 = vmatprep.subr.mxu0 0.0
  %1020 = vmatpush1.msra.mxu0 0.0
  %1021 = vmatprep.subr.mxu0 0.0
  %1022 = vmatpush1.msra.mxu0 0.0
  %1023 = vmatprep.subr.mxu0 0.0
  %1024 = vmatpush1.msra.mxu0 0.0
  %1025 = vmatprep.subr.mxu0 0.0
  %1026 = vmatpush1.msra.mxu0 0.0
  %1027 = vmatprep.subr.mxu0 0.0
  %1028 = vmatpush1.msra.mxu0 0.0
  %1029 = vmatprep.subr.mxu0 0.0
  %1030 = vmatpush1.msra.mxu0 0.0
  %1031 = vmatprep.subr.mxu0 0.0
  %1032 = vmatpush1.msra.mxu0 0.0
  %1033 = vmatprep.subr.mxu0 0.0
  %1034 = vmatpush1.msra.mxu0 0.0
  %1035 = vmatprep.subr.mxu0 0.0
  %1036 = vmatpush1.msra.mxu0 0.0
  %1037 = vmatprep.subr.mxu0 0.0
  %1038 = vmatpush1.msra.mxu0 0.0
  %1039 = vmatprep.subr.mxu0 0.0
  %1040 = vmatpush1.msra.mxu0 0.0
  %1041 = vmatprep.subr.mxu0 0.0
  %1042 = vmatpush1.msra.mxu0 0.0
  %1043 = vmatprep.subr.mxu0 0.0
  %1044 = vmatpush1.msra.mxu0 0.0
  %1045 = vmatprep.subr.mxu0 0.0
  %1046 = vmatpush1.msra.mxu0 0.0
  %1047 = vmatprep.subr.mxu0 0.0
  %1048 = vmatpush1.msra.mxu0 0.0
  %1049 = vmatprep.subr.mxu0 0.0
  %1050 = vmatpush1.msra.mxu0 0.0
  %1051 = vmatprep.subr.mxu0 0.0
  %1052 = vmatpush1.msra.mxu0 0.0
  %1053 = vmatprep.subr.mxu0 0.0
  %1054 = vmatpush1.msra.mxu0 0.0
  %1055 = vmatprep.subr.mxu0 0.0
  %1056 = vmatpush1.msra.mxu0 0.0
  %1057 = vmatprep.subr.mxu0 0.0
  %1058 = vmatpush1.msra.mxu0 0.0
  %1059 = vmatprep.subr.mxu0 0.0
  %1060 = vmatpush1.msra.mxu0 0.0
  %1061 = vmatprep.subr.mxu0 0.0
  %1062 = vmatpush1.msra.mxu0 0.0
  %1063 = vmatprep.subr.mxu0 0.0
  %1064 = vmatpush1.msra.mxu0 0.0
  %1065 = vmatprep.subr.mxu0 0.0
  %1066 = vmatpush1.msra.mxu0 0.0
  %1067 = vmatprep.subr.mxu0 0.0
  %1068 = vmatpush1.msra.mxu0 0.0
  %1069 = vmatprep.subr.mxu0 0.0
  %1070 = vmatpush1.msra.mxu0 0.0
  %1071 = vmatprep.mubr.f32.mxu0 0.0
  %1072 = vmatmul.mubr.f32.gmra.mrb[0].mxu0 %v999
  %v1073 = vpop.f32.mrb[0].mxu0
  %v1074 = vadd.f32 0.0, %v1073
  %v1075 = vpop.f32.mrb[0].mxu0
  %v1076 = vadd.f32 0.0, %v1075
  %1077 = vdwg.mxu0
  %v1078 = vadd.f32 %v762, %v1074
  %v1079 = vadd.f32 %v764, %v1076
  %vm1084 = vcmask 1046528
  %v1085 = vrot.slane %v138, 1
  %v1086 = vrot.slane %v139, 1
  %v1087 = vsel %vm1084, %v1085, %v1086
  %v1088 = vrot.slane %v140, 1
  %v1089 = vsel %vm1084, %v1086, %v1088
  %v1090 = vrot.slane %v141, 1
  %v1091 = vrot.slane %v142, 1
  %v1092 = vsel %vm1084, %v1090, %v1091
  %v1093 = vrot.slane %v143, 1
  %v1094 = vsel %vm1084, %v1091, %v1093
  %v1095 = vrot.slane %v144, 1
  %v1096 = vrot.slane %v145, 1
  %v1097 = vsel %vm1084, %v1095, %v1096
  %v1098 = vrot.slane %v146, 1
  %v1099 = vsel %vm1084, %v1096, %v1098
  %v1100 = vrot.slane %v147, 1
  %v1101 = vrot.slane %v148, 1
  %v1102 = vsel %vm1084, %v1100, %v1101
  %v1103 = vrot.slane %v149, 1
  %v1104 = vsel %vm1084, %v1101, %v1103
  %v1113 = vcombine.low %v1087, %v1097
  %v1114 = vcombine.high %v1087, %v1097
  %v1116 = vunpack.c.l.s4 1983009808
  %v1117 = vunpack.c.0.s8 %v1116
  %v1118 = vlaneseq
  %v1119 = vshrl.u32 %v1118, 7
  %v1120 = vsub.s32 %v1117, %v1119
  %v1121 = vrot.slane %v1113, %v1120
  %v1123 = vunpack.c.l.s4 1983009808
  %v1124 = vunpack.c.0.s8 %v1123
  %v1125 = vlaneseq
  %v1126 = vshrl.u32 %v1125, 7
  %v1127 = vsub.s32 %v1124, %v1126
  %v1128 = vrot.slane %v1114, %v1127
  %v1129 = vcombine.low %v1092, %v1102
  %v1130 = vcombine.high %v1092, %v1102
  %v1132 = vunpack.c.l.s4 1983009808
  %v1133 = vunpack.c.0.s8 %v1132
  %v1134 = vlaneseq
  %v1135 = vshrl.u32 %v1134, 7
  %v1136 = vsub.s32 %v1133, %v1135
  %v1137 = vrot.slane %v1129, %v1136
  %v1139 = vunpack.c.l.s4 1983009808
  %v1140 = vunpack.c.0.s8 %v1139
  %v1141 = vlaneseq
  %v1142 = vshrl.u32 %v1141, 7
  %v1143 = vsub.s32 %v1140, %v1142
  %v1144 = vrot.slane %v1130, %v1143
  %v1145 = vcombine.low %v1121, %v1137
  %v1146 = vcombine.high %v1121, %v1137
  %v1148 = vunpack.c.l.s4 1934713408
  %v1149 = vunpack.c.0.s8 %v1148
  %v1150 = vlaneseq
  %v1151 = vshrl.u32 %v1150, 7
  %v1152 = vsub.s32 %v1149, %v1151
  %v1153 = vrot.slane %v1145, %v1152
  %v1155 = vunpack.c.l.s4 1934713408
  %v1156 = vunpack.c.0.s8 %v1155
  %v1157 = vlaneseq
  %v1158 = vshrl.u32 %v1157, 7
  %v1159 = vsub.s32 %v1156, %v1158
  %v1160 = vrot.slane %v1146, %v1159
  %v1161 = vcombine.low %v1128, %v1144
  %v1162 = vcombine.high %v1128, %v1144
  %v1164 = vunpack.c.l.s4 1934713408
  %v1165 = vunpack.c.0.s8 %v1164
  %v1166 = vlaneseq
  %v1167 = vshrl.u32 %v1166, 7
  %v1168 = vsub.s32 %v1165, %v1167
  %v1169 = vrot.slane %v1161, %v1168
  %v1171 = vunpack.c.l.s4 1934713408
  %v1172 = vunpack.c.0.s8 %v1171
  %v1173 = vlaneseq
  %v1174 = vshrl.u32 %v1173, 7
  %v1175 = vsub.s32 %v1172, %v1174
  %v1176 = vrot.slane %v1162, %v1175
  %v1177 = vcombine.high %v1153, 0.0
  %v1178 = vcombine.high %v1160, 0.0
  %v1179 = vcombine.high %v1169, 0.0
  %v1180 = vcombine.high %v1176, 0.0
  %v1181 = vcombine.low %v1089, %v1099
  %v1182 = vcombine.high %v1089, %v1099
  %v1184 = vunpack.c.l.s4 1983009808
  %v1185 = vunpack.c.0.s8 %v1184
  %v1186 = vlaneseq
  %v1187 = vshrl.u32 %v1186, 7
  %v1188 = vsub.s32 %v1185, %v1187
  %v1189 = vrot.slane %v1181, %v1188
  %v1191 = vunpack.c.l.s4 1983009808
  %v1192 = vunpack.c.0.s8 %v1191
  %v1193 = vlaneseq
  %v1194 = vshrl.u32 %v1193, 7
  %v1195 = vsub.s32 %v1192, %v1194
  %v1196 = vrot.slane %v1182, %v1195
  %v1197 = vcombine.low %v1094, %v1104
  %v1198 = vcombine.high %v1094, %v1104
  %v1200 = vunpack.c.l.s4 1983009808
  %v1201 = vunpack.c.0.s8 %v1200
  %v1202 = vlaneseq
  %v1203 = vshrl.u32 %v1202, 7
  %v1204 = vsub.s32 %v1201, %v1203
  %v1205 = vrot.slane %v1197, %v1204
  %v1207 = vunpack.c.l.s4 1983009808
  %v1208 = vunpack.c.0.s8 %v1207
  %v1209 = vlaneseq
  %v1210 = vshrl.u32 %v1209, 7
  %v1211 = vsub.s32 %v1208, %v1210
  %v1212 = vrot.slane %v1198, %v1211
  %v1213 = vcombine.low %v1189, %v1205
  %v1214 = vcombine.high %v1189, %v1205
  %v1216 = vunpack.c.l.s4 1934713408
  %v1217 = vunpack.c.0.s8 %v1216
  %v1218 = vlaneseq
  %v1219 = vshrl.u32 %v1218, 7
  %v1220 = vsub.s32 %v1217, %v1219
  %v1221 = vrot.slane %v1213, %v1220
  %v1223 = vunpack.c.l.s4 1934713408
  %v1224 = vunpack.c.0.s8 %v1223
  %v1225 = vlaneseq
  %v1226 = vshrl.u32 %v1225, 7
  %v1227 = vsub.s32 %v1224, %v1226
  %v1228 = vrot.slane %v1214, %v1227
  %v1229 = vcombine.low %v1196, %v1212
  %v1230 = vcombine.high %v1196, %v1212
  %v1232 = vunpack.c.l.s4 1934713408
  %v1233 = vunpack.c.0.s8 %v1232
  %v1234 = vlaneseq
  %v1235 = vshrl.u32 %v1234, 7
  %v1236 = vsub.s32 %v1233, %v1235
  %v1237 = vrot.slane %v1229, %v1236
  %v1239 = vunpack.c.l.s4 1934713408
  %v1240 = vunpack.c.0.s8 %v1239
  %v1241 = vlaneseq
  %v1242 = vshrl.u32 %v1241, 7
  %v1243 = vsub.s32 %v1240, %v1242
  %v1244 = vrot.slane %v1230, %v1243
  %v1245 = vcombine.high %v1221, 0.0
  %v1246 = vcombine.high %v1228, 0.0
  %v1247 = vcombine.high %v1237, 0.0
  %v1248 = vcombine.high %v1244, 0.0
  %1250 = vrot.lane.b32.xlu0 %v1177, 16
  %v1251 = vpop.permute.xlu0 %1250
  %1254 = vrot.lane.b32.xlu0 %v1160, 32
  %v1255 = vpop.permute.xlu0 %1254
  %1258 = vrot.lane.b32.xlu0 %v1178, 48
  %v1259 = vpop.permute.xlu0 %1258
  %1262 = vrot.lane.b32.xlu0 %v1169, 64
  %v1263 = vpop.permute.xlu0 %1262
  %1266 = vrot.lane.b32.xlu0 %v1179, 80
  %v1267 = vpop.permute.xlu0 %1266
  %1270 = vrot.lane.b32.xlu0 %v1176, 96
  %v1271 = vpop.permute.xlu0 %1270
  %1274 = vrot.lane.b32.xlu0 %v1180, 112
  %v1275 = vpop.permute.xlu0 %1274
  %1278 = vrot.lane.b32.xlu0 %v1245, 16
  %v1279 = vpop.permute.xlu0 %1278
  %1282 = vrot.lane.b32.xlu0 %v1228, 32
  %v1283 = vpop.permute.xlu0 %1282
  %1286 = vrot.lane.b32.xlu0 %v1246, 48
  %v1287 = vpop.permute.xlu0 %1286
  %1290 = vrot.lane.b32.xlu0 %v1237, 64
  %v1291 = vpop.permute.xlu0 %1290
  %1294 = vrot.lane.b32.xlu0 %v1247, 80
  %v1295 = vpop.permute.xlu0 %1294
  %1298 = vrot.lane.b32.xlu0 %v1244, 96
  %v1299 = vpop.permute.xlu0 %1298
  %1302 = vrot.lane.b32.xlu0 %v1248, 112
  %v1303 = vpop.permute.xlu0 %1302
  %v1305 = vsel %vm342, %v1153, %v1251
  %v1306 = vsel %vm344, %v1305, %v1255
  %v1307 = vsel %vm346, %v1306, %v1259
  %v1308 = vsel %vm348, %v1307, %v1263
  %v1309 = vsel %vm350, %v1308, %v1267
  %v1310 = vsel %vm352, %v1309, %v1271
  %v1311 = vsel %vm354, %v1310, %v1275
  %v1312 = vsel %vm342, %v1221, %v1279
  %v1313 = vsel %vm344, %v1312, %v1283
  %v1314 = vsel %vm346, %v1313, %v1287
  %v1315 = vsel %vm348, %v1314, %v1291
  %v1316 = vsel %vm350, %v1315, %v1295
  %v1317 = vsel %vm352, %v1316, %v1299
  %v1318 = vsel %vm354, %v1317, %v1303
  %s1319 = scalar_lea.vmem %s1, 24
  %v1320 = vld [vmem:[%s1319] sm:$0xff]
  %v1322 = vsel %vm604, %v1320, 0
  %v1325 = vsel %vm608, %v1311, 0
  %v1328 = vsel %vm608, %v1318, 0
  %1330 = vmatprep.subr.mxu0 %v1328
  %1331 = vmatpush1.msra.mxu0 %v1325
  %1332 = vmatprep.subr.mxu0 0.0
  %1333 = vmatpush1.msra.mxu0 0.0
  %1334 = vmatprep.subr.mxu0 0.0
  %1335 = vmatpush1.msra.mxu0 0.0
  %1336 = vmatprep.subr.mxu0 0.0
  %1337 = vmatpush1.msra.mxu0 0.0
  %1338 = vmatprep.subr.mxu0 0.0
  %1339 = vmatpush1.msra.mxu0 0.0
  %1340 = vmatprep.subr.mxu0 0.0
  %1341 = vmatpush1.msra.mxu0 0.0
  %1342 = vmatprep.subr.mxu0 0.0
  %1343 = vmatpush1.msra.mxu0 0.0
  %1344 = vmatprep.subr.mxu0 0.0
  %1345 = vmatpush1.msra.mxu0 0.0
  %1346 = vmatprep.subr.mxu0 0.0
  %1347 = vmatpush1.msra.mxu0 0.0
  %1348 = vmatprep.subr.mxu0 0.0
  %1349 = vmatpush1.msra.mxu0 0.0
  %1350 = vmatprep.subr.mxu0 0.0
  %1351 = vmatpush1.msra.mxu0 0.0
  %1352 = vmatprep.subr.mxu0 0.0
  %1353 = vmatpush1.msra.mxu0 0.0
  %1354 = vmatprep.subr.mxu0 0.0
  %1355 = vmatpush1.msra.mxu0 0.0
  %1356 = vmatprep.subr.mxu0 0.0
  %1357 = vmatpush1.msra.mxu0 0.0
  %1358 = vmatprep.subr.mxu0 0.0
  %1359 = vmatpush1.msra.mxu0 0.0
  %1360 = vmatprep.subr.mxu0 0.0
  %1361 = vmatpush1.msra.mxu0 0.0
  %1362 = vmatprep.subr.mxu0 0.0
  %1363 = vmatpush1.msra.mxu0 0.0
  %1364 = vmatprep.subr.mxu0 0.0
  %1365 = vmatpush1.msra.mxu0 0.0
  %1366 = vmatprep.subr.mxu0 0.0
  %1367 = vmatpush1.msra.mxu0 0.0
  %1368 = vmatprep.subr.mxu0 0.0
  %1369 = vmatpush1.msra.mxu0 0.0
  %1370 = vmatprep.subr.mxu0 0.0
  %1371 = vmatpush1.msra.mxu0 0.0
  %1372 = vmatprep.subr.mxu0 0.0
  %1373 = vmatpush1.msra.mxu0 0.0
  %1374 = vmatprep.subr.mxu0 0.0
  %1375 = vmatpush1.msra.mxu0 0.0
  %1376 = vmatprep.subr.mxu0 0.0
  %1377 = vmatpush1.msra.mxu0 0.0
  %1378 = vmatprep.subr.mxu0 0.0
  %1379 = vmatpush1.msra.mxu0 0.0
  %1380 = vmatprep.subr.mxu0 0.0
  %1381 = vmatpush1.msra.mxu0 0.0
  %1382 = vmatprep.subr.mxu0 0.0
  %1383 = vmatpush1.msra.mxu0 0.0
  %1384 = vmatprep.subr.mxu0 0.0
  %1385 = vmatpush1.msra.mxu0 0.0
  %1386 = vmatprep.subr.mxu0 0.0
  %1387 = vmatpush1.msra.mxu0 0.0
  %1388 = vmatprep.subr.mxu0 0.0
  %1389 = vmatpush1.msra.mxu0 0.0
  %1390 = vmatprep.subr.mxu0 0.0
  %1391 = vmatpush1.msra.mxu0 0.0
  %1392 = vmatprep.subr.mxu0 0.0
  %1393 = vmatpush1.msra.mxu0 0.0
  %1394 = vmatprep.mubr.f32.mxu0 0.0
  %1395 = vmatmul.mubr.f32.gmra.mrb[0].mxu0 %v1322
  %v1396 = vpop.f32.mrb[0].mxu0
  %v1397 = vadd.f32 0.0, %v1396
  %v1398 = vpop.f32.mrb[0].mxu0
  %v1399 = vadd.f32 0.0, %v1398
  %1400 = vdwg.mxu0
  %v1401 = vadd.f32 %v1078, %v1397
  %v1402 = vadd.f32 %v1079, %v1399
  %1403 = vrot.lane.b32.xlu0 %v1087, 127
  %v1404 = vpop.permute.xlu0 %1403
  %1405 = vrot.lane.b32.xlu0 %v1089, 127
  %v1406 = vpop.permute.xlu0 %1405
  %1407 = vrot.lane.b32.xlu0 %v1092, 127
  %v1408 = vpop.permute.xlu0 %1407
  %1409 = vrot.lane.b32.xlu0 %v1094, 127
  %v1410 = vpop.permute.xlu0 %1409
  %1411 = vrot.lane.b32.xlu0 %v1097, 127
  %v1412 = vpop.permute.xlu0 %1411
  %1413 = vrot.lane.b32.xlu0 %v1099, 127
  %v1414 = vpop.permute.xlu0 %1413
  %1415 = vrot.lane.b32.xlu0 %v1102, 127
  %v1416 = vpop.permute.xlu0 %1415
  %1417 = vrot.lane.b32.xlu0 %v1104, 127
  %v1418 = vpop.permute.xlu0 %1417
  %v1427 = vcombine.low %v1404, %v1412
  %v1428 = vcombine.high %v1404, %v1412
  %v1430 = vunpack.c.l.s4 1983009808
  %v1431 = vunpack.c.0.s8 %v1430
  %v1432 = vlaneseq
  %v1433 = vshrl.u32 %v1432, 7
  %v1434 = vsub.s32 %v1431, %v1433
  %v1435 = vrot.slane %v1427, %v1434
  %v1437 = vunpack.c.l.s4 1983009808
  %v1438 = vunpack.c.0.s8 %v1437
  %v1439 = vlaneseq
  %v1440 = vshrl.u32 %v1439, 7
  %v1441 = vsub.s32 %v1438, %v1440
  %v1442 = vrot.slane %v1428, %v1441
  %v1443 = vcombine.low %v1408, %v1416
  %v1444 = vcombine.high %v1408, %v1416
  %v1446 = vunpack.c.l.s4 1983009808
  %v1447 = vunpack.c.0.s8 %v1446
  %v1448 = vlaneseq
  %v1449 = vshrl.u32 %v1448, 7
  %v1450 = vsub.s32 %v1447, %v1449
  %v1451 = vrot.slane %v1443, %v1450
  %v1453 = vunpack.c.l.s4 1983009808
  %v1454 = vunpack.c.0.s8 %v1453
  %v1455 = vlaneseq
  %v1456 = vshrl.u32 %v1455, 7
  %v1457 = vsub.s32 %v1454, %v1456
  %v1458 = vrot.slane %v1444, %v1457
  %v1459 = vcombine.low %v1435, %v1451
  %v1460 = vcombine.high %v1435, %v1451
  %v1462 = vunpack.c.l.s4 1934713408
  %v1463 = vunpack.c.0.s8 %v1462
  %v1464 = vlaneseq
  %v1465 = vshrl.u32 %v1464, 7
  %v1466 = vsub.s32 %v1463, %v1465
  %v1467 = vrot.slane %v1459, %v1466
  %v1469 = vunpack.c.l.s4 1934713408
  %v1470 = vunpack.c.0.s8 %v1469
  %v1471 = vlaneseq
  %v1472 = vshrl.u32 %v1471, 7
  %v1473 = vsub.s32 %v1470, %v1472
  %v1474 = vrot.slane %v1460, %v1473
  %v1475 = vcombine.low %v1442, %v1458
  %v1476 = vcombine.high %v1442, %v1458
  %v1478 = vunpack.c.l.s4 1934713408
  %v1479 = vunpack.c.0.s8 %v1478
  %v1480 = vlaneseq
  %v1481 = vshrl.u32 %v1480, 7
  %v1482 = vsub.s32 %v1479, %v1481
  %v1483 = vrot.slane %v1475, %v1482
  %v1485 = vunpack.c.l.s4 1934713408
  %v1486 = vunpack.c.0.s8 %v1485
  %v1487 = vlaneseq
  %v1488 = vshrl.u32 %v1487, 7
  %v1489 = vsub.s32 %v1486, %v1488
  %v1490 = vrot.slane %v1476, %v1489
  %v1491 = vcombine.high %v1467, 0.0
  %v1492 = vcombine.high %v1474, 0.0
  %v1493 = vcombine.high %v1483, 0.0
  %v1494 = vcombine.high %v1490, 0.0
  %v1495 = vcombine.low %v1406, %v1414
  %v1496 = vcombine.high %v1406, %v1414
  %v1498 = vunpack.c.l.s4 1983009808
  %v1499 = vunpack.c.0.s8 %v1498
  %v1500 = vlaneseq
  %v1501 = vshrl.u32 %v1500, 7
  %v1502 = vsub.s32 %v1499, %v1501
  %v1503 = vrot.slane %v1495, %v1502
  %v1505 = vunpack.c.l.s4 1983009808
  %v1506 = vunpack.c.0.s8 %v1505
  %v1507 = vlaneseq
  %v1508 = vshrl.u32 %v1507, 7
  %v1509 = vsub.s32 %v1506, %v1508
  %v1510 = vrot.slane %v1496, %v1509
  %v1511 = vcombine.low %v1410, %v1418
  %v1512 = vcombine.high %v1410, %v1418
  %v1514 = vunpack.c.l.s4 1983009808
  %v1515 = vunpack.c.0.s8 %v1514
  %v1516 = vlaneseq
  %v1517 = vshrl.u32 %v1516, 7
  %v1518 = vsub.s32 %v1515, %v1517
  %v1519 = vrot.slane %v1511, %v1518
  %v1521 = vunpack.c.l.s4 1983009808
  %v1522 = vunpack.c.0.s8 %v1521
  %v1523 = vlaneseq
  %v1524 = vshrl.u32 %v1523, 7
  %v1525 = vsub.s32 %v1522, %v1524
  %v1526 = vrot.slane %v1512, %v1525
  %v1527 = vcombine.low %v1503, %v1519
  %v1528 = vcombine.high %v1503, %v1519
  %v1530 = vunpack.c.l.s4 1934713408
  %v1531 = vunpack.c.0.s8 %v1530
  %v1532 = vlaneseq
  %v1533 = vshrl.u32 %v1532, 7
  %v1534 = vsub.s32 %v1531, %v1533
  %v1535 = vrot.slane %v1527, %v1534
  %v1537 = vunpack.c.l.s4 1934713408
  %v1538 = vunpack.c.0.s8 %v1537
  %v1539 = vlaneseq
  %v1540 = vshrl.u32 %v1539, 7
  %v1541 = vsub.s32 %v1538, %v1540
  %v1542 = vrot.slane %v1528, %v1541
  %v1543 = vcombine.low %v1510, %v1526
  %v1544 = vcombine.high %v1510, %v1526
  %v1546 = vunpack.c.l.s4 1934713408
  %v1547 = vunpack.c.0.s8 %v1546
  %v1548 = vlaneseq
  %v1549 = vshrl.u32 %v1548, 7
  %v1550 = vsub.s32 %v1547, %v1549
  %v1551 = vrot.slane %v1543, %v1550
  %v1553 = vunpack.c.l.s4 1934713408
  %v1554 = vunpack.c.0.s8 %v1553
  %v1555 = vlaneseq
  %v1556 = vshrl.u32 %v1555, 7
  %v1557 = vsub.s32 %v1554, %v1556
  %v1558 = vrot.slane %v1544, %v1557
  %v1559 = vcombine.high %v1535, 0.0
  %v1560 = vcombine.high %v1542, 0.0
  %v1561 = vcombine.high %v1551, 0.0
  %v1562 = vcombine.high %v1558, 0.0
  %1564 = vrot.lane.b32.xlu0 %v1491, 16
  %v1565 = vpop.permute.xlu0 %1564
  %1568 = vrot.lane.b32.xlu0 %v1474, 32
  %v1569 = vpop.permute.xlu0 %1568
  %1572 = vrot.lane.b32.xlu0 %v1492, 48
  %v1573 = vpop.permute.xlu0 %1572
  %1576 = vrot.lane.b32.xlu0 %v1483, 64
  %v1577 = vpop.permute.xlu0 %1576
  %1580 = vrot.lane.b32.xlu0 %v1493, 80
  %v1581 = vpop.permute.xlu0 %1580
  %1584 = vrot.lane.b32.xlu0 %v1490, 96
  %v1585 = vpop.permute.xlu0 %1584
  %1588 = vrot.lane.b32.xlu0 %v1494, 112
  %v1589 = vpop.permute.xlu0 %1588
  %1592 = vrot.lane.b32.xlu0 %v1559, 16
  %v1593 = vpop.permute.xlu0 %1592
  %1596 = vrot.lane.b32.xlu0 %v1542, 32
  %v1597 = vpop.permute.xlu0 %1596
  %1600 = vrot.lane.b32.xlu0 %v1560, 48
  %v1601 = vpop.permute.xlu0 %1600
  %1604 = vrot.lane.b32.xlu0 %v1551, 64
  %v1605 = vpop.permute.xlu0 %1604
  %1608 = vrot.lane.b32.xlu0 %v1561, 80
  %v1609 = vpop.permute.xlu0 %1608
  %1612 = vrot.lane.b32.xlu0 %v1558, 96
  %v1613 = vpop.permute.xlu0 %1612
  %1616 = vrot.lane.b32.xlu0 %v1562, 112
  %v1617 = vpop.permute.xlu0 %1616
  %v1619 = vsel %vm342, %v1467, %v1565
  %v1620 = vsel %vm344, %v1619, %v1569
  %v1621 = vsel %vm346, %v1620, %v1573
  %v1622 = vsel %vm348, %v1621, %v1577
  %v1623 = vsel %vm350, %v1622, %v1581
  %v1624 = vsel %vm352, %v1623, %v1585
  %v1625 = vsel %vm354, %v1624, %v1589
  %v1626 = vsel %vm342, %v1535, %v1593
  %v1627 = vsel %vm344, %v1626, %v1597
  %v1628 = vsel %vm346, %v1627, %v1601
  %v1629 = vsel %vm348, %v1628, %v1605
  %v1630 = vsel %vm350, %v1629, %v1609
  %v1631 = vsel %vm352, %v1630, %v1613
  %v1632 = vsel %vm354, %v1631, %v1617
  %s1633 = scalar_lea.vmem %s1, 32
  %v1634 = vld [vmem:[%s1633] sm:$0xff]
  %v1636 = vsel %vm604, %v1634, 0
  %v1639 = vsel %vm608, %v1625, 0
  %v1642 = vsel %vm608, %v1632, 0
  %1644 = vmatprep.subr.mxu0 %v1642
  %1645 = vmatpush1.msra.mxu0 %v1639
  %1646 = vmatprep.subr.mxu0 0.0
  %1647 = vmatpush1.msra.mxu0 0.0
  %1648 = vmatprep.subr.mxu0 0.0
  %1649 = vmatpush1.msra.mxu0 0.0
  %1650 = vmatprep.subr.mxu0 0.0
  %1651 = vmatpush1.msra.mxu0 0.0
  %1652 = vmatprep.subr.mxu0 0.0
  %1653 = vmatpush1.msra.mxu0 0.0
  %1654 = vmatprep.subr.mxu0 0.0
  %1655 = vmatpush1.msra.mxu0 0.0
  %1656 = vmatprep.subr.mxu0 0.0
  %1657 = vmatpush1.msra.mxu0 0.0
  %1658 = vmatprep.subr.mxu0 0.0
  %1659 = vmatpush1.msra.mxu0 0.0
  %1660 = vmatprep.subr.mxu0 0.0
  %1661 = vmatpush1.msra.mxu0 0.0
  %1662 = vmatprep.subr.mxu0 0.0
  %1663 = vmatpush1.msra.mxu0 0.0
  %1664 = vmatprep.subr.mxu0 0.0
  %1665 = vmatpush1.msra.mxu0 0.0
  %1666 = vmatprep.subr.mxu0 0.0
  %1667 = vmatpush1.msra.mxu0 0.0
  %1668 = vmatprep.subr.mxu0 0.0
  %1669 = vmatpush1.msra.mxu0 0.0
  %1670 = vmatprep.subr.mxu0 0.0
  %1671 = vmatpush1.msra.mxu0 0.0
  %1672 = vmatprep.subr.mxu0 0.0
  %1673 = vmatpush1.msra.mxu0 0.0
  %1674 = vmatprep.subr.mxu0 0.0
  %1675 = vmatpush1.msra.mxu0 0.0
  %1676 = vmatprep.subr.mxu0 0.0
  %1677 = vmatpush1.msra.mxu0 0.0
  %1678 = vmatprep.subr.mxu0 0.0
  %1679 = vmatpush1.msra.mxu0 0.0
  %1680 = vmatprep.subr.mxu0 0.0
  %1681 = vmatpush1.msra.mxu0 0.0
  %1682 = vmatprep.subr.mxu0 0.0
  %1683 = vmatpush1.msra.mxu0 0.0
  %1684 = vmatprep.subr.mxu0 0.0
  %1685 = vmatpush1.msra.mxu0 0.0
  %1686 = vmatprep.subr.mxu0 0.0
  %1687 = vmatpush1.msra.mxu0 0.0
  %1688 = vmatprep.subr.mxu0 0.0
  %1689 = vmatpush1.msra.mxu0 0.0
  %1690 = vmatprep.subr.mxu0 0.0
  %1691 = vmatpush1.msra.mxu0 0.0
  %1692 = vmatprep.subr.mxu0 0.0
  %1693 = vmatpush1.msra.mxu0 0.0
  %1694 = vmatprep.subr.mxu0 0.0
  %1695 = vmatpush1.msra.mxu0 0.0
  %1696 = vmatprep.subr.mxu0 0.0
  %1697 = vmatpush1.msra.mxu0 0.0
  %1698 = vmatprep.subr.mxu0 0.0
  %1699 = vmatpush1.msra.mxu0 0.0
  %1700 = vmatprep.subr.mxu0 0.0
  %1701 = vmatpush1.msra.mxu0 0.0
  %1702 = vmatprep.subr.mxu0 0.0
  %1703 = vmatpush1.msra.mxu0 0.0
  %1704 = vmatprep.subr.mxu0 0.0
  %1705 = vmatpush1.msra.mxu0 0.0
  %1706 = vmatprep.subr.mxu0 0.0
  %1707 = vmatpush1.msra.mxu0 0.0
  %1708 = vmatprep.mubr.f32.mxu0 0.0
  %1709 = vmatmul.mubr.f32.gmra.mrb[0].mxu0 %v1636
  %v1710 = vpop.f32.mrb[0].mxu0
  %v1711 = vadd.f32 0.0, %v1710
  %v1712 = vpop.f32.mrb[0].mxu0
  %v1713 = vadd.f32 0.0, %v1712
  %1714 = vdwg.mxu0
  %v1715 = vadd.f32 %v1401, %v1711
  %v1716 = vadd.f32 %v1402, %v1713
  %1717 = vrot.lane.b32.xlu0 %v1087, 126
  %v1718 = vpop.permute.xlu0 %1717
  %1719 = vrot.lane.b32.xlu0 %v1089, 126
  %v1720 = vpop.permute.xlu0 %1719
  %1721 = vrot.lane.b32.xlu0 %v1092, 126
  %v1722 = vpop.permute.xlu0 %1721
  %1723 = vrot.lane.b32.xlu0 %v1094, 126
  %v1724 = vpop.permute.xlu0 %1723
  %1725 = vrot.lane.b32.xlu0 %v1097, 126
  %v1726 = vpop.permute.xlu0 %1725
  %1727 = vrot.lane.b32.xlu0 %v1099, 126
  %v1728 = vpop.permute.xlu0 %1727
  %1729 = vrot.lane.b32.xlu0 %v1102, 126
  %v1730 = vpop.permute.xlu0 %1729
  %1731 = vrot.lane.b32.xlu0 %v1104, 126
  %v1732 = vpop.permute.xlu0 %1731
  %v1741 = vcombine.low %v1718, %v1726
  %v1742 = vcombine.high %v1718, %v1726
  %v1744 = vunpack.c.l.s4 1983009808
  %v1745 = vunpack.c.0.s8 %v1744
  %v1746 = vlaneseq
  %v1747 = vshrl.u32 %v1746, 7
  %v1748 = vsub.s32 %v1745, %v1747
  %v1749 = vrot.slane %v1741, %v1748
  %v1751 = vunpack.c.l.s4 1983009808
  %v1752 = vunpack.c.0.s8 %v1751
  %v1753 = vlaneseq
  %v1754 = vshrl.u32 %v1753, 7
  %v1755 = vsub.s32 %v1752, %v1754
  %v1756 = vrot.slane %v1742, %v1755
  %v1757 = vcombine.low %v1722, %v1730
  %v1758 = vcombine.high %v1722, %v1730
  %v1760 = vunpack.c.l.s4 1983009808
  %v1761 = vunpack.c.0.s8 %v1760
  %v1762 = vlaneseq
  %v1763 = vshrl.u32 %v1762, 7
  %v1764 = vsub.s32 %v1761, %v1763
  %v1765 = vrot.slane %v1757, %v1764
  %v1767 = vunpack.c.l.s4 1983009808
  %v1768 = vunpack.c.0.s8 %v1767
  %v1769 = vlaneseq
  %v1770 = vshrl.u32 %v1769, 7
  %v1771 = vsub.s32 %v1768, %v1770
  %v1772 = vrot.slane %v1758, %v1771
  %v1773 = vcombine.low %v1749, %v1765
  %v1774 = vcombine.high %v1749, %v1765
  %v1776 = vunpack.c.l.s4 1934713408
  %v1777 = vunpack.c.0.s8 %v1776
  %v1778 = vlaneseq
  %v1779 = vshrl.u32 %v1778, 7
  %v1780 = vsub.s32 %v1777, %v1779
  %v1781 = vrot.slane %v1773, %v1780
  %v1783 = vunpack.c.l.s4 1934713408
  %v1784 = vunpack.c.0.s8 %v1783
  %v1785 = vlaneseq
  %v1786 = vshrl.u32 %v1785, 7
  %v1787 = vsub.s32 %v1784, %v1786
  %v1788 = vrot.slane %v1774, %v1787
  %v1789 = vcombine.low %v1756, %v1772
  %v1790 = vcombine.high %v1756, %v1772
  %v1792 = vunpack.c.l.s4 1934713408
  %v1793 = vunpack.c.0.s8 %v1792
  %v1794 = vlaneseq
  %v1795 = vshrl.u32 %v1794, 7
  %v1796 = vsub.s32 %v1793, %v1795
  %v1797 = vrot.slane %v1789, %v1796
  %v1799 = vunpack.c.l.s4 1934713408
  %v1800 = vunpack.c.0.s8 %v1799
  %v1801 = vlaneseq
  %v1802 = vshrl.u32 %v1801, 7
  %v1803 = vsub.s32 %v1800, %v1802
  %v1804 = vrot.slane %v1790, %v1803
  %v1805 = vcombine.high %v1781, 0.0
  %v1806 = vcombine.high %v1788, 0.0
  %v1807 = vcombine.high %v1797, 0.0
  %v1808 = vcombine.high %v1804, 0.0
  %v1809 = vcombine.low %v1720, %v1728
  %v1810 = vcombine.high %v1720, %v1728
  %v1812 = vunpack.c.l.s4 1983009808
  %v1813 = vunpack.c.0.s8 %v1812
  %v1814 = vlaneseq
  %v1815 = vshrl.u32 %v1814, 7
  %v1816 = vsub.s32 %v1813, %v1815
  %v1817 = vrot.slane %v1809, %v1816
  %v1819 = vunpack.c.l.s4 1983009808
  %v1820 = vunpack.c.0.s8 %v1819
  %v1821 = vlaneseq
  %v1822 = vshrl.u32 %v1821, 7
  %v1823 = vsub.s32 %v1820, %v1822
  %v1824 = vrot.slane %v1810, %v1823
  %v1825 = vcombine.low %v1724, %v1732
  %v1826 = vcombine.high %v1724, %v1732
  %v1828 = vunpack.c.l.s4 1983009808
  %v1829 = vunpack.c.0.s8 %v1828
  %v1830 = vlaneseq
  %v1831 = vshrl.u32 %v1830, 7
  %v1832 = vsub.s32 %v1829, %v1831
  %v1833 = vrot.slane %v1825, %v1832
  %v1835 = vunpack.c.l.s4 1983009808
  %v1836 = vunpack.c.0.s8 %v1835
  %v1837 = vlaneseq
  %v1838 = vshrl.u32 %v1837, 7
  %v1839 = vsub.s32 %v1836, %v1838
  %v1840 = vrot.slane %v1826, %v1839
  %v1841 = vcombine.low %v1817, %v1833
  %v1842 = vcombine.high %v1817, %v1833
  %v1844 = vunpack.c.l.s4 1934713408
  %v1845 = vunpack.c.0.s8 %v1844
  %v1846 = vlaneseq
  %v1847 = vshrl.u32 %v1846, 7
  %v1848 = vsub.s32 %v1845, %v1847
  %v1849 = vrot.slane %v1841, %v1848
  %v1851 = vunpack.c.l.s4 1934713408
  %v1852 = vunpack.c.0.s8 %v1851
  %v1853 = vlaneseq
  %v1854 = vshrl.u32 %v1853, 7
  %v1855 = vsub.s32 %v1852, %v1854
  %v1856 = vrot.slane %v1842, %v1855
  %v1857 = vcombine.low %v1824, %v1840
  %v1858 = vcombine.high %v1824, %v1840
  %v1860 = vunpack.c.l.s4 1934713408
  %v1861 = vunpack.c.0.s8 %v1860
  %v1862 = vlaneseq
  %v1863 = vshrl.u32 %v1862, 7
  %v1864 = vsub.s32 %v1861, %v1863
  %v1865 = vrot.slane %v1857, %v1864
  %v1867 = vunpack.c.l.s4 1934713408
  %v1868 = vunpack.c.0.s8 %v1867
  %v1869 = vlaneseq
  %v1870 = vshrl.u32 %v1869, 7
  %v1871 = vsub.s32 %v1868, %v1870
  %v1872 = vrot.slane %v1858, %v1871
  %v1873 = vcombine.high %v1849, 0.0
  %v1874 = vcombine.high %v1856, 0.0
  %v1875 = vcombine.high %v1865, 0.0
  %v1876 = vcombine.high %v1872, 0.0
  %1878 = vrot.lane.b32.xlu0 %v1805, 16
  %v1879 = vpop.permute.xlu0 %1878
  %1882 = vrot.lane.b32.xlu0 %v1788, 32
  %v1883 = vpop.permute.xlu0 %1882
  %1886 = vrot.lane.b32.xlu0 %v1806, 48
  %v1887 = vpop.permute.xlu0 %1886
  %1890 = vrot.lane.b32.xlu0 %v1797, 64
  %v1891 = vpop.permute.xlu0 %1890
  %1894 = vrot.lane.b32.xlu0 %v1807, 80
  %v1895 = vpop.permute.xlu0 %1894
  %1898 = vrot.lane.b32.xlu0 %v1804, 96
  %v1899 = vpop.permute.xlu0 %1898
  %1902 = vrot.lane.b32.xlu0 %v1808, 112
  %v1903 = vpop.permute.xlu0 %1902
  %1906 = vrot.lane.b32.xlu0 %v1873, 16
  %v1907 = vpop.permute.xlu0 %1906
  %1910 = vrot.lane.b32.xlu0 %v1856, 32
  %v1911 = vpop.permute.xlu0 %1910
  %1914 = vrot.lane.b32.xlu0 %v1874, 48
  %v1915 = vpop.permute.xlu0 %1914
  %1918 = vrot.lane.b32.xlu0 %v1865, 64
  %v1919 = vpop.permute.xlu0 %1918
  %1922 = vrot.lane.b32.xlu0 %v1875, 80
  %v1923 = vpop.permute.xlu0 %1922
  %1926 = vrot.lane.b32.xlu0 %v1872, 96
  %v1927 = vpop.permute.xlu0 %1926
  %1930 = vrot.lane.b32.xlu0 %v1876, 112
  %v1931 = vpop.permute.xlu0 %1930
  %v1933 = vsel %vm342, %v1781, %v1879
  %v1934 = vsel %vm344, %v1933, %v1883
  %v1935 = vsel %vm346, %v1934, %v1887
  %v1936 = vsel %vm348, %v1935, %v1891
  %v1937 = vsel %vm350, %v1936, %v1895
  %v1938 = vsel %vm352, %v1937, %v1899
  %v1939 = vsel %vm354, %v1938, %v1903
  %v1940 = vsel %vm342, %v1849, %v1907
  %v1941 = vsel %vm344, %v1940, %v1911
  %v1942 = vsel %vm346, %v1941, %v1915
  %v1943 = vsel %vm348, %v1942, %v1919
  %v1944 = vsel %vm350, %v1943, %v1923
  %v1945 = vsel %vm352, %v1944, %v1927
  %v1946 = vsel %vm354, %v1945, %v1931
  %s1947 = scalar_lea.vmem %s1, 40
  %v1948 = vld [vmem:[%s1947] sm:$0xff]
  %v1950 = vsel %vm604, %v1948, 0
  %v1953 = vsel %vm608, %v1939, 0
  %v1956 = vsel %vm608, %v1946, 0
  %1958 = vmatprep.subr.mxu0 %v1956
  %1959 = vmatpush1.msra.mxu0 %v1953
  %1960 = vmatprep.subr.mxu0 0.0
  %1961 = vmatpush1.msra.mxu0 0.0
  %1962 = vmatprep.subr.mxu0 0.0
  %1963 = vmatpush1.msra.mxu0 0.0
  %1964 = vmatprep.subr.mxu0 0.0
  %1965 = vmatpush1.msra.mxu0 0.0
  %1966 = vmatprep.subr.mxu0 0.0
  %1967 = vmatpush1.msra.mxu0 0.0
  %1968 = vmatprep.subr.mxu0 0.0
  %1969 = vmatpush1.msra.mxu0 0.0
  %1970 = vmatprep.subr.mxu0 0.0
  %1971 = vmatpush1.msra.mxu0 0.0
  %1972 = vmatprep.subr.mxu0 0.0
  %1973 = vmatpush1.msra.mxu0 0.0
  %1974 = vmatprep.subr.mxu0 0.0
  %1975 = vmatpush1.msra.mxu0 0.0
  %1976 = vmatprep.subr.mxu0 0.0
  %1977 = vmatpush1.msra.mxu0 0.0
  %1978 = vmatprep.subr.mxu0 0.0
  %1979 = vmatpush1.msra.mxu0 0.0
  %1980 = vmatprep.subr.mxu0 0.0
  %1981 = vmatpush1.msra.mxu0 0.0
  %1982 = vmatprep.subr.mxu0 0.0
  %1983 = vmatpush1.msra.mxu0 0.0
  %1984 = vmatprep.subr.mxu0 0.0
  %1985 = vmatpush1.msra.mxu0 0.0
  %1986 = vmatprep.subr.mxu0 0.0
  %1987 = vmatpush1.msra.mxu0 0.0
  %1988 = vmatprep.subr.mxu0 0.0
  %1989 = vmatpush1.msra.mxu0 0.0
  %1990 = vmatprep.subr.mxu0 0.0
  %1991 = vmatpush1.msra.mxu0 0.0
  %1992 = vmatprep.subr.mxu0 0.0
  %1993 = vmatpush1.msra.mxu0 0.0
  %1994 = vmatprep.subr.mxu0 0.0
  %1995 = vmatpush1.msra.mxu0 0.0
  %1996 = vmatprep.subr.mxu0 0.0
  %1997 = vmatpush1.msra.mxu0 0.0
  %1998 = vmatprep.subr.mxu0 0.0
  %1999 = vmatpush1.msra.mxu0 0.0
  %2000 = vmatprep.subr.mxu0 0.0
  %2001 = vmatpush1.msra.mxu0 0.0
  %2002 = vmatprep.subr.mxu0 0.0
  %2003 = vmatpush1.msra.mxu0 0.0
  %2004 = vmatprep.subr.mxu0 0.0
  %2005 = vmatpush1.msra.mxu0 0.0
  %2006 = vmatprep.subr.mxu0 0.0
  %2007 = vmatpush1.msra.mxu0 0.0
  %2008 = vmatprep.subr.mxu0 0.0
  %2009 = vmatpush1.msra.mxu0 0.0
  %2010 = vmatprep.subr.mxu0 0.0
  %2011 = vmatpush1.msra.mxu0 0.0
  %2012 = vmatprep.subr.mxu0 0.0
  %2013 = vmatpush1.msra.mxu0 0.0
  %2014 = vmatprep.subr.mxu0 0.0
  %2015 = vmatpush1.msra.mxu0 0.0
  %2016 = vmatprep.subr.mxu0 0.0
  %2017 = vmatpush1.msra.mxu0 0.0
  %2018 = vmatprep.subr.mxu0 0.0
  %2019 = vmatpush1.msra.mxu0 0.0
  %2020 = vmatprep.subr.mxu0 0.0
  %2021 = vmatpush1.msra.mxu0 0.0
  %2022 = vmatprep.mubr.f32.mxu0 0.0
  %2023 = vmatmul.mubr.f32.gmra.mrb[0].mxu0 %v1950
  %v2024 = vpop.f32.mrb[0].mxu0
  %v2025 = vadd.f32 0.0, %v2024
  %v2026 = vpop.f32.mrb[0].mxu0
  %v2027 = vadd.f32 0.0, %v2026
  %2028 = vdwg.mxu0
  %v2029 = vadd.f32 %v1715, %v2025
  %v2030 = vadd.f32 %v1716, %v2027
  %vm2031 = vcmask 1045504
  %v2032 = vrot.slane %v138, 2
  %v2033 = vrot.slane %v139, 2
  %v2034 = vsel %vm2031, %v2032, %v2033
  %v2035 = vrot.slane %v140, 2
  %v2036 = vsel %vm2031, %v2033, %v2035
  %v2037 = vrot.slane %v141, 2
  %v2038 = vrot.slane %v142, 2
  %v2039 = vsel %vm2031, %v2037, %v2038
  %v2040 = vrot.slane %v143, 2
  %v2041 = vsel %vm2031, %v2038, %v2040
  %v2042 = vrot.slane %v144, 2
  %v2043 = vrot.slane %v145, 2
  %v2044 = vsel %vm2031, %v2042, %v2043
  %v2045 = vrot.slane %v146, 2
  %v2046 = vsel %vm2031, %v2043, %v2045
  %v2047 = vrot.slane %v147, 2
  %v2048 = vrot.slane %v148, 2
  %v2049 = vsel %vm2031, %v2047, %v2048
  %v2050 = vrot.slane %v149, 2
  %v2051 = vsel %vm2031, %v2048, %v2050
  %v2060 = vcombine.low %v2034, %v2044
  %v2061 = vcombine.high %v2034, %v2044
  %v2063 = vunpack.c.l.s4 1983009808
  %v2064 = vunpack.c.0.s8 %v2063
  %v2065 = vlaneseq
  %v2066 = vshrl.u32 %v2065, 7
  %v2067 = vsub.s32 %v2064, %v2066
  %v2068 = vrot.slane %v2060, %v2067
  %v2070 = vunpack.c.l.s4 1983009808
  %v2071 = vunpack.c.0.s8 %v2070
  %v2072 = vlaneseq
  %v2073 = vshrl.u32 %v2072, 7
  %v2074 = vsub.s32 %v2071, %v2073
  %v2075 = vrot.slane %v2061, %v2074
  %v2076 = vcombine.low %v2039, %v2049
  %v2077 = vcombine.high %v2039, %v2049
  %v2079 = vunpack.c.l.s4 1983009808
  %v2080 = vunpack.c.0.s8 %v2079
  %v2081 = vlaneseq
  %v2082 = vshrl.u32 %v2081, 7
  %v2083 = vsub.s32 %v2080, %v2082
  %v2084 = vrot.slane %v2076, %v2083
  %v2086 = vunpack.c.l.s4 1983009808
  %v2087 = vunpack.c.0.s8 %v2086
  %v2088 = vlaneseq
  %v2089 = vshrl.u32 %v2088, 7
  %v2090 = vsub.s32 %v2087, %v2089
  %v2091 = vrot.slane %v2077, %v2090
  %v2092 = vcombine.low %v2068, %v2084
  %v2093 = vcombine.high %v2068, %v2084
  %v2095 = vunpack.c.l.s4 1934713408
  %v2096 = vunpack.c.0.s8 %v2095
  %v2097 = vlaneseq
  %v2098 = vshrl.u32 %v2097, 7
  %v2099 = vsub.s32 %v2096, %v2098
  %v2100 = vrot.slane %v2092, %v2099
  %v2102 = vunpack.c.l.s4 1934713408
  %v2103 = vunpack.c.0.s8 %v2102
  %v2104 = vlaneseq
  %v2105 = vshrl.u32 %v2104, 7
  %v2106 = vsub.s32 %v2103, %v2105
  %v2107 = vrot.slane %v2093, %v2106
  %v2108 = vcombine.low %v2075, %v2091
  %v2109 = vcombine.high %v2075, %v2091
  %v2111 = vunpack.c.l.s4 1934713408
  %v2112 = vunpack.c.0.s8 %v2111
  %v2113 = vlaneseq
  %v2114 = vshrl.u32 %v2113, 7
  %v2115 = vsub.s32 %v2112, %v2114
  %v2116 = vrot.slane %v2108, %v2115
  %v2118 = vunpack.c.l.s4 1934713408
  %v2119 = vunpack.c.0.s8 %v2118
  %v2120 = vlaneseq
  %v2121 = vshrl.u32 %v2120, 7
  %v2122 = vsub.s32 %v2119, %v2121
  %v2123 = vrot.slane %v2109, %v2122
  %v2124 = vcombine.high %v2100, 0.0
  %v2125 = vcombine.high %v2107, 0.0
  %v2126 = vcombine.high %v2116, 0.0
  %v2127 = vcombine.high %v2123, 0.0
  %v2128 = vcombine.low %v2036, %v2046
  %v2129 = vcombine.high %v2036, %v2046
  %v2131 = vunpack.c.l.s4 1983009808
  %v2132 = vunpack.c.0.s8 %v2131
  %v2133 = vlaneseq
  %v2134 = vshrl.u32 %v2133, 7
  %v2135 = vsub.s32 %v2132, %v2134
  %v2136 = vrot.slane %v2128, %v2135
  %v2138 = vunpack.c.l.s4 1983009808
  %v2139 = vunpack.c.0.s8 %v2138
  %v2140 = vlaneseq
  %v2141 = vshrl.u32 %v2140, 7
  %v2142 = vsub.s32 %v2139, %v2141
  %v2143 = vrot.slane %v2129, %v2142
  %v2144 = vcombine.low %v2041, %v2051
  %v2145 = vcombine.high %v2041, %v2051
  %v2147 = vunpack.c.l.s4 1983009808
  %v2148 = vunpack.c.0.s8 %v2147
  %v2149 = vlaneseq
  %v2150 = vshrl.u32 %v2149, 7
  %v2151 = vsub.s32 %v2148, %v2150
  %v2152 = vrot.slane %v2144, %v2151
  %v2154 = vunpack.c.l.s4 1983009808
  %v2155 = vunpack.c.0.s8 %v2154
  %v2156 = vlaneseq
  %v2157 = vshrl.u32 %v2156, 7
  %v2158 = vsub.s32 %v2155, %v2157
  %v2159 = vrot.slane %v2145, %v2158
  %v2160 = vcombine.low %v2136, %v2152
  %v2161 = vcombine.high %v2136, %v2152
  %v2163 = vunpack.c.l.s4 1934713408
  %v2164 = vunpack.c.0.s8 %v2163
  %v2165 = vlaneseq
  %v2166 = vshrl.u32 %v2165, 7
  %v2167 = vsub.s32 %v2164, %v2166
  %v2168 = vrot.slane %v2160, %v2167
  %v2170 = vunpack.c.l.s4 1934713408
  %v2171 = vunpack.c.0.s8 %v2170
  %v2172 = vlaneseq
  %v2173 = vshrl.u32 %v2172, 7
  %v2174 = vsub.s32 %v2171, %v2173
  %v2175 = vrot.slane %v2161, %v2174
  %v2176 = vcombine.low %v2143, %v2159
  %v2177 = vcombine.high %v2143, %v2159
  %v2179 = vunpack.c.l.s4 1934713408
  %v2180 = vunpack.c.0.s8 %v2179
  %v2181 = vlaneseq
  %v2182 = vshrl.u32 %v2181, 7
  %v2183 = vsub.s32 %v2180, %v2182
  %v2184 = vrot.slane %v2176, %v2183
  %v2186 = vunpack.c.l.s4 1934713408
  %v2187 = vunpack.c.0.s8 %v2186
  %v2188 = vlaneseq
  %v2189 = vshrl.u32 %v2188, 7
  %v2190 = vsub.s32 %v2187, %v2189
  %v2191 = vrot.slane %v2177, %v2190
  %v2192 = vcombine.high %v2168, 0.0
  %v2193 = vcombine.high %v2175, 0.0
  %v2194 = vcombine.high %v2184, 0.0
  %v2195 = vcombine.high %v2191, 0.0
  %2197 = vrot.lane.b32.xlu0 %v2124, 16
  %v2198 = vpop.permute.xlu0 %2197
  %2201 = vrot.lane.b32.xlu0 %v2107, 32
  %v2202 = vpop.permute.xlu0 %2201
  %2205 = vrot.lane.b32.xlu0 %v2125, 48
  %v2206 = vpop.permute.xlu0 %2205
  %2209 = vrot.lane.b32.xlu0 %v2116, 64
  %v2210 = vpop.permute.xlu0 %2209
  %2213 = vrot.lane.b32.xlu0 %v2126, 80
  %v2214 = vpop.permute.xlu0 %2213
  %2217 = vrot.lane.b32.xlu0 %v2123, 96
  %v2218 = vpop.permute.xlu0 %2217
  %2221 = vrot.lane.b32.xlu0 %v2127, 112
  %v2222 = vpop.permute.xlu0 %2221
  %2225 = vrot.lane.b32.xlu0 %v2192, 16
  %v2226 = vpop.permute.xlu0 %2225
  %2229 = vrot.lane.b32.xlu0 %v2175, 32
  %v2230 = vpop.permute.xlu0 %2229
  %2233 = vrot.lane.b32.xlu0 %v2193, 48
  %v2234 = vpop.permute.xlu0 %2233
  %2237 = vrot.lane.b32.xlu0 %v2184, 64
  %v2238 = vpop.permute.xlu0 %2237
  %2241 = vrot.lane.b32.xlu0 %v2194, 80
  %v2242 = vpop.permute.xlu0 %2241
  %2245 = vrot.lane.b32.xlu0 %v2191, 96
  %v2246 = vpop.permute.xlu0 %2245
  %2249 = vrot.lane.b32.xlu0 %v2195, 112
  %v2250 = vpop.permute.xlu0 %2249
  %v2252 = vsel %vm342, %v2100, %v2198
  %v2253 = vsel %vm344, %v2252, %v2202
  %v2254 = vsel %vm346, %v2253, %v2206
  %v2255 = vsel %vm348, %v2254, %v2210
  %v2256 = vsel %vm350, %v2255, %v2214
  %v2257 = vsel %vm352, %v2256, %v2218
  %v2258 = vsel %vm354, %v2257, %v2222
  %v2259 = vsel %vm342, %v2168, %v2226
  %v2260 = vsel %vm344, %v2259, %v2230
  %v2261 = vsel %vm346, %v2260, %v2234
  %v2262 = vsel %vm348, %v2261, %v2238
  %v2263 = vsel %vm350, %v2262, %v2242
  %v2264 = vsel %vm352, %v2263, %v2246
  %v2265 = vsel %vm354, %v2264, %v2250
  %s2266 = scalar_lea.vmem %s1, 48
  %v2267 = vld [vmem:[%s2266] sm:$0xff]
  %v2269 = vsel %vm604, %v2267, 0
  %v2272 = vsel %vm608, %v2258, 0
  %v2275 = vsel %vm608, %v2265, 0
  %2277 = vmatprep.subr.mxu0 %v2275
  %2278 = vmatpush1.msra.mxu0 %v2272
  %2279 = vmatprep.subr.mxu0 0.0
  %2280 = vmatpush1.msra.mxu0 0.0
  %2281 = vmatprep.subr.mxu0 0.0
  %2282 = vmatpush1.msra.mxu0 0.0
  %2283 = vmatprep.subr.mxu0 0.0
  %2284 = vmatpush1.msra.mxu0 0.0
  %2285 = vmatprep.subr.mxu0 0.0
  %2286 = vmatpush1.msra.mxu0 0.0
  %2287 = vmatprep.subr.mxu0 0.0
  %2288 = vmatpush1.msra.mxu0 0.0
  %2289 = vmatprep.subr.mxu0 0.0
  %2290 = vmatpush1.msra.mxu0 0.0
  %2291 = vmatprep.subr.mxu0 0.0
  %2292 = vmatpush1.msra.mxu0 0.0
  %2293 = vmatprep.subr.mxu0 0.0
  %2294 = vmatpush1.msra.mxu0 0.0
  %2295 = vmatprep.subr.mxu0 0.0
  %2296 = vmatpush1.msra.mxu0 0.0
  %2297 = vmatprep.subr.mxu0 0.0
  %2298 = vmatpush1.msra.mxu0 0.0
  %2299 = vmatprep.subr.mxu0 0.0
  %2300 = vmatpush1.msra.mxu0 0.0
  %2301 = vmatprep.subr.mxu0 0.0
  %2302 = vmatpush1.msra.mxu0 0.0
  %2303 = vmatprep.subr.mxu0 0.0
  %2304 = vmatpush1.msra.mxu0 0.0
  %2305 = vmatprep.subr.mxu0 0.0
  %2306 = vmatpush1.msra.mxu0 0.0
  %2307 = vmatprep.subr.mxu0 0.0
  %2308 = vmatpush1.msra.mxu0 0.0
  %2309 = vmatprep.subr.mxu0 0.0
  %2310 = vmatpush1.msra.mxu0 0.0
  %2311 = vmatprep.subr.mxu0 0.0
  %2312 = vmatpush1.msra.mxu0 0.0
  %2313 = vmatprep.subr.mxu0 0.0
  %2314 = vmatpush1.msra.mxu0 0.0
  %2315 = vmatprep.subr.mxu0 0.0
  %2316 = vmatpush1.msra.mxu0 0.0
  %2317 = vmatprep.subr.mxu0 0.0
  %2318 = vmatpush1.msra.mxu0 0.0
  %2319 = vmatprep.subr.mxu0 0.0
  %2320 = vmatpush1.msra.mxu0 0.0
  %2321 = vmatprep.subr.mxu0 0.0
  %2322 = vmatpush1.msra.mxu0 0.0
  %2323 = vmatprep.subr.mxu0 0.0
  %2324 = vmatpush1.msra.mxu0 0.0
  %2325 = vmatprep.subr.mxu0 0.0
  %2326 = vmatpush1.msra.mxu0 0.0
  %2327 = vmatprep.subr.mxu0 0.0
  %2328 = vmatpush1.msra.mxu0 0.0
  %2329 = vmatprep.subr.mxu0 0.0
  %2330 = vmatpush1.msra.mxu0 0.0
  %2331 = vmatprep.subr.mxu0 0.0
  %2332 = vmatpush1.msra.mxu0 0.0
  %2333 = vmatprep.subr.mxu0 0.0
  %2334 = vmatpush1.msra.mxu0 0.0
  %2335 = vmatprep.subr.mxu0 0.0
  %2336 = vmatpush1.msra.mxu0 0.0
  %2337 = vmatprep.subr.mxu0 0.0
  %2338 = vmatpush1.msra.mxu0 0.0
  %2339 = vmatprep.subr.mxu0 0.0
  %2340 = vmatpush1.msra.mxu0 0.0
  %2341 = vmatprep.mubr.f32.mxu0 0.0
  %2342 = vmatmul.mubr.f32.gmra.mrb[0].mxu0 %v2269
  %v2343 = vpop.f32.mrb[0].mxu0
  %v2344 = vadd.f32 0.0, %v2343
  %v2345 = vpop.f32.mrb[0].mxu0
  %v2346 = vadd.f32 0.0, %v2345
  %2347 = vdwg.mxu0
  %v2348 = vadd.f32 %v2029, %v2344
  %v2349 = vadd.f32 %v2030, %v2346
  %2350 = vrot.lane.b32.xlu0 %v2034, 127
  %v2351 = vpop.permute.xlu0 %2350
  %2352 = vrot.lane.b32.xlu0 %v2036, 127
  %v2353 = vpop.permute.xlu0 %2352
  %2354 = vrot.lane.b32.xlu0 %v2039, 127
  %v2355 = vpop.permute.xlu0 %2354
  %2356 = vrot.lane.b32.xlu0 %v2041, 127
  %v2357 = vpop.permute.xlu0 %2356
  %2358 = vrot.lane.b32.xlu0 %v2044, 127
  %v2359 = vpop.permute.xlu0 %2358
  %2360 = vrot.lane.b32.xlu0 %v2046, 127
  %v2361 = vpop.permute.xlu0 %2360
  %2362 = vrot.lane.b32.xlu0 %v2049, 127
  %v2363 = vpop.permute.xlu0 %2362
  %2364 = vrot.lane.b32.xlu0 %v2051, 127
  %v2365 = vpop.permute.xlu0 %2364
  %v2374 = vcombine.low %v2351, %v2359
  %v2375 = vcombine.high %v2351, %v2359
  %v2377 = vunpack.c.l.s4 1983009808
  %v2378 = vunpack.c.0.s8 %v2377
  %v2379 = vlaneseq
  %v2380 = vshrl.u32 %v2379, 7
  %v2381 = vsub.s32 %v2378, %v2380
  %v2382 = vrot.slane %v2374, %v2381
  %v2384 = vunpack.c.l.s4 1983009808
  %v2385 = vunpack.c.0.s8 %v2384
  %v2386 = vlaneseq
  %v2387 = vshrl.u32 %v2386, 7
  %v2388 = vsub.s32 %v2385, %v2387
  %v2389 = vrot.slane %v2375, %v2388
  %v2390 = vcombine.low %v2355, %v2363
  %v2391 = vcombine.high %v2355, %v2363
  %v2393 = vunpack.c.l.s4 1983009808
  %v2394 = vunpack.c.0.s8 %v2393
  %v2395 = vlaneseq
  %v2396 = vshrl.u32 %v2395, 7
  %v2397 = vsub.s32 %v2394, %v2396
  %v2398 = vrot.slane %v2390, %v2397
  %v2400 = vunpack.c.l.s4 1983009808
  %v2401 = vunpack.c.0.s8 %v2400
  %v2402 = vlaneseq
  %v2403 = vshrl.u32 %v2402, 7
  %v2404 = vsub.s32 %v2401, %v2403
  %v2405 = vrot.slane %v2391, %v2404
  %v2406 = vcombine.low %v2382, %v2398
  %v2407 = vcombine.high %v2382, %v2398
  %v2409 = vunpack.c.l.s4 1934713408
  %v2410 = vunpack.c.0.s8 %v2409
  %v2411 = vlaneseq
  %v2412 = vshrl.u32 %v2411, 7
  %v2413 = vsub.s32 %v2410, %v2412
  %v2414 = vrot.slane %v2406, %v2413
  %v2416 = vunpack.c.l.s4 1934713408
  %v2417 = vunpack.c.0.s8 %v2416
  %v2418 = vlaneseq
  %v2419 = vshrl.u32 %v2418, 7
  %v2420 = vsub.s32 %v2417, %v2419
  %v2421 = vrot.slane %v2407, %v2420
  %v2422 = vcombine.low %v2389, %v2405
  %v2423 = vcombine.high %v2389, %v2405
  %v2425 = vunpack.c.l.s4 1934713408
  %v2426 = vunpack.c.0.s8 %v2425
  %v2427 = vlaneseq
  %v2428 = vshrl.u32 %v2427, 7
  %v2429 = vsub.s32 %v2426, %v2428
  %v2430 = vrot.slane %v2422, %v2429
  %v2432 = vunpack.c.l.s4 1934713408
  %v2433 = vunpack.c.0.s8 %v2432
  %v2434 = vlaneseq
  %v2435 = vshrl.u32 %v2434, 7
  %v2436 = vsub.s32 %v2433, %v2435
  %v2437 = vrot.slane %v2423, %v2436
  %v2438 = vcombine.high %v2414, 0.0
  %v2439 = vcombine.high %v2421, 0.0
  %v2440 = vcombine.high %v2430, 0.0
  %v2441 = vcombine.high %v2437, 0.0
  %v2442 = vcombine.low %v2353, %v2361
  %v2443 = vcombine.high %v2353, %v2361
  %v2445 = vunpack.c.l.s4 1983009808
  %v2446 = vunpack.c.0.s8 %v2445
  %v2447 = vlaneseq
  %v2448 = vshrl.u32 %v2447, 7
  %v2449 = vsub.s32 %v2446, %v2448
  %v2450 = vrot.slane %v2442, %v2449
  %v2452 = vunpack.c.l.s4 1983009808
  %v2453 = vunpack.c.0.s8 %v2452
  %v2454 = vlaneseq
  %v2455 = vshrl.u32 %v2454, 7
  %v2456 = vsub.s32 %v2453, %v2455
  %v2457 = vrot.slane %v2443, %v2456
  %v2458 = vcombine.low %v2357, %v2365
  %v2459 = vcombine.high %v2357, %v2365
  %v2461 = vunpack.c.l.s4 1983009808
  %v2462 = vunpack.c.0.s8 %v2461
  %v2463 = vlaneseq
  %v2464 = vshrl.u32 %v2463, 7
  %v2465 = vsub.s32 %v2462, %v2464
  %v2466 = vrot.slane %v2458, %v2465
  %v2468 = vunpack.c.l.s4 1983009808
  %v2469 = vunpack.c.0.s8 %v2468
  %v2470 = vlaneseq
  %v2471 = vshrl.u32 %v2470, 7
  %v2472 = vsub.s32 %v2469, %v2471
  %v2473 = vrot.slane %v2459, %v2472
  %v2474 = vcombine.low %v2450, %v2466
  %v2475 = vcombine.high %v2450, %v2466
  %v2477 = vunpack.c.l.s4 1934713408
  %v2478 = vunpack.c.0.s8 %v2477
  %v2479 = vlaneseq
  %v2480 = vshrl.u32 %v2479, 7
  %v2481 = vsub.s32 %v2478, %v2480
  %v2482 = vrot.slane %v2474, %v2481
  %v2484 = vunpack.c.l.s4 1934713408
  %v2485 = vunpack.c.0.s8 %v2484
  %v2486 = vlaneseq
  %v2487 = vshrl.u32 %v2486, 7
  %v2488 = vsub.s32 %v2485, %v2487
  %v2489 = vrot.slane %v2475, %v2488
  %v2490 = vcombine.low %v2457, %v2473
  %v2491 = vcombine.high %v2457, %v2473
  %v2493 = vunpack.c.l.s4 1934713408
  %v2494 = vunpack.c.0.s8 %v2493
  %v2495 = vlaneseq
  %v2496 = vshrl.u32 %v2495, 7
  %v2497 = vsub.s32 %v2494, %v2496
  %v2498 = vrot.slane %v2490, %v2497
  %v2500 = vunpack.c.l.s4 1934713408
  %v2501 = vunpack.c.0.s8 %v2500
  %v2502 = vlaneseq
  %v2503 = vshrl.u32 %v2502, 7
  %v2504 = vsub.s32 %v2501, %v2503
  %v2505 = vrot.slane %v2491, %v2504
  %v2506 = vcombine.high %v2482, 0.0
  %v2507 = vcombine.high %v2489, 0.0
  %v2508 = vcombine.high %v2498, 0.0
  %v2509 = vcombine.high %v2505, 0.0
  %2511 = vrot.lane.b32.xlu0 %v2438, 16
  %v2512 = vpop.permute.xlu0 %2511
  %2515 = vrot.lane.b32.xlu0 %v2421, 32
  %v2516 = vpop.permute.xlu0 %2515
  %2519 = vrot.lane.b32.xlu0 %v2439, 48
  %v2520 = vpop.permute.xlu0 %2519
  %2523 = vrot.lane.b32.xlu0 %v2430, 64
  %v2524 = vpop.permute.xlu0 %2523
  %2527 = vrot.lane.b32.xlu0 %v2440, 80
  %v2528 = vpop.permute.xlu0 %2527
  %2531 = vrot.lane.b32.xlu0 %v2437, 96
  %v2532 = vpop.permute.xlu0 %2531
  %2535 = vrot.lane.b32.xlu0 %v2441, 112
  %v2536 = vpop.permute.xlu0 %2535
  %2539 = vrot.lane.b32.xlu0 %v2506, 16
  %v2540 = vpop.permute.xlu0 %2539
  %2543 = vrot.lane.b32.xlu0 %v2489, 32
  %v2544 = vpop.permute.xlu0 %2543
  %2547 = vrot.lane.b32.xlu0 %v2507, 48
  %v2548 = vpop.permute.xlu0 %2547
  %2551 = vrot.lane.b32.xlu0 %v2498, 64
  %v2552 = vpop.permute.xlu0 %2551
  %2555 = vrot.lane.b32.xlu0 %v2508, 80
  %v2556 = vpop.permute.xlu0 %2555
  %2559 = vrot.lane.b32.xlu0 %v2505, 96
  %v2560 = vpop.permute.xlu0 %2559
  %2563 = vrot.lane.b32.xlu0 %v2509, 112
  %v2564 = vpop.permute.xlu0 %2563
  %v2566 = vsel %vm342, %v2414, %v2512
  %v2567 = vsel %vm344, %v2566, %v2516
  %v2568 = vsel %vm346, %v2567, %v2520
  %v2569 = vsel %vm348, %v2568, %v2524
  %v2570 = vsel %vm350, %v2569, %v2528
  %v2571 = vsel %vm352, %v2570, %v2532
  %v2572 = vsel %vm354, %v2571, %v2536
  %v2573 = vsel %vm342, %v2482, %v2540
  %v2574 = vsel %vm344, %v2573, %v2544
  %v2575 = vsel %vm346, %v2574, %v2548
  %v2576 = vsel %vm348, %v2575, %v2552
  %v2577 = vsel %vm350, %v2576, %v2556
  %v2578 = vsel %vm352, %v2577, %v2560
  %v2579 = vsel %vm354, %v2578, %v2564
  %s2580 = scalar_lea.vmem %s1, 56
  %v2581 = vld [vmem:[%s2580] sm:$0xff]
  %v2583 = vsel %vm604, %v2581, 0
  %v2586 = vsel %vm608, %v2572, 0
  %v2589 = vsel %vm608, %v2579, 0
  %2591 = vmatprep.subr.mxu0 %v2589
  %2592 = vmatpush1.msra.mxu0 %v2586
  %2593 = vmatprep.subr.mxu0 0.0
  %2594 = vmatpush1.msra.mxu0 0.0
  %2595 = vmatprep.subr.mxu0 0.0
  %2596 = vmatpush1.msra.mxu0 0.0
  %2597 = vmatprep.subr.mxu0 0.0
  %2598 = vmatpush1.msra.mxu0 0.0
  %2599 = vmatprep.subr.mxu0 0.0
  %2600 = vmatpush1.msra.mxu0 0.0
  %2601 = vmatprep.subr.mxu0 0.0
  %2602 = vmatpush1.msra.mxu0 0.0
  %2603 = vmatprep.subr.mxu0 0.0
  %2604 = vmatpush1.msra.mxu0 0.0
  %2605 = vmatprep.subr.mxu0 0.0
  %2606 = vmatpush1.msra.mxu0 0.0
  %2607 = vmatprep.subr.mxu0 0.0
  %2608 = vmatpush1.msra.mxu0 0.0
  %2609 = vmatprep.subr.mxu0 0.0
  %2610 = vmatpush1.msra.mxu0 0.0
  %2611 = vmatprep.subr.mxu0 0.0
  %2612 = vmatpush1.msra.mxu0 0.0
  %2613 = vmatprep.subr.mxu0 0.0
  %2614 = vmatpush1.msra.mxu0 0.0
  %2615 = vmatprep.subr.mxu0 0.0
  %2616 = vmatpush1.msra.mxu0 0.0
  %2617 = vmatprep.subr.mxu0 0.0
  %2618 = vmatpush1.msra.mxu0 0.0
  %2619 = vmatprep.subr.mxu0 0.0
  %2620 = vmatpush1.msra.mxu0 0.0
  %2621 = vmatprep.subr.mxu0 0.0
  %2622 = vmatpush1.msra.mxu0 0.0
  %2623 = vmatprep.subr.mxu0 0.0
  %2624 = vmatpush1.msra.mxu0 0.0
  %2625 = vmatprep.subr.mxu0 0.0
  %2626 = vmatpush1.msra.mxu0 0.0
  %2627 = vmatprep.subr.mxu0 0.0
  %2628 = vmatpush1.msra.mxu0 0.0
  %2629 = vmatprep.subr.mxu0 0.0
  %2630 = vmatpush1.msra.mxu0 0.0
  %2631 = vmatprep.subr.mxu0 0.0
  %2632 = vmatpush1.msra.mxu0 0.0
  %2633 = vmatprep.subr.mxu0 0.0
  %2634 = vmatpush1.msra.mxu0 0.0
  %2635 = vmatprep.subr.mxu0 0.0
  %2636 = vmatpush1.msra.mxu0 0.0
  %2637 = vmatprep.subr.mxu0 0.0
  %2638 = vmatpush1.msra.mxu0 0.0
  %2639 = vmatprep.subr.mxu0 0.0
  %2640 = vmatpush1.msra.mxu0 0.0
  %2641 = vmatprep.subr.mxu0 0.0
  %2642 = vmatpush1.msra.mxu0 0.0
  %2643 = vmatprep.subr.mxu0 0.0
  %2644 = vmatpush1.msra.mxu0 0.0
  %2645 = vmatprep.subr.mxu0 0.0
  %2646 = vmatpush1.msra.mxu0 0.0
  %2647 = vmatprep.subr.mxu0 0.0
  %2648 = vmatpush1.msra.mxu0 0.0
  %2649 = vmatprep.subr.mxu0 0.0
  %2650 = vmatpush1.msra.mxu0 0.0
  %2651 = vmatprep.subr.mxu0 0.0
  %2652 = vmatpush1.msra.mxu0 0.0
  %2653 = vmatprep.subr.mxu0 0.0
  %2654 = vmatpush1.msra.mxu0 0.0
  %2655 = vmatprep.mubr.f32.mxu0 0.0
  %2656 = vmatmul.mubr.f32.gmra.mrb[0].mxu0 %v2583
  %v2657 = vpop.f32.mrb[0].mxu0
  %v2658 = vadd.f32 0.0, %v2657
  %v2659 = vpop.f32.mrb[0].mxu0
  %v2660 = vadd.f32 0.0, %v2659
  %2661 = vdwg.mxu0
  %v2662 = vadd.f32 %v2348, %v2658
  %v2663 = vadd.f32 %v2349, %v2660
  %2664 = vrot.lane.b32.xlu0 %v2034, 126
  %v2665 = vpop.permute.xlu0 %2664
  %2666 = vrot.lane.b32.xlu0 %v2036, 126
  %v2667 = vpop.permute.xlu0 %2666
  %2668 = vrot.lane.b32.xlu0 %v2039, 126
  %v2669 = vpop.permute.xlu0 %2668
  %2670 = vrot.lane.b32.xlu0 %v2041, 126
  %v2671 = vpop.permute.xlu0 %2670
  %2672 = vrot.lane.b32.xlu0 %v2044, 126
  %v2673 = vpop.permute.xlu0 %2672
  %2674 = vrot.lane.b32.xlu0 %v2046, 126
  %v2675 = vpop.permute.xlu0 %2674
  %2676 = vrot.lane.b32.xlu0 %v2049, 126
  %v2677 = vpop.permute.xlu0 %2676
  %2678 = vrot.lane.b32.xlu0 %v2051, 126
  %v2679 = vpop.permute.xlu0 %2678
  %v2688 = vcombine.low %v2665, %v2673
  %v2689 = vcombine.high %v2665, %v2673
  %v2691 = vunpack.c.l.s4 1983009808
  %v2692 = vunpack.c.0.s8 %v2691
  %v2693 = vlaneseq
  %v2694 = vshrl.u32 %v2693, 7
  %v2695 = vsub.s32 %v2692, %v2694
  %v2696 = vrot.slane %v2688, %v2695
  %v2698 = vunpack.c.l.s4 1983009808
  %v2699 = vunpack.c.0.s8 %v2698
  %v2700 = vlaneseq
  %v2701 = vshrl.u32 %v2700, 7
  %v2702 = vsub.s32 %v2699, %v2701
  %v2703 = vrot.slane %v2689, %v2702
  %v2704 = vcombine.low %v2669, %v2677
  %v2705 = vcombine.high %v2669, %v2677
  %v2707 = vunpack.c.l.s4 1983009808
  %v2708 = vunpack.c.0.s8 %v2707
  %v2709 = vlaneseq
  %v2710 = vshrl.u32 %v2709, 7
  %v2711 = vsub.s32 %v2708, %v2710
  %v2712 = vrot.slane %v2704, %v2711
  %v2714 = vunpack.c.l.s4 1983009808
  %v2715 = vunpack.c.0.s8 %v2714
  %v2716 = vlaneseq
  %v2717 = vshrl.u32 %v2716, 7
  %v2718 = vsub.s32 %v2715, %v2717
  %v2719 = vrot.slane %v2705, %v2718
  %v2720 = vcombine.low %v2696, %v2712
  %v2721 = vcombine.high %v2696, %v2712
  %v2723 = vunpack.c.l.s4 1934713408
  %v2724 = vunpack.c.0.s8 %v2723
  %v2725 = vlaneseq
  %v2726 = vshrl.u32 %v2725, 7
  %v2727 = vsub.s32 %v2724, %v2726
  %v2728 = vrot.slane %v2720, %v2727
  %v2730 = vunpack.c.l.s4 1934713408
  %v2731 = vunpack.c.0.s8 %v2730
  %v2732 = vlaneseq
  %v2733 = vshrl.u32 %v2732, 7
  %v2734 = vsub.s32 %v2731, %v2733
  %v2735 = vrot.slane %v2721, %v2734
  %v2736 = vcombine.low %v2703, %v2719
  %v2737 = vcombine.high %v2703, %v2719
  %v2739 = vunpack.c.l.s4 1934713408
  %v2740 = vunpack.c.0.s8 %v2739
  %v2741 = vlaneseq
  %v2742 = vshrl.u32 %v2741, 7
  %v2743 = vsub.s32 %v2740, %v2742
  %v2744 = vrot.slane %v2736, %v2743
  %v2746 = vunpack.c.l.s4 1934713408
  %v2747 = vunpack.c.0.s8 %v2746
  %v2748 = vlaneseq
  %v2749 = vshrl.u32 %v2748, 7
  %v2750 = vsub.s32 %v2747, %v2749
  %v2751 = vrot.slane %v2737, %v2750
  %v2752 = vcombine.high %v2728, 0.0
  %v2753 = vcombine.high %v2735, 0.0
  %v2754 = vcombine.high %v2744, 0.0
  %v2755 = vcombine.high %v2751, 0.0
  %v2756 = vcombine.low %v2667, %v2675
  %v2757 = vcombine.high %v2667, %v2675
  %v2759 = vunpack.c.l.s4 1983009808
  %v2760 = vunpack.c.0.s8 %v2759
  %v2761 = vlaneseq
  %v2762 = vshrl.u32 %v2761, 7
  %v2763 = vsub.s32 %v2760, %v2762
  %v2764 = vrot.slane %v2756, %v2763
  %v2766 = vunpack.c.l.s4 1983009808
  %v2767 = vunpack.c.0.s8 %v2766
  %v2768 = vlaneseq
  %v2769 = vshrl.u32 %v2768, 7
  %v2770 = vsub.s32 %v2767, %v2769
  %v2771 = vrot.slane %v2757, %v2770
  %v2772 = vcombine.low %v2671, %v2679
  %v2773 = vcombine.high %v2671, %v2679
  %v2775 = vunpack.c.l.s4 1983009808
  %v2776 = vunpack.c.0.s8 %v2775
  %v2777 = vlaneseq
  %v2778 = vshrl.u32 %v2777, 7
  %v2779 = vsub.s32 %v2776, %v2778
  %v2780 = vrot.slane %v2772, %v2779
  %v2782 = vunpack.c.l.s4 1983009808
  %v2783 = vunpack.c.0.s8 %v2782
  %v2784 = vlaneseq
  %v2785 = vshrl.u32 %v2784, 7
  %v2786 = vsub.s32 %v2783, %v2785
  %v2787 = vrot.slane %v2773, %v2786
  %v2788 = vcombine.low %v2764, %v2780
  %v2789 = vcombine.high %v2764, %v2780
  %v2791 = vunpack.c.l.s4 1934713408
  %v2792 = vunpack.c.0.s8 %v2791
  %v2793 = vlaneseq
  %v2794 = vshrl.u32 %v2793, 7
  %v2795 = vsub.s32 %v2792, %v2794
  %v2796 = vrot.slane %v2788, %v2795
  %v2798 = vunpack.c.l.s4 1934713408
  %v2799 = vunpack.c.0.s8 %v2798
  %v2800 = vlaneseq
  %v2801 = vshrl.u32 %v2800, 7
  %v2802 = vsub.s32 %v2799, %v2801
  %v2803 = vrot.slane %v2789, %v2802
  %v2804 = vcombine.low %v2771, %v2787
  %v2805 = vcombine.high %v2771, %v2787
  %v2807 = vunpack.c.l.s4 1934713408
  %v2808 = vunpack.c.0.s8 %v2807
  %v2809 = vlaneseq
  %v2810 = vshrl.u32 %v2809, 7
  %v2811 = vsub.s32 %v2808, %v2810
  %v2812 = vrot.slane %v2804, %v2811
  %v2814 = vunpack.c.l.s4 1934713408
  %v2815 = vunpack.c.0.s8 %v2814
  %v2816 = vlaneseq
  %v2817 = vshrl.u32 %v2816, 7
  %v2818 = vsub.s32 %v2815, %v2817
  %v2819 = vrot.slane %v2805, %v2818
  %v2820 = vcombine.high %v2796, 0.0
  %v2821 = vcombine.high %v2803, 0.0
  %v2822 = vcombine.high %v2812, 0.0
  %v2823 = vcombine.high %v2819, 0.0
  %2825 = vrot.lane.b32.xlu0 %v2752, 16
  %v2826 = vpop.permute.xlu0 %2825
  %2829 = vrot.lane.b32.xlu0 %v2735, 32
  %v2830 = vpop.permute.xlu0 %2829
  %2833 = vrot.lane.b32.xlu0 %v2753, 48
  %v2834 = vpop.permute.xlu0 %2833
  %2837 = vrot.lane.b32.xlu0 %v2744, 64
  %v2838 = vpop.permute.xlu0 %2837
  %2841 = vrot.lane.b32.xlu0 %v2754, 80
  %v2842 = vpop.permute.xlu0 %2841
  %2845 = vrot.lane.b32.xlu0 %v2751, 96
  %v2846 = vpop.permute.xlu0 %2845
  %2849 = vrot.lane.b32.xlu0 %v2755, 112
  %v2850 = vpop.permute.xlu0 %2849
  %2853 = vrot.lane.b32.xlu0 %v2820, 16
  %v2854 = vpop.permute.xlu0 %2853
  %2857 = vrot.lane.b32.xlu0 %v2803, 32
  %v2858 = vpop.permute.xlu0 %2857
  %2861 = vrot.lane.b32.xlu0 %v2821, 48
  %v2862 = vpop.permute.xlu0 %2861
  %2865 = vrot.lane.b32.xlu0 %v2812, 64
  %v2866 = vpop.permute.xlu0 %2865
  %2869 = vrot.lane.b32.xlu0 %v2822, 80
  %v2870 = vpop.permute.xlu0 %2869
  %2873 = vrot.lane.b32.xlu0 %v2819, 96
  %v2874 = vpop.permute.xlu0 %2873
  %2877 = vrot.lane.b32.xlu0 %v2823, 112
  %v2878 = vpop.permute.xlu0 %2877
  %v2880 = vsel %vm342, %v2728, %v2826
  %v2881 = vsel %vm344, %v2880, %v2830
  %v2882 = vsel %vm346, %v2881, %v2834
  %v2883 = vsel %vm348, %v2882, %v2838
  %v2884 = vsel %vm350, %v2883, %v2842
  %v2885 = vsel %vm352, %v2884, %v2846
  %v2886 = vsel %vm354, %v2885, %v2850
  %v2887 = vsel %vm342, %v2796, %v2854
  %v2888 = vsel %vm344, %v2887, %v2858
  %v2889 = vsel %vm346, %v2888, %v2862
  %v2890 = vsel %vm348, %v2889, %v2866
  %v2891 = vsel %vm350, %v2890, %v2870
  %v2892 = vsel %vm352, %v2891, %v2874
  %v2893 = vsel %vm354, %v2892, %v2878
  %s2894 = scalar_lea.vmem %s1, 64
  %v2895 = vld [vmem:[%s2894] sm:$0xff]
  %v2897 = vsel %vm604, %v2895, 0
  %v2900 = vsel %vm608, %v2886, 0
  %v2903 = vsel %vm608, %v2893, 0
  %2905 = vmatprep.subr.mxu0 %v2903
  %2906 = vmatpush1.msra.mxu0 %v2900
  %2907 = vmatprep.subr.mxu0 0.0
  %2908 = vmatpush1.msra.mxu0 0.0
  %2909 = vmatprep.subr.mxu0 0.0
  %2910 = vmatpush1.msra.mxu0 0.0
  %2911 = vmatprep.subr.mxu0 0.0
  %2912 = vmatpush1.msra.mxu0 0.0
  %2913 = vmatprep.subr.mxu0 0.0
  %2914 = vmatpush1.msra.mxu0 0.0
  %2915 = vmatprep.subr.mxu0 0.0
  %2916 = vmatpush1.msra.mxu0 0.0
  %2917 = vmatprep.subr.mxu0 0.0
  %2918 = vmatpush1.msra.mxu0 0.0
  %2919 = vmatprep.subr.mxu0 0.0
  %2920 = vmatpush1.msra.mxu0 0.0
  %2921 = vmatprep.subr.mxu0 0.0
  %2922 = vmatpush1.msra.mxu0 0.0
  %2923 = vmatprep.subr.mxu0 0.0
  %2924 = vmatpush1.msra.mxu0 0.0
  %2925 = vmatprep.subr.mxu0 0.0
  %2926 = vmatpush1.msra.mxu0 0.0
  %2927 = vmatprep.subr.mxu0 0.0
  %2928 = vmatpush1.msra.mxu0 0.0
  %2929 = vmatprep.subr.mxu0 0.0
  %2930 = vmatpush1.msra.mxu0 0.0
  %2931 = vmatprep.subr.mxu0 0.0
  %2932 = vmatpush1.msra.mxu0 0.0
  %2933 = vmatprep.subr.mxu0 0.0
  %2934 = vmatpush1.msra.mxu0 0.0
  %2935 = vmatprep.subr.mxu0 0.0
  %2936 = vmatpush1.msra.mxu0 0.0
  %2937 = vmatprep.subr.mxu0 0.0
  %2938 = vmatpush1.msra.mxu0 0.0
  %2939 = vmatprep.subr.mxu0 0.0
  %2940 = vmatpush1.msra.mxu0 0.0
  %2941 = vmatprep.subr.mxu0 0.0
  %2942 = vmatpush1.msra.mxu0 0.0
  %2943 = vmatprep.subr.mxu0 0.0
  %2944 = vmatpush1.msra.mxu0 0.0
  %2945 = vmatprep.subr.mxu0 0.0
  %2946 = vmatpush1.msra.mxu0 0.0
  %2947 = vmatprep.subr.mxu0 0.0
  %2948 = vmatpush1.msra.mxu0 0.0
  %2949 = vmatprep.subr.mxu0 0.0
  %2950 = vmatpush1.msra.mxu0 0.0
  %2951 = vmatprep.subr.mxu0 0.0
  %2952 = vmatpush1.msra.mxu0 0.0
  %2953 = vmatprep.subr.mxu0 0.0
  %2954 = vmatpush1.msra.mxu0 0.0
  %2955 = vmatprep.subr.mxu0 0.0
  %2956 = vmatpush1.msra.mxu0 0.0
  %2957 = vmatprep.subr.mxu0 0.0
  %2958 = vmatpush1.msra.mxu0 0.0
  %2959 = vmatprep.subr.mxu0 0.0
  %2960 = vmatpush1.msra.mxu0 0.0
  %2961 = vmatprep.subr.mxu0 0.0
  %2962 = vmatpush1.msra.mxu0 0.0
  %2963 = vmatprep.subr.mxu0 0.0
  %2964 = vmatpush1.msra.mxu0 0.0
  %2965 = vmatprep.subr.mxu0 0.0
  %2966 = vmatpush1.msra.mxu0 0.0
  %2967 = vmatprep.subr.mxu0 0.0
  %2968 = vmatpush1.msra.mxu0 0.0
  %2969 = vmatprep.mubr.f32.mxu0 0.0
  %2970 = vmatmul.mubr.f32.gmra.mrb[0].mxu0 %v2897
  %v2971 = vpop.f32.mrb[0].mxu0
  %v2972 = vadd.f32 0.0, %v2971
  %v2973 = vpop.f32.mrb[0].mxu0
  %v2974 = vadd.f32 0.0, %v2973
  %2975 = vdwg.mxu0
  %v2976 = vadd.f32 %v2662, %v2972
  %v2977 = vadd.f32 %v2663, %v2974
  %2979 = vset.pattern.permute.xlu0 0
  %2980 = vperm.xlu0 %2979, %v137
  %v2981 = vpop.permute.xlu0 %2980
  %v2983 = vadd.f32 %v2976, %v2981
  %v2984 = vadd.f32 %v2977, %v2981
  %2985 = vst [vmem:[%s3] sm:$0xff] %v2983
  %2986 = vst [vmem:[%s3 + $0x8] sm:$0xff] %v2984
  %s2987 = scalar_lea.vmem [#allocation2], 96
  %v2988 = vld [vmem:[%s2987] sm:$0xff]
  %v2989 = vld [vmem:[%s2987 + $0x8] sm:$0xff]
  %v2990 = vld [vmem:[%s2987 + $0x10] sm:$0x3]
  %v2991 = vld [vmem:[%s2987 + $0x18] sm:$0xff]
  %v2992 = vld [vmem:[%s2987 + $0x20] sm:$0xff]
  %v2993 = vld [vmem:[%s2987 + $0x28] sm:$0x3]
  %v2994 = vld [vmem:[%s2987 + $0x30] sm:$0xff]
  %v2995 = vld [vmem:[%s2987 + $0x38] sm:$0xff]
  %v2996 = vld [vmem:[%s2987 + $0x40] sm:$0x3]
  %v2997 = vld [vmem:[%s2987 + $0x48] sm:$0xff]
  %v2998 = vld [vmem:[%s2987 + $0x50] sm:$0xff]
  %v2999 = vld [vmem:[%s2987 + $0x58] sm:$0x3]
  %v3000 = vcombine.low %v2988, %v2994
  %v3001 = vcombine.high %v2988, %v2994
  %v3003 = vunpack.c.l.s4 1983009808
  %v3004 = vunpack.c.0.s8 %v3003
  %v3005 = vlaneseq
  %v3006 = vshrl.u32 %v3005, 7
  %v3007 = vsub.s32 %v3004, %v3006
  %v3008 = vrot.slane %v3000, %v3007
  %v3010 = vunpack.c.l.s4 1983009808
  %v3011 = vunpack.c.0.s8 %v3010
  %v3012 = vlaneseq
  %v3013 = vshrl.u32 %v3012, 7
  %v3014 = vsub.s32 %v3011, %v3013
  %v3015 = vrot.slane %v3001, %v3014
  %v3016 = vcombine.low %v2991, %v2997
  %v3017 = vcombine.high %v2991, %v2997
  %v3019 = vunpack.c.l.s4 1983009808
  %v3020 = vunpack.c.0.s8 %v3019
  %v3021 = vlaneseq
  %v3022 = vshrl.u32 %v3021, 7
  %v3023 = vsub.s32 %v3020, %v3022
  %v3024 = vrot.slane %v3016, %v3023
  %v3026 = vunpack.c.l.s4 1983009808
  %v3027 = vunpack.c.0.s8 %v3026
  %v3028 = vlaneseq
  %v3029 = vshrl.u32 %v3028, 7
  %v3030 = vsub.s32 %v3027, %v3029
  %v3031 = vrot.slane %v3017, %v3030
  %v3032 = vcombine.low %v3008, %v3024
  %v3033 = vcombine.high %v3008, %v3024
  %v3035 = vunpack.c.l.s4 1934713408
  %v3036 = vunpack.c.0.s8 %v3035
  %v3037 = vlaneseq
  %v3038 = vshrl.u32 %v3037, 7
  %v3039 = vsub.s32 %v3036, %v3038
  %v3040 = vrot.slane %v3032, %v3039
  %v3042 = vunpack.c.l.s4 1934713408
  %v3043 = vunpack.c.0.s8 %v3042
  %v3044 = vlaneseq
  %v3045 = vshrl.u32 %v3044, 7
  %v3046 = vsub.s32 %v3043, %v3045
  %v3047 = vrot.slane %v3033, %v3046
  %v3048 = vcombine.low %v3015, %v3031
  %v3049 = vcombine.high %v3015, %v3031
  %v3051 = vunpack.c.l.s4 1934713408
  %v3052 = vunpack.c.0.s8 %v3051
  %v3053 = vlaneseq
  %v3054 = vshrl.u32 %v3053, 7
  %v3055 = vsub.s32 %v3052, %v3054
  %v3056 = vrot.slane %v3048, %v3055
  %v3058 = vunpack.c.l.s4 1934713408
  %v3059 = vunpack.c.0.s8 %v3058
  %v3060 = vlaneseq
  %v3061 = vshrl.u32 %v3060, 7
  %v3062 = vsub.s32 %v3059, %v3061
  %v3063 = vrot.slane %v3049, %v3062
  %v3064 = vcombine.high %v3040, 0.0
  %v3065 = vcombine.high %v3047, 0.0
  %v3066 = vcombine.high %v3056, 0.0
  %v3067 = vcombine.high %v3063, 0.0
  %v3068 = vcombine.low %v2989, %v2995
  %v3069 = vcombine.high %v2989, %v2995
  %v3071 = vunpack.c.l.s4 1983009808
  %v3072 = vunpack.c.0.s8 %v3071
  %v3073 = vlaneseq
  %v3074 = vshrl.u32 %v3073, 7
  %v3075 = vsub.s32 %v3072, %v3074
  %v3076 = vrot.slane %v3068, %v3075
  %v3078 = vunpack.c.l.s4 1983009808
  %v3079 = vunpack.c.0.s8 %v3078
  %v3080 = vlaneseq
  %v3081 = vshrl.u32 %v3080, 7
  %v3082 = vsub.s32 %v3079, %v3081
  %v3083 = vrot.slane %v3069, %v3082
  %v3084 = vcombine.low %v2992, %v2998
  %v3085 = vcombine.high %v2992, %v2998
  %v3087 = vunpack.c.l.s4 1983009808
  %v3088 = vunpack.c.0.s8 %v3087
  %v3089 = vlaneseq
  %v3090 = vshrl.u32 %v3089, 7
  %v3091 = vsub.s32 %v3088, %v3090
  %v3092 = vrot.slane %v3084, %v3091
  %v3094 = vunpack.c.l.s4 1983009808
  %v3095 = vunpack.c.0.s8 %v3094
  %v3096 = vlaneseq
  %v3097 = vshrl.u32 %v3096, 7
  %v3098 = vsub.s32 %v3095, %v3097
  %v3099 = vrot.slane %v3085, %v3098
  %v3100 = vcombine.low %v3076, %v3092
  %v3101 = vcombine.high %v3076, %v3092
  %v3103 = vunpack.c.l.s4 1934713408
  %v3104 = vunpack.c.0.s8 %v3103
  %v3105 = vlaneseq
  %v3106 = vshrl.u32 %v3105, 7
  %v3107 = vsub.s32 %v3104, %v3106
  %v3108 = vrot.slane %v3100, %v3107
  %v3110 = vunpack.c.l.s4 1934713408
  %v3111 = vunpack.c.0.s8 %v3110
  %v3112 = vlaneseq
  %v3113 = vshrl.u32 %v3112, 7
  %v3114 = vsub.s32 %v3111, %v3113
  %v3115 = vrot.slane %v3101, %v3114
  %v3116 = vcombine.low %v3083, %v3099
  %v3117 = vcombine.high %v3083, %v3099
  %v3119 = vunpack.c.l.s4 1934713408
  %v3120 = vunpack.c.0.s8 %v3119
  %v3121 = vlaneseq
  %v3122 = vshrl.u32 %v3121, 7
  %v3123 = vsub.s32 %v3120, %v3122
  %v3124 = vrot.slane %v3116, %v3123
  %v3126 = vunpack.c.l.s4 1934713408
  %v3127 = vunpack.c.0.s8 %v3126
  %v3128 = vlaneseq
  %v3129 = vshrl.u32 %v3128, 7
  %v3130 = vsub.s32 %v3127, %v3129
  %v3131 = vrot.slane %v3117, %v3130
  %v3132 = vcombine.high %v3108, 0.0
  %v3133 = vcombine.high %v3115, 0.0
  %v3134 = vcombine.high %v3124, 0.0
  %v3135 = vcombine.high %v3131, 0.0
  %3137 = vrot.lane.b32.xlu0 %v3064, 16
  %v3138 = vpop.permute.xlu0 %3137
  %3141 = vrot.lane.b32.xlu0 %v3047, 32
  %v3142 = vpop.permute.xlu0 %3141
  %3145 = vrot.lane.b32.xlu0 %v3065, 48
  %v3146 = vpop.permute.xlu0 %3145
  %3149 = vrot.lane.b32.xlu0 %v3056, 64
  %v3150 = vpop.permute.xlu0 %3149
  %3153 = vrot.lane.b32.xlu0 %v3066, 80
  %v3154 = vpop.permute.xlu0 %3153
  %3157 = vrot.lane.b32.xlu0 %v3063, 96
  %v3158 = vpop.permute.xlu0 %3157
  %3161 = vrot.lane.b32.xlu0 %v3067, 112
  %v3162 = vpop.permute.xlu0 %3161
  %3165 = vrot.lane.b32.xlu0 %v3132, 16
  %v3166 = vpop.permute.xlu0 %3165
  %3169 = vrot.lane.b32.xlu0 %v3115, 32
  %v3170 = vpop.permute.xlu0 %3169
  %3173 = vrot.lane.b32.xlu0 %v3133, 48
  %v3174 = vpop.permute.xlu0 %3173
  %3177 = vrot.lane.b32.xlu0 %v3124, 64
  %v3178 = vpop.permute.xlu0 %3177
  %3181 = vrot.lane.b32.xlu0 %v3134, 80
  %v3182 = vpop.permute.xlu0 %3181
  %3185 = vrot.lane.b32.xlu0 %v3131, 96
  %v3186 = vpop.permute.xlu0 %3185
  %3189 = vrot.lane.b32.xlu0 %v3135, 112
  %v3190 = vpop.permute.xlu0 %3189
  %v3192 = vsel %vm342, %v3040, %v3138
  %v3193 = vsel %vm344, %v3192, %v3142
  %v3194 = vsel %vm346, %v3193, %v3146
  %v3195 = vsel %vm348, %v3194, %v3150
  %v3196 = vsel %vm350, %v3195, %v3154
  %v3197 = vsel %vm352, %v3196, %v3158
  %v3198 = vsel %vm354, %v3197, %v3162
  %v3199 = vsel %vm342, %v3108, %v3166
  %v3200 = vsel %vm344, %v3199, %v3170
  %v3201 = vsel %vm346, %v3200, %v3174
  %v3202 = vsel %vm348, %v3201, %v3178
  %v3203 = vsel %vm350, %v3202, %v3182
  %v3204 = vsel %vm352, %v3203, %v3186
  %v3205 = vsel %vm354, %v3204, %v3190
  %v3206 = vld [vmem:[%s1] sm:$0xff]
  %3215 = vrot.lane.b32.xlu0 %v2988, 127
  %v3216 = vpop.permute.xlu0 %3215
  %3217 = vrot.lane.b32.xlu0 %v2989, 127
  %v3218 = vpop.permute.xlu0 %3217
  %3219 = vrot.lane.b32.xlu0 %v2991, 127
  %v3220 = vpop.permute.xlu0 %3219
  %3221 = vrot.lane.b32.xlu0 %v2992, 127
  %v3222 = vpop.permute.xlu0 %3221
  %3223 = vrot.lane.b32.xlu0 %v2994, 127
  %v3224 = vpop.permute.xlu0 %3223
  %3225 = vrot.lane.b32.xlu0 %v2995, 127
  %v3226 = vpop.permute.xlu0 %3225
  %3227 = vrot.lane.b32.xlu0 %v2997, 127
  %v3228 = vpop.permute.xlu0 %3227
  %3229 = vrot.lane.b32.xlu0 %v2998, 127
  %v3230 = vpop.permute.xlu0 %3229
  %v3239 = vcombine.low %v3216, %v3224
  %v3240 = vcombine.high %v3216, %v3224
  %v3242 = vunpack.c.l.s4 1983009808
  %v3243 = vunpack.c.0.s8 %v3242
  %v3244 = vlaneseq
  %v3245 = vshrl.u32 %v3244, 7
  %v3246 = vsub.s32 %v3243, %v3245
  %v3247 = vrot.slane %v3239, %v3246
  %v3249 = vunpack.c.l.s4 1983009808
  %v3250 = vunpack.c.0.s8 %v3249
  %v3251 = vlaneseq
  %v3252 = vshrl.u32 %v3251, 7
  %v3253 = vsub.s32 %v3250, %v3252
  %v3254 = vrot.slane %v3240, %v3253
  %v3255 = vcombine.low %v3220, %v3228
  %v3256 = vcombine.high %v3220, %v3228
  %v3258 = vunpack.c.l.s4 1983009808
  %v3259 = vunpack.c.0.s8 %v3258
  %v3260 = vlaneseq
  %v3261 = vshrl.u32 %v3260, 7
  %v3262 = vsub.s32 %v3259, %v3261
  %v3263 = vrot.slane %v3255, %v3262
  %v3265 = vunpack.c.l.s4 1983009808
  %v3266 = vunpack.c.0.s8 %v3265
  %v3267 = vlaneseq
  %v3268 = vshrl.u32 %v3267, 7
  %v3269 = vsub.s32 %v3266, %v3268
  %v3270 = vrot.slane %v3256, %v3269
  %v3271 = vcombine.low %v3247, %v3263
  %v3272 = vcombine.high %v3247, %v3263
  %v3274 = vunpack.c.l.s4 1934713408
  %v3275 = vunpack.c.0.s8 %v3274
  %v3276 = vlaneseq
  %v3277 = vshrl.u32 %v3276, 7
  %v3278 = vsub.s32 %v3275, %v3277
  %v3279 = vrot.slane %v3271, %v3278
  %v3281 = vunpack.c.l.s4 1934713408
  %v3282 = vunpack.c.0.s8 %v3281
  %v3283 = vlaneseq
  %v3284 = vshrl.u32 %v3283, 7
  %v3285 = vsub.s32 %v3282, %v3284
  %v3286 = vrot.slane %v3272, %v3285
  %v3287 = vcombine.low %v3254, %v3270
  %v3288 = vcombine.high %v3254, %v3270
  %v3290 = vunpack.c.l.s4 1934713408
  %v3291 = vunpack.c.0.s8 %v3290
  %v3292 = vlaneseq
  %v3293 = vshrl.u32 %v3292, 7
  %v3294 = vsub.s32 %v3291, %v3293
  %v3295 = vrot.slane %v3287, %v3294
  %v3297 = vunpack.c.l.s4 1934713408
  %v3298 = vunpack.c.0.s8 %v3297
  %v3299 = vlaneseq
  %v3300 = vshrl.u32 %v3299, 7
  %v3301 = vsub.s32 %v3298, %v3300
  %v3302 = vrot.slane %v3288, %v3301
  %v3303 = vcombine.high %v3279, 0.0
  %v3304 = vcombine.high %v3286, 0.0
  %v3305 = vcombine.high %v3295, 0.0
  %v3306 = vcombine.high %v3302, 0.0
  %v3307 = vcombine.low %v3218, %v3226
  %v3308 = vcombine.high %v3218, %v3226
  %v3310 = vunpack.c.l.s4 1983009808
  %v3311 = vunpack.c.0.s8 %v3310
  %v3312 = vlaneseq
  %v3313 = vshrl.u32 %v3312, 7
  %v3314 = vsub.s32 %v3311, %v3313
  %v3315 = vrot.slane %v3307, %v3314
  %v3317 = vunpack.c.l.s4 1983009808
  %v3318 = vunpack.c.0.s8 %v3317
  %v3319 = vlaneseq
  %v3320 = vshrl.u32 %v3319, 7
  %v3321 = vsub.s32 %v3318, %v3320
  %v3322 = vrot.slane %v3308, %v3321
  %v3323 = vcombine.low %v3222, %v3230
  %v3324 = vcombine.high %v3222, %v3230
  %v3326 = vunpack.c.l.s4 1983009808
  %v3327 = vunpack.c.0.s8 %v3326
  %v3328 = vlaneseq
  %v3329 = vshrl.u32 %v3328, 7
  %v3330 = vsub.s32 %v3327, %v3329
  %v3331 = vrot.slane %v3323, %v3330
  %v3333 = vunpack.c.l.s4 1983009808
  %v3334 = vunpack.c.0.s8 %v3333
  %v3335 = vlaneseq
  %v3336 = vshrl.u32 %v3335, 7
  %v3337 = vsub.s32 %v3334, %v3336
  %v3338 = vrot.slane %v3324, %v3337
  %v3339 = vcombine.low %v3315, %v3331
  %v3340 = vcombine.high %v3315, %v3331
  %v3342 = vunpack.c.l.s4 1934713408
  %v3343 = vunpack.c.0.s8 %v3342
  %v3344 = vlaneseq
  %v3345 = vshrl.u32 %v3344, 7
  %v3346 = vsub.s32 %v3343, %v3345
  %v3347 = vrot.slane %v3339, %v3346
  %v3349 = vunpack.c.l.s4 1934713408
  %v3350 = vunpack.c.0.s8 %v3349
  %v3351 = vlaneseq
  %v3352 = vshrl.u32 %v3351, 7
  %v3353 = vsub.s32 %v3350, %v3352
  %v3354 = vrot.slane %v3340, %v3353
  %v3355 = vcombine.low %v3322, %v3338
  %v3356 = vcombine.high %v3322, %v3338
  %v3358 = vunpack.c.l.s4 1934713408
  %v3359 = vunpack.c.0.s8 %v3358
  %v3360 = vlaneseq
  %v3361 = vshrl.u32 %v3360, 7
  %v3362 = vsub.s32 %v3359, %v3361
  %v3363 = vrot.slane %v3355, %v3362
  %v3365 = vunpack.c.l.s4 1934713408
  %v3366 = vunpack.c.0.s8 %v3365
  %v3367 = vlaneseq
  %v3368 = vshrl.u32 %v3367, 7
  %v3369 = vsub.s32 %v3366, %v3368
  %v3370 = vrot.slane %v3356, %v3369
  %v3371 = vcombine.high %v3347, 0.0
  %v3372 = vcombine.high %v3354, 0.0
  %v3373 = vcombine.high %v3363, 0.0
  %v3374 = vcombine.high %v3370, 0.0
  %3376 = vrot.lane.b32.xlu0 %v3303, 16
  %v3377 = vpop.permute.xlu0 %3376
  %3380 = vrot.lane.b32.xlu0 %v3286, 32
  %v3381 = vpop.permute.xlu0 %3380
  %3384 = vrot.lane.b32.xlu0 %v3304, 48
  %v3385 = vpop.permute.xlu0 %3384
  %3388 = vrot.lane.b32.xlu0 %v3295, 64
  %v3389 = vpop.permute.xlu0 %3388
  %3392 = vrot.lane.b32.xlu0 %v3305, 80
  %v3393 = vpop.permute.xlu0 %3392
  %3396 = vrot.lane.b32.xlu0 %v3302, 96
  %v3397 = vpop.permute.xlu0 %3396
  %3400 = vrot.lane.b32.xlu0 %v3306, 112
  %v3401 = vpop.permute.xlu0 %3400
  %3404 = vrot.lane.b32.xlu0 %v3371, 16
  %v3405 = vpop.permute.xlu0 %3404
  %3408 = vrot.lane.b32.xlu0 %v3354, 32
  %v3409 = vpop.permute.xlu0 %3408
  %3412 = vrot.lane.b32.xlu0 %v3372, 48
  %v3413 = vpop.permute.xlu0 %3412
  %3416 = vrot.lane.b32.xlu0 %v3363, 64
  %v3417 = vpop.permute.xlu0 %3416
  %3420 = vrot.lane.b32.xlu0 %v3373, 80
  %v3421 = vpop.permute.xlu0 %3420
  %3424 = vrot.lane.b32.xlu0 %v3370, 96
  %v3425 = vpop.permute.xlu0 %3424
  %3428 = vrot.lane.b32.xlu0 %v3374, 112
  %v3429 = vpop.permute.xlu0 %3428
  %v3431 = vsel %vm342, %v3279, %v3377
  %v3432 = vsel %vm344, %v3431, %v3381
  %v3433 = vsel %vm346, %v3432, %v3385
  %v3434 = vsel %vm348, %v3433, %v3389
  %v3435 = vsel %vm350, %v3434, %v3393
  %v3436 = vsel %vm352, %v3435, %v3397
  %v3437 = vsel %vm354, %v3436, %v3401
  %v3438 = vsel %vm342, %v3347, %v3405
  %v3439 = vsel %vm344, %v3438, %v3409
  %v3440 = vsel %vm346, %v3439, %v3413
  %v3441 = vsel %vm348, %v3440, %v3417
  %v3442 = vsel %vm350, %v3441, %v3421
  %v3443 = vsel %vm352, %v3442, %v3425
  %v3444 = vsel %vm354, %v3443, %v3429
  %v3445 = vld [vmem:[%s602] sm:$0xff]
  %v3447 = vsel %vm604, %v3445, 0
  %v3450 = vsel %vm608, %v3437, 0
  %v3453 = vsel %vm608, %v3444, 0
  %3455 = vmatprep.subr.mxu0 %v3453
  %3456 = vmatpush1.msra.mxu0 %v3450
  %3457 = vmatprep.subr.mxu0 0.0
  %3458 = vmatpush1.msra.mxu0 0.0
  %3459 = vmatprep.subr.mxu0 0.0
  %3460 = vmatpush1.msra.mxu0 0.0
  %3461 = vmatprep.subr.mxu0 0.0
  %3462 = vmatpush1.msra.mxu0 0.0
  %3463 = vmatprep.subr.mxu0 0.0
  %3464 = vmatpush1.msra.mxu0 0.0
  %3465 = vmatprep.subr.mxu0 0.0
  %3466 = vmatpush1.msra.mxu0 0.0
  %3467 = vmatprep.subr.mxu0 0.0
  %3468 = vmatpush1.msra.mxu0 0.0
  %3469 = vmatprep.subr.mxu0 0.0
  %3470 = vmatpush1.msra.mxu0 0.0
  %3471 = vmatprep.subr.mxu0 0.0
  %3472 = vmatpush1.msra.mxu0 0.0
  %3473 = vmatprep.subr.mxu0 0.0
  %3474 = vmatpush1.msra.mxu0 0.0
  %3475 = vmatprep.subr.mxu0 0.0
  %3476 = vmatpush1.msra.mxu0 0.0
  %3477 = vmatprep.subr.mxu0 0.0
  %3478 = vmatpush1.msra.mxu0 0.0
  %3479 = vmatprep.subr.mxu0 0.0
  %3480 = vmatpush1.msra.mxu0 0.0
  %3481 = vmatprep.subr.mxu0 0.0
  %3482 = vmatpush1.msra.mxu0 0.0
  %3483 = vmatprep.subr.mxu0 0.0
  %3484 = vmatpush1.msra.mxu0 0.0
  %3485 = vmatprep.subr.mxu0 0.0
  %3486 = vmatpush1.msra.mxu0 0.0
  %3487 = vmatprep.subr.mxu0 0.0
  %3488 = vmatpush1.msra.mxu0 0.0
  %3489 = vmatprep.subr.mxu0 0.0
  %3490 = vmatpush1.msra.mxu0 0.0
  %3491 = vmatprep.subr.mxu0 0.0
  %3492 = vmatpush1.msra.mxu0 0.0
  %3493 = vmatprep.subr.mxu0 0.0
  %3494 = vmatpush1.msra.mxu0 0.0
  %3495 = vmatprep.subr.mxu0 0.0
  %3496 = vmatpush1.msra.mxu0 0.0
  %3497 = vmatprep.subr.mxu0 0.0
  %3498 = vmatpush1.msra.mxu0 0.0
  %3499 = vmatprep.subr.mxu0 0.0
  %3500 = vmatpush1.msra.mxu0 0.0
  %3501 = vmatprep.subr.mxu0 0.0
  %3502 = vmatpush1.msra.mxu0 0.0
  %3503 = vmatprep.subr.mxu0 0.0
  %3504 = vmatpush1.msra.mxu0 0.0
  %3505 = vmatprep.subr.mxu0 0.0
  %3506 = vmatpush1.msra.mxu0 0.0
  %3507 = vmatprep.subr.mxu0 0.0
  %3508 = vmatpush1.msra.mxu0 0.0
  %3509 = vmatprep.subr.mxu0 0.0
  %3510 = vmatpush1.msra.mxu0 0.0
  %3511 = vmatprep.subr.mxu0 0.0
  %3512 = vmatpush1.msra.mxu0 0.0
  %3513 = vmatprep.subr.mxu0 0.0
  %3514 = vmatpush1.msra.mxu0 0.0
  %3515 = vmatprep.subr.mxu0 0.0
  %3516 = vmatpush1.msra.mxu0 0.0
  %3517 = vmatprep.subr.mxu0 0.0
  %3518 = vmatpush1.msra.mxu0 0.0
  %3519 = vmatprep.mubr.f32.mxu0 0.0
  %3520 = vmatmul.mubr.f32.gmra.mrb[0].mxu0 %v3447
  %v3521 = vpop.f32.mrb[0].mxu0
  %v3522 = vadd.f32 0.0, %v3521
  %v3523 = vpop.f32.mrb[0].mxu0
  %v3524 = vadd.f32 0.0, %v3523
  %3525 = vdwg.mxu0
  %v3527 = vsel %vm604, %v3206, 0
  %v3530 = vsel %vm608, %v3198, 0
  %v3533 = vsel %vm608, %v3205, 0
  %3535 = vmatprep.subr.mxu0 %v3533
  %3536 = vmatpush1.msra.mxu0 %v3530
  %3537 = vmatprep.subr.mxu0 0.0
  %3538 = vmatpush1.msra.mxu0 0.0
  %3539 = vmatprep.subr.mxu0 0.0
  %3540 = vmatpush1.msra.mxu0 0.0
  %3541 = vmatprep.subr.mxu0 0.0
  %3542 = vmatpush1.msra.mxu0 0.0
  %3543 = vmatprep.subr.mxu0 0.0
  %3544 = vmatpush1.msra.mxu0 0.0
  %3545 = vmatprep.subr.mxu0 0.0
  %3546 = vmatpush1.msra.mxu0 0.0
  %3547 = vmatprep.subr.mxu0 0.0
  %3548 = vmatpush1.msra.mxu0 0.0
  %3549 = vmatprep.subr.mxu0 0.0
  %3550 = vmatpush1.msra.mxu0 0.0
  %3551 = vmatprep.subr.mxu0 0.0
  %3552 = vmatpush1.msra.mxu0 0.0
  %3553 = vmatprep.subr.mxu0 0.0
  %3554 = vmatpush1.msra.mxu0 0.0
  %3555 = vmatprep.subr.mxu0 0.0
  %3556 = vmatpush1.msra.mxu0 0.0
  %3557 = vmatprep.subr.mxu0 0.0
  %3558 = vmatpush1.msra.mxu0 0.0
  %3559 = vmatprep.subr.mxu0 0.0
  %3560 = vmatpush1.msra.mxu0 0.0
  %3561 = vmatprep.subr.mxu0 0.0
  %3562 = vmatpush1.msra.mxu0 0.0
  %3563 = vmatprep.subr.mxu0 0.0
  %3564 = vmatpush1.msra.mxu0 0.0
  %3565 = vmatprep.subr.mxu0 0.0
  %3566 = vmatpush1.msra.mxu0 0.0
  %3567 = vmatprep.subr.mxu0 0.0
  %3568 = vmatpush1.msra.mxu0 0.0
  %3569 = vmatprep.subr.mxu0 0.0
  %3570 = vmatpush1.msra.mxu0 0.0
  %3571 = vmatprep.subr.mxu0 0.0
  %3572 = vmatpush1.msra.mxu0 0.0
  %3573 = vmatprep.subr.mxu0 0.0
  %3574 = vmatpush1.msra.mxu0 0.0
  %3575 = vmatprep.subr.mxu0 0.0
  %3576 = vmatpush1.msra.mxu0 0.0
  %3577 = vmatprep.subr.mxu0 0.0
  %3578 = vmatpush1.msra.mxu0 0.0
  %3579 = vmatprep.subr.mxu0 0.0
  %3580 = vmatpush1.msra.mxu0 0.0
  %3581 = vmatprep.subr.mxu0 0.0
  %3582 = vmatpush1.msra.mxu0 0.0
  %3583 = vmatprep.subr.mxu0 0.0
  %3584 = vmatpush1.msra.mxu0 0.0
  %3585 = vmatprep.subr.mxu0 0.0
  %3586 = vmatpush1.msra.mxu0 0.0
  %3587 = vmatprep.subr.mxu0 0.0
  %3588 = vmatpush1.msra.mxu0 0.0
  %3589 = vmatprep.subr.mxu0 0.0
  %3590 = vmatpush1.msra.mxu0 0.0
  %3591 = vmatprep.subr.mxu0 0.0
  %3592 = vmatpush1.msra.mxu0 0.0
  %3593 = vmatprep.subr.mxu0 0.0
  %3594 = vmatpush1.msra.mxu0 0.0
  %3595 = vmatprep.subr.mxu0 0.0
  %3596 = vmatpush1.msra.mxu0 0.0
  %3597 = vmatprep.subr.mxu0 0.0
  %3598 = vmatpush1.msra.mxu0 0.0
  %3599 = vmatprep.mubr.f32.mxu0 0.0
  %3600 = vmatmul.mubr.f32.gmra.mrb[0].mxu0 %v3527
  %v3601 = vpop.f32.mrb[0].mxu0
  %v3602 = vadd.f32 %v3522, %v3601
  %v3603 = vpop.f32.mrb[0].mxu0
  %v3604 = vadd.f32 %v3524, %v3603
  %3605 = vdwg.mxu0
  %3606 = vrot.lane.b32.xlu0 %v2988, 126
  %v3607 = vpop.permute.xlu0 %3606
  %3608 = vrot.lane.b32.xlu0 %v2989, 126
  %v3609 = vpop.permute.xlu0 %3608
  %3610 = vrot.lane.b32.xlu0 %v2991, 126
  %v3611 = vpop.permute.xlu0 %3610
  %3612 = vrot.lane.b32.xlu0 %v2992, 126
  %v3613 = vpop.permute.xlu0 %3612
  %3614 = vrot.lane.b32.xlu0 %v2994, 126
  %v3615 = vpop.permute.xlu0 %3614
  %3616 = vrot.lane.b32.xlu0 %v2995, 126
  %v3617 = vpop.permute.xlu0 %3616
  %3618 = vrot.lane.b32.xlu0 %v2997, 126
  %v3619 = vpop.permute.xlu0 %3618
  %3620 = vrot.lane.b32.xlu0 %v2998, 126
  %v3621 = vpop.permute.xlu0 %3620
  %v3630 = vcombine.low %v3607, %v3615
  %v3631 = vcombine.high %v3607, %v3615
  %v3633 = vunpack.c.l.s4 1983009808
  %v3634 = vunpack.c.0.s8 %v3633
  %v3635 = vlaneseq
  %v3636 = vshrl.u32 %v3635, 7
  %v3637 = vsub.s32 %v3634, %v3636
  %v3638 = vrot.slane %v3630, %v3637
  %v3640 = vunpack.c.l.s4 1983009808
  %v3641 = vunpack.c.0.s8 %v3640
  %v3642 = vlaneseq
  %v3643 = vshrl.u32 %v3642, 7
  %v3644 = vsub.s32 %v3641, %v3643
  %v3645 = vrot.slane %v3631, %v3644
  %v3646 = vcombine.low %v3611, %v3619
  %v3647 = vcombine.high %v3611, %v3619
  %v3649 = vunpack.c.l.s4 1983009808
  %v3650 = vunpack.c.0.s8 %v3649
  %v3651 = vlaneseq
  %v3652 = vshrl.u32 %v3651, 7
  %v3653 = vsub.s32 %v3650, %v3652
  %v3654 = vrot.slane %v3646, %v3653
  %v3656 = vunpack.c.l.s4 1983009808
  %v3657 = vunpack.c.0.s8 %v3656
  %v3658 = vlaneseq
  %v3659 = vshrl.u32 %v3658, 7
  %v3660 = vsub.s32 %v3657, %v3659
  %v3661 = vrot.slane %v3647, %v3660
  %v3662 = vcombine.low %v3638, %v3654
  %v3663 = vcombine.high %v3638, %v3654
  %v3665 = vunpack.c.l.s4 1934713408
  %v3666 = vunpack.c.0.s8 %v3665
  %v3667 = vlaneseq
  %v3668 = vshrl.u32 %v3667, 7
  %v3669 = vsub.s32 %v3666, %v3668
  %v3670 = vrot.slane %v3662, %v3669
  %v3672 = vunpack.c.l.s4 1934713408
  %v3673 = vunpack.c.0.s8 %v3672
  %v3674 = vlaneseq
  %v3675 = vshrl.u32 %v3674, 7
  %v3676 = vsub.s32 %v3673, %v3675
  %v3677 = vrot.slane %v3663, %v3676
  %v3678 = vcombine.low %v3645, %v3661
  %v3679 = vcombine.high %v3645, %v3661
  %v3681 = vunpack.c.l.s4 1934713408
  %v3682 = vunpack.c.0.s8 %v3681
  %v3683 = vlaneseq
  %v3684 = vshrl.u32 %v3683, 7
  %v3685 = vsub.s32 %v3682, %v3684
  %v3686 = vrot.slane %v3678, %v3685
  %v3688 = vunpack.c.l.s4 1934713408
  %v3689 = vunpack.c.0.s8 %v3688
  %v3690 = vlaneseq
  %v3691 = vshrl.u32 %v3690, 7
  %v3692 = vsub.s32 %v3689, %v3691
  %v3693 = vrot.slane %v3679, %v3692
  %v3694 = vcombine.high %v3670, 0.0
  %v3695 = vcombine.high %v3677, 0.0
  %v3696 = vcombine.high %v3686, 0.0
  %v3697 = vcombine.high %v3693, 0.0
  %v3698 = vcombine.low %v3609, %v3617
  %v3699 = vcombine.high %v3609, %v3617
  %v3701 = vunpack.c.l.s4 1983009808
  %v3702 = vunpack.c.0.s8 %v3701
  %v3703 = vlaneseq
  %v3704 = vshrl.u32 %v3703, 7
  %v3705 = vsub.s32 %v3702, %v3704
  %v3706 = vrot.slane %v3698, %v3705
  %v3708 = vunpack.c.l.s4 1983009808
  %v3709 = vunpack.c.0.s8 %v3708
  %v3710 = vlaneseq
  %v3711 = vshrl.u32 %v3710, 7
  %v3712 = vsub.s32 %v3709, %v3711
  %v3713 = vrot.slane %v3699, %v3712
  %v3714 = vcombine.low %v3613, %v3621
  %v3715 = vcombine.high %v3613, %v3621
  %v3717 = vunpack.c.l.s4 1983009808
  %v3718 = vunpack.c.0.s8 %v3717
  %v3719 = vlaneseq
  %v3720 = vshrl.u32 %v3719, 7
  %v3721 = vsub.s32 %v3718, %v3720
  %v3722 = vrot.slane %v3714, %v3721
  %v3724 = vunpack.c.l.s4 1983009808
  %v3725 = vunpack.c.0.s8 %v3724
  %v3726 = vlaneseq
  %v3727 = vshrl.u32 %v3726, 7
  %v3728 = vsub.s32 %v3725, %v3727
  %v3729 = vrot.slane %v3715, %v3728
  %v3730 = vcombine.low %v3706, %v3722
  %v3731 = vcombine.high %v3706, %v3722
  %v3733 = vunpack.c.l.s4 1934713408
  %v3734 = vunpack.c.0.s8 %v3733
  %v3735 = vlaneseq
  %v3736 = vshrl.u32 %v3735, 7
  %v3737 = vsub.s32 %v3734, %v3736
  %v3738 = vrot.slane %v3730, %v3737
  %v3740 = vunpack.c.l.s4 1934713408
  %v3741 = vunpack.c.0.s8 %v3740
  %v3742 = vlaneseq
  %v3743 = vshrl.u32 %v3742, 7
  %v3744 = vsub.s32 %v3741, %v3743
  %v3745 = vrot.slane %v3731, %v3744
  %v3746 = vcombine.low %v3713, %v3729
  %v3747 = vcombine.high %v3713, %v3729
  %v3749 = vunpack.c.l.s4 1934713408
  %v3750 = vunpack.c.0.s8 %v3749
  %v3751 = vlaneseq
  %v3752 = vshrl.u32 %v3751, 7
  %v3753 = vsub.s32 %v3750, %v3752
  %v3754 = vrot.slane %v3746, %v3753
  %v3756 = vunpack.c.l.s4 1934713408
  %v3757 = vunpack.c.0.s8 %v3756
  %v3758 = vlaneseq
  %v3759 = vshrl.u32 %v3758, 7
  %v3760 = vsub.s32 %v3757, %v3759
  %v3761 = vrot.slane %v3747, %v3760
  %v3762 = vcombine.high %v3738, 0.0
  %v3763 = vcombine.high %v3745, 0.0
  %v3764 = vcombine.high %v3754, 0.0
  %v3765 = vcombine.high %v3761, 0.0
  %3767 = vrot.lane.b32.xlu0 %v3694, 16
  %v3768 = vpop.permute.xlu0 %3767
  %3771 = vrot.lane.b32.xlu0 %v3677, 32
  %v3772 = vpop.permute.xlu0 %3771
  %3775 = vrot.lane.b32.xlu0 %v3695, 48
  %v3776 = vpop.permute.xlu0 %3775
  %3779 = vrot.lane.b32.xlu0 %v3686, 64
  %v3780 = vpop.permute.xlu0 %3779
  %3783 = vrot.lane.b32.xlu0 %v3696, 80
  %v3784 = vpop.permute.xlu0 %3783
  %3787 = vrot.lane.b32.xlu0 %v3693, 96
  %v3788 = vpop.permute.xlu0 %3787
  %3791 = vrot.lane.b32.xlu0 %v3697, 112
  %v3792 = vpop.permute.xlu0 %3791
  %3795 = vrot.lane.b32.xlu0 %v3762, 16
  %v3796 = vpop.permute.xlu0 %3795
  %3799 = vrot.lane.b32.xlu0 %v3745, 32
  %v3800 = vpop.permute.xlu0 %3799
  %3803 = vrot.lane.b32.xlu0 %v3763, 48
  %v3804 = vpop.permute.xlu0 %3803
  %3807 = vrot.lane.b32.xlu0 %v3754, 64
  %v3808 = vpop.permute.xlu0 %3807
  %3811 = vrot.lane.b32.xlu0 %v3764, 80
  %v3812 = vpop.permute.xlu0 %3811
  %3815 = vrot.lane.b32.xlu0 %v3761, 96
  %v3816 = vpop.permute.xlu0 %3815
  %3819 = vrot.lane.b32.xlu0 %v3765, 112
  %v3820 = vpop.permute.xlu0 %3819
  %v3822 = vsel %vm342, %v3670, %v3768
  %v3823 = vsel %vm344, %v3822, %v3772
  %v3824 = vsel %vm346, %v3823, %v3776
  %v3825 = vsel %vm348, %v3824, %v3780
  %v3826 = vsel %vm350, %v3825, %v3784
  %v3827 = vsel %vm352, %v3826, %v3788
  %v3828 = vsel %vm354, %v3827, %v3792
  %v3829 = vsel %vm342, %v3738, %v3796
  %v3830 = vsel %vm344, %v3829, %v3800
  %v3831 = vsel %vm346, %v3830, %v3804
  %v3832 = vsel %vm348, %v3831, %v3808
  %v3833 = vsel %vm350, %v3832, %v3812
  %v3834 = vsel %vm352, %v3833, %v3816
  %v3835 = vsel %vm354, %v3834, %v3820
  %v3836 = vld [vmem:[%s996] sm:$0xff]
  %v3838 = vsel %vm604, %v3836, 0
  %v3841 = vsel %vm608, %v3828, 0
  %v3844 = vsel %vm608, %v3835, 0
  %3846 = vmatprep.subr.mxu0 %v3844
  %3847 = vmatpush1.msra.mxu0 %v3841
  %3848 = vmatprep.subr.mxu0 0.0
  %3849 = vmatpush1.msra.mxu0 0.0
  %3850 = vmatprep.subr.mxu0 0.0
  %3851 = vmatpush1.msra.mxu0 0.0
  %3852 = vmatprep.subr.mxu0 0.0
  %3853 = vmatpush1.msra.mxu0 0.0
  %3854 = vmatprep.subr.mxu0 0.0
  %3855 = vmatpush1.msra.mxu0 0.0
  %3856 = vmatprep.subr.mxu0 0.0
  %3857 = vmatpush1.msra.mxu0 0.0
  %3858 = vmatprep.subr.mxu0 0.0
  %3859 = vmatpush1.msra.mxu0 0.0
  %3860 = vmatprep.subr.mxu0 0.0
  %3861 = vmatpush1.msra.mxu0 0.0
  %3862 = vmatprep.subr.mxu0 0.0
  %3863 = vmatpush1.msra.mxu0 0.0
  %3864 = vmatprep.subr.mxu0 0.0
  %3865 = vmatpush1.msra.mxu0 0.0
  %3866 = vmatprep.subr.mxu0 0.0
  %3867 = vmatpush1.msra.mxu0 0.0
  %3868 = vmatprep.subr.mxu0 0.0
  %3869 = vmatpush1.msra.mxu0 0.0
  %3870 = vmatprep.subr.mxu0 0.0
  %3871 = vmatpush1.msra.mxu0 0.0
  %3872 = vmatprep.subr.mxu0 0.0
  %3873 = vmatpush1.msra.mxu0 0.0
  %3874 = vmatprep.subr.mxu0 0.0
  %3875 = vmatpush1.msra.mxu0 0.0
  %3876 = vmatprep.subr.mxu0 0.0
  %3877 = vmatpush1.msra.mxu0 0.0
  %3878 = vmatprep.subr.mxu0 0.0
  %3879 = vmatpush1.msra.mxu0 0.0
  %3880 = vmatprep.subr.mxu0 0.0
  %3881 = vmatpush1.msra.mxu0 0.0
  %3882 = vmatprep.subr.mxu0 0.0
  %3883 = vmatpush1.msra.mxu0 0.0
  %3884 = vmatprep.subr.mxu0 0.0
  %3885 = vmatpush1.msra.mxu0 0.0
  %3886 = vmatprep.subr.mxu0 0.0
  %3887 = vmatpush1.msra.mxu0 0.0
  %3888 = vmatprep.subr.mxu0 0.0
  %3889 = vmatpush1.msra.mxu0 0.0
  %3890 = vmatprep.subr.mxu0 0.0
  %3891 = vmatpush1.msra.mxu0 0.0
  %3892 = vmatprep.subr.mxu0 0.0
  %3893 = vmatpush1.msra.mxu0 0.0
  %3894 = vmatprep.subr.mxu0 0.0
  %3895 = vmatpush1.msra.mxu0 0.0
  %3896 = vmatprep.subr.mxu0 0.0
  %3897 = vmatpush1.msra.mxu0 0.0
  %3898 = vmatprep.subr.mxu0 0.0
  %3899 = vmatpush1.msra.mxu0 0.0
  %3900 = vmatprep.subr.mxu0 0.0
  %3901 = vmatpush1.msra.mxu0 0.0
  %3902 = vmatprep.subr.mxu0 0.0
  %3903 = vmatpush1.msra.mxu0 0.0
  %3904 = vmatprep.subr.mxu0 0.0
  %3905 = vmatpush1.msra.mxu0 0.0
  %3906 = vmatprep.subr.mxu0 0.0
  %3907 = vmatpush1.msra.mxu0 0.0
  %3908 = vmatprep.subr.mxu0 0.0
  %3909 = vmatpush1.msra.mxu0 0.0
  %3910 = vmatprep.mubr.f32.mxu0 0.0
  %3911 = vmatmul.mubr.f32.gmra.mrb[0].mxu0 %v3838
  %v3912 = vpop.f32.mrb[0].mxu0
  %v3913 = vadd.f32 0.0, %v3912
  %v3914 = vpop.f32.mrb[0].mxu0
  %v3915 = vadd.f32 0.0, %v3914
  %3916 = vdwg.mxu0
  %v3917 = vadd.f32 %v3602, %v3913
  %v3918 = vadd.f32 %v3604, %v3915
  %v3923 = vrot.slane %v2988, 1
  %v3924 = vrot.slane %v2989, 1
  %v3925 = vsel %vm1084, %v3923, %v3924
  %v3926 = vrot.slane %v2990, 1
  %v3927 = vsel %vm1084, %v3924, %v3926
  %v3928 = vrot.slane %v2991, 1
  %v3929 = vrot.slane %v2992, 1
  %v3930 = vsel %vm1084, %v3928, %v3929
  %v3931 = vrot.slane %v2993, 1
  %v3932 = vsel %vm1084, %v3929, %v3931
  %v3933 = vrot.slane %v2994, 1
  %v3934 = vrot.slane %v2995, 1
  %v3935 = vsel %vm1084, %v3933, %v3934
  %v3936 = vrot.slane %v2996, 1
  %v3937 = vsel %vm1084, %v3934, %v3936
  %v3938 = vrot.slane %v2997, 1
  %v3939 = vrot.slane %v2998, 1
  %v3940 = vsel %vm1084, %v3938, %v3939
  %v3941 = vrot.slane %v2999, 1
  %v3942 = vsel %vm1084, %v3939, %v3941
  %v3951 = vcombine.low %v3925, %v3935
  %v3952 = vcombine.high %v3925, %v3935
  %v3954 = vunpack.c.l.s4 1983009808
  %v3955 = vunpack.c.0.s8 %v3954
  %v3956 = vlaneseq
  %v3957 = vshrl.u32 %v3956, 7
  %v3958 = vsub.s32 %v3955, %v3957
  %v3959 = vrot.slane %v3951, %v3958
  %v3961 = vunpack.c.l.s4 1983009808
  %v3962 = vunpack.c.0.s8 %v3961
  %v3963 = vlaneseq
  %v3964 = vshrl.u32 %v3963, 7
  %v3965 = vsub.s32 %v3962, %v3964
  %v3966 = vrot.slane %v3952, %v3965
  %v3967 = vcombine.low %v3930, %v3940
  %v3968 = vcombine.high %v3930, %v3940
  %v3970 = vunpack.c.l.s4 1983009808
  %v3971 = vunpack.c.0.s8 %v3970
  %v3972 = vlaneseq
  %v3973 = vshrl.u32 %v3972, 7
  %v3974 = vsub.s32 %v3971, %v3973
  %v3975 = vrot.slane %v3967, %v3974
  %v3977 = vunpack.c.l.s4 1983009808
  %v3978 = vunpack.c.0.s8 %v3977
  %v3979 = vlaneseq
  %v3980 = vshrl.u32 %v3979, 7
  %v3981 = vsub.s32 %v3978, %v3980
  %v3982 = vrot.slane %v3968, %v3981
  %v3983 = vcombine.low %v3959, %v3975
  %v3984 = vcombine.high %v3959, %v3975
  %v3986 = vunpack.c.l.s4 1934713408
  %v3987 = vunpack.c.0.s8 %v3986
  %v3988 = vlaneseq
  %v3989 = vshrl.u32 %v3988, 7
  %v3990 = vsub.s32 %v3987, %v3989
  %v3991 = vrot.slane %v3983, %v3990
  %v3993 = vunpack.c.l.s4 1934713408
  %v3994 = vunpack.c.0.s8 %v3993
  %v3995 = vlaneseq
  %v3996 = vshrl.u32 %v3995, 7
  %v3997 = vsub.s32 %v3994, %v3996
  %v3998 = vrot.slane %v3984, %v3997
  %v3999 = vcombine.low %v3966, %v3982
  %v4000 = vcombine.high %v3966, %v3982
  %v4002 = vunpack.c.l.s4 1934713408
  %v4003 = vunpack.c.0.s8 %v4002
  %v4004 = vlaneseq
  %v4005 = vshrl.u32 %v4004, 7
  %v4006 = vsub.s32 %v4003, %v4005
  %v4007 = vrot.slane %v3999, %v4006
  %v4009 = vunpack.c.l.s4 1934713408
  %v4010 = vunpack.c.0.s8 %v4009
  %v4011 = vlaneseq
  %v4012 = vshrl.u32 %v4011, 7
  %v4013 = vsub.s32 %v4010, %v4012
  %v4014 = vrot.slane %v4000, %v4013
  %v4015 = vcombine.high %v3991, 0.0
  %v4016 = vcombine.high %v3998, 0.0
  %v4017 = vcombine.high %v4007, 0.0
  %v4018 = vcombine.high %v4014, 0.0
  %v4019 = vcombine.low %v3927, %v3937
  %v4020 = vcombine.high %v3927, %v3937
  %v4022 = vunpack.c.l.s4 1983009808
  %v4023 = vunpack.c.0.s8 %v4022
  %v4024 = vlaneseq
  %v4025 = vshrl.u32 %v4024, 7
  %v4026 = vsub.s32 %v4023, %v4025
  %v4027 = vrot.slane %v4019, %v4026
  %v4029 = vunpack.c.l.s4 1983009808
  %v4030 = vunpack.c.0.s8 %v4029
  %v4031 = vlaneseq
  %v4032 = vshrl.u32 %v4031, 7
  %v4033 = vsub.s32 %v4030, %v4032
  %v4034 = vrot.slane %v4020, %v4033
  %v4035 = vcombine.low %v3932, %v3942
  %v4036 = vcombine.high %v3932, %v3942
  %v4038 = vunpack.c.l.s4 1983009808
  %v4039 = vunpack.c.0.s8 %v4038
  %v4040 = vlaneseq
  %v4041 = vshrl.u32 %v4040, 7
  %v4042 = vsub.s32 %v4039, %v4041
  %v4043 = vrot.slane %v4035, %v4042
  %v4045 = vunpack.c.l.s4 1983009808
  %v4046 = vunpack.c.0.s8 %v4045
  %v4047 = vlaneseq
  %v4048 = vshrl.u32 %v4047, 7
  %v4049 = vsub.s32 %v4046, %v4048
  %v4050 = vrot.slane %v4036, %v4049
  %v4051 = vcombine.low %v4027, %v4043
  %v4052 = vcombine.high %v4027, %v4043
  %v4054 = vunpack.c.l.s4 1934713408
  %v4055 = vunpack.c.0.s8 %v4054
  %v4056 = vlaneseq
  %v4057 = vshrl.u32 %v4056, 7
  %v4058 = vsub.s32 %v4055, %v4057
  %v4059 = vrot.slane %v4051, %v4058
  %v4061 = vunpack.c.l.s4 1934713408
  %v4062 = vunpack.c.0.s8 %v4061
  %v4063 = vlaneseq
  %v4064 = vshrl.u32 %v4063, 7
  %v4065 = vsub.s32 %v4062, %v4064
  %v4066 = vrot.slane %v4052, %v4065
  %v4067 = vcombine.low %v4034, %v4050
  %v4068 = vcombine.high %v4034, %v4050
  %v4070 = vunpack.c.l.s4 1934713408
  %v4071 = vunpack.c.0.s8 %v4070
  %v4072 = vlaneseq
  %v4073 = vshrl.u32 %v4072, 7
  %v4074 = vsub.s32 %v4071, %v4073
  %v4075 = vrot.slane %v4067, %v4074
  %v4077 = vunpack.c.l.s4 1934713408
  %v4078 = vunpack.c.0.s8 %v4077
  %v4079 = vlaneseq
  %v4080 = vshrl.u32 %v4079, 7
  %v4081 = vsub.s32 %v4078, %v4080
  %v4082 = vrot.slane %v4068, %v4081
  %v4083 = vcombine.high %v4059, 0.0
  %v4084 = vcombine.high %v4066, 0.0
  %v4085 = vcombine.high %v4075, 0.0
  %v4086 = vcombine.high %v4082, 0.0
  %4088 = vrot.lane.b32.xlu0 %v4015, 16
  %v4089 = vpop.permute.xlu0 %4088
  %4092 = vrot.lane.b32.xlu0 %v3998, 32
  %v4093 = vpop.permute.xlu0 %4092
  %4096 = vrot.lane.b32.xlu0 %v4016, 48
  %v4097 = vpop.permute.xlu0 %4096
  %4100 = vrot.lane.b32.xlu0 %v4007, 64
  %v4101 = vpop.permute.xlu0 %4100
  %4104 = vrot.lane.b32.xlu0 %v4017, 80
  %v4105 = vpop.permute.xlu0 %4104
  %4108 = vrot.lane.b32.xlu0 %v4014, 96
  %v4109 = vpop.permute.xlu0 %4108
  %4112 = vrot.lane.b32.xlu0 %v4018, 112
  %v4113 = vpop.permute.xlu0 %4112
  %4116 = vrot.lane.b32.xlu0 %v4083, 16
  %v4117 = vpop.permute.xlu0 %4116
  %4120 = vrot.lane.b32.xlu0 %v4066, 32
  %v4121 = vpop.permute.xlu0 %4120
  %4124 = vrot.lane.b32.xlu0 %v4084, 48
  %v4125 = vpop.permute.xlu0 %4124
  %4128 = vrot.lane.b32.xlu0 %v4075, 64
  %v4129 = vpop.permute.xlu0 %4128
  %4132 = vrot.lane.b32.xlu0 %v4085, 80
  %v4133 = vpop.permute.xlu0 %4132
  %4136 = vrot.lane.b32.xlu0 %v4082, 96
  %v4137 = vpop.permute.xlu0 %4136
  %4140 = vrot.lane.b32.xlu0 %v4086, 112
  %v4141 = vpop.permute.xlu0 %4140
  %v4143 = vsel %vm342, %v3991, %v4089
  %v4144 = vsel %vm344, %v4143, %v4093
  %v4145 = vsel %vm346, %v4144, %v4097
  %v4146 = vsel %vm348, %v4145, %v4101
  %v4147 = vsel %vm350, %v4146, %v4105
  %v4148 = vsel %vm352, %v4147, %v4109
  %v4149 = vsel %vm354, %v4148, %v4113
  %v4150 = vsel %vm342, %v4059, %v4117
  %v4151 = vsel %vm344, %v4150, %v4121
  %v4152 = vsel %vm346, %v4151, %v4125
  %v4153 = vsel %vm348, %v4152, %v4129
  %v4154 = vsel %vm350, %v4153, %v4133
  %v4155 = vsel %vm352, %v4154, %v4137
  %v4156 = vsel %vm354, %v4155, %v4141
  %v4157 = vld [vmem:[%s1319] sm:$0xff]
  %v4159 = vsel %vm604, %v4157, 0
  %v4162 = vsel %vm608, %v4149, 0
  %v4165 = vsel %vm608, %v4156, 0
  %4167 = vmatprep.subr.mxu0 %v4165
  %4168 = vmatpush1.msra.mxu0 %v4162
  %4169 = vmatprep.subr.mxu0 0.0
  %4170 = vmatpush1.msra.mxu0 0.0
  %4171 = vmatprep.subr.mxu0 0.0
  %4172 = vmatpush1.msra.mxu0 0.0
  %4173 = vmatprep.subr.mxu0 0.0
  %4174 = vmatpush1.msra.mxu0 0.0
  %4175 = vmatprep.subr.mxu0 0.0
  %4176 = vmatpush1.msra.mxu0 0.0
  %4177 = vmatprep.subr.mxu0 0.0
  %4178 = vmatpush1.msra.mxu0 0.0
  %4179 = vmatprep.subr.mxu0 0.0
  %4180 = vmatpush1.msra.mxu0 0.0
  %4181 = vmatprep.subr.mxu0 0.0
  %4182 = vmatpush1.msra.mxu0 0.0
  %4183 = vmatprep.subr.mxu0 0.0
  %4184 = vmatpush1.msra.mxu0 0.0
  %4185 = vmatprep.subr.mxu0 0.0
  %4186 = vmatpush1.msra.mxu0 0.0
  %4187 = vmatprep.subr.mxu0 0.0
  %4188 = vmatpush1.msra.mxu0 0.0
  %4189 = vmatprep.subr.mxu0 0.0
  %4190 = vmatpush1.msra.mxu0 0.0
  %4191 = vmatprep.subr.mxu0 0.0
  %4192 = vmatpush1.msra.mxu0 0.0
  %4193 = vmatprep.subr.mxu0 0.0
  %4194 = vmatpush1.msra.mxu0 0.0
  %4195 = vmatprep.subr.mxu0 0.0
  %4196 = vmatpush1.msra.mxu0 0.0
  %4197 = vmatprep.subr.mxu0 0.0
  %4198 = vmatpush1.msra.mxu0 0.0
  %4199 = vmatprep.subr.mxu0 0.0
  %4200 = vmatpush1.msra.mxu0 0.0
  %4201 = vmatprep.subr.mxu0 0.0
  %4202 = vmatpush1.msra.mxu0 0.0
  %4203 = vmatprep.subr.mxu0 0.0
  %4204 = vmatpush1.msra.mxu0 0.0
  %4205 = vmatprep.subr.mxu0 0.0
  %4206 = vmatpush1.msra.mxu0 0.0
  %4207 = vmatprep.subr.mxu0 0.0
  %4208 = vmatpush1.msra.mxu0 0.0
  %4209 = vmatprep.subr.mxu0 0.0
  %4210 = vmatpush1.msra.mxu0 0.0
  %4211 = vmatprep.subr.mxu0 0.0
  %4212 = vmatpush1.msra.mxu0 0.0
  %4213 = vmatprep.subr.mxu0 0.0
  %4214 = vmatpush1.msra.mxu0 0.0
  %4215 = vmatprep.subr.mxu0 0.0
  %4216 = vmatpush1.msra.mxu0 0.0
  %4217 = vmatprep.subr.mxu0 0.0
  %4218 = vmatpush1.msra.mxu0 0.0
  %4219 = vmatprep.subr.mxu0 0.0
  %4220 = vmatpush1.msra.mxu0 0.0
  %4221 = vmatprep.subr.mxu0 0.0
  %4222 = vmatpush1.msra.mxu0 0.0
  %4223 = vmatprep.subr.mxu0 0.0
  %4224 = vmatpush1.msra.mxu0 0.0
  %4225 = vmatprep.subr.mxu0 0.0
  %4226 = vmatpush1.msra.mxu0 0.0
  %4227 = vmatprep.subr.mxu0 0.0
  %4228 = vmatpush1.msra.mxu0 0.0
  %4229 = vmatprep.subr.mxu0 0.0
  %4230 = vmatpush1.msra.mxu0 0.0
  %4231 = vmatprep.mubr.f32.mxu0 0.0
  %4232 = vmatmul.mubr.f32.gmra.mrb[0].mxu0 %v4159
  %v4233 = vpop.f32.mrb[0].mxu0
  %v4234 = vadd.f32 0.0, %v4233
  %v4235 = vpop.f32.mrb[0].mxu0
  %v4236 = vadd.f32 0.0, %v4235
  %4237 = vdwg.mxu0
  %v4238 = vadd.f32 %v3917, %v4234
  %v4239 = vadd.f32 %v3918, %v4236
  %4240 = vrot.lane.b32.xlu0 %v3925, 127
  %v4241 = vpop.permute.xlu0 %4240
  %4242 = vrot.lane.b32.xlu0 %v3927, 127
  %v4243 = vpop.permute.xlu0 %4242
  %4244 = vrot.lane.b32.xlu0 %v3930, 127
  %v4245 = vpop.permute.xlu0 %4244
  %4246 = vrot.lane.b32.xlu0 %v3932, 127
  %v4247 = vpop.permute.xlu0 %4246
  %4248 = vrot.lane.b32.xlu0 %v3935, 127
  %v4249 = vpop.permute.xlu0 %4248
  %4250 = vrot.lane.b32.xlu0 %v3937, 127
  %v4251 = vpop.permute.xlu0 %4250
  %4252 = vrot.lane.b32.xlu0 %v3940, 127
  %v4253 = vpop.permute.xlu0 %4252
  %4254 = vrot.lane.b32.xlu0 %v3942, 127
  %v4255 = vpop.permute.xlu0 %4254
  %v4264 = vcombine.low %v4241, %v4249
  %v4265 = vcombine.high %v4241, %v4249
  %v4267 = vunpack.c.l.s4 1983009808
  %v4268 = vunpack.c.0.s8 %v4267
  %v4269 = vlaneseq
  %v4270 = vshrl.u32 %v4269, 7
  %v4271 = vsub.s32 %v4268, %v4270
  %v4272 = vrot.slane %v4264, %v4271
  %v4274 = vunpack.c.l.s4 1983009808
  %v4275 = vunpack.c.0.s8 %v4274
  %v4276 = vlaneseq
  %v4277 = vshrl.u32 %v4276, 7
  %v4278 = vsub.s32 %v4275, %v4277
  %v4279 = vrot.slane %v4265, %v4278
  %v4280 = vcombine.low %v4245, %v4253
  %v4281 = vcombine.high %v4245, %v4253
  %v4283 = vunpack.c.l.s4 1983009808
  %v4284 = vunpack.c.0.s8 %v4283
  %v4285 = vlaneseq
  %v4286 = vshrl.u32 %v4285, 7
  %v4287 = vsub.s32 %v4284, %v4286
  %v4288 = vrot.slane %v4280, %v4287
  %v4290 = vunpack.c.l.s4 1983009808
  %v4291 = vunpack.c.0.s8 %v4290
  %v4292 = vlaneseq
  %v4293 = vshrl.u32 %v4292, 7
  %v4294 = vsub.s32 %v4291, %v4293
  %v4295 = vrot.slane %v4281, %v4294
  %v4296 = vcombine.low %v4272, %v4288
  %v4297 = vcombine.high %v4272, %v4288
  %v4299 = vunpack.c.l.s4 1934713408
  %v4300 = vunpack.c.0.s8 %v4299
  %v4301 = vlaneseq
  %v4302 = vshrl.u32 %v4301, 7
  %v4303 = vsub.s32 %v4300, %v4302
  %v4304 = vrot.slane %v4296, %v4303
  %v4306 = vunpack.c.l.s4 1934713408
  %v4307 = vunpack.c.0.s8 %v4306
  %v4308 = vlaneseq
  %v4309 = vshrl.u32 %v4308, 7
  %v4310 = vsub.s32 %v4307, %v4309
  %v4311 = vrot.slane %v4297, %v4310
  %v4312 = vcombine.low %v4279, %v4295
  %v4313 = vcombine.high %v4279, %v4295
  %v4315 = vunpack.c.l.s4 1934713408
  %v4316 = vunpack.c.0.s8 %v4315
  %v4317 = vlaneseq
  %v4318 = vshrl.u32 %v4317, 7
  %v4319 = vsub.s32 %v4316, %v4318
  %v4320 = vrot.slane %v4312, %v4319
  %v4322 = vunpack.c.l.s4 1934713408
  %v4323 = vunpack.c.0.s8 %v4322
  %v4324 = vlaneseq
  %v4325 = vshrl.u32 %v4324, 7
  %v4326 = vsub.s32 %v4323, %v4325
  %v4327 = vrot.slane %v4313, %v4326
  %v4328 = vcombine.high %v4304, 0.0
  %v4329 = vcombine.high %v4311, 0.0
  %v4330 = vcombine.high %v4320, 0.0
  %v4331 = vcombine.high %v4327, 0.0
  %v4332 = vcombine.low %v4243, %v4251
  %v4333 = vcombine.high %v4243, %v4251
  %v4335 = vunpack.c.l.s4 1983009808
  %v4336 = vunpack.c.0.s8 %v4335
  %v4337 = vlaneseq
  %v4338 = vshrl.u32 %v4337, 7
  %v4339 = vsub.s32 %v4336, %v4338
  %v4340 = vrot.slane %v4332, %v4339
  %v4342 = vunpack.c.l.s4 1983009808
  %v4343 = vunpack.c.0.s8 %v4342
  %v4344 = vlaneseq
  %v4345 = vshrl.u32 %v4344, 7
  %v4346 = vsub.s32 %v4343, %v4345
  %v4347 = vrot.slane %v4333, %v4346
  %v4348 = vcombine.low %v4247, %v4255
  %v4349 = vcombine.high %v4247, %v4255
  %v4351 = vunpack.c.l.s4 1983009808
  %v4352 = vunpack.c.0.s8 %v4351
  %v4353 = vlaneseq
  %v4354 = vshrl.u32 %v4353, 7
  %v4355 = vsub.s32 %v4352, %v4354
  %v4356 = vrot.slane %v4348, %v4355
  %v4358 = vunpack.c.l.s4 1983009808
  %v4359 = vunpack.c.0.s8 %v4358
  %v4360 = vlaneseq
  %v4361 = vshrl.u32 %v4360, 7
  %v4362 = vsub.s32 %v4359, %v4361
  %v4363 = vrot.slane %v4349, %v4362
  %v4364 = vcombine.low %v4340, %v4356
  %v4365 = vcombine.high %v4340, %v4356
  %v4367 = vunpack.c.l.s4 1934713408
  %v4368 = vunpack.c.0.s8 %v4367
  %v4369 = vlaneseq
  %v4370 = vshrl.u32 %v4369, 7
  %v4371 = vsub.s32 %v4368, %v4370
  %v4372 = vrot.slane %v4364, %v4371
  %v4374 = vunpack.c.l.s4 1934713408
  %v4375 = vunpack.c.0.s8 %v4374
  %v4376 = vlaneseq
  %v4377 = vshrl.u32 %v4376, 7
  %v4378 = vsub.s32 %v4375, %v4377
  %v4379 = vrot.slane %v4365, %v4378
  %v4380 = vcombine.low %v4347, %v4363
  %v4381 = vcombine.high %v4347, %v4363
  %v4383 = vunpack.c.l.s4 1934713408
  %v4384 = vunpack.c.0.s8 %v4383
  %v4385 = vlaneseq
  %v4386 = vshrl.u32 %v4385, 7
  %v4387 = vsub.s32 %v4384, %v4386
  %v4388 = vrot.slane %v4380, %v4387
  %v4390 = vunpack.c.l.s4 1934713408
  %v4391 = vunpack.c.0.s8 %v4390
  %v4392 = vlaneseq
  %v4393 = vshrl.u32 %v4392, 7
  %v4394 = vsub.s32 %v4391, %v4393
  %v4395 = vrot.slane %v4381, %v4394
  %v4396 = vcombine.high %v4372, 0.0
  %v4397 = vcombine.high %v4379, 0.0
  %v4398 = vcombine.high %v4388, 0.0
  %v4399 = vcombine.high %v4395, 0.0
  %4401 = vrot.lane.b32.xlu0 %v4328, 16
  %v4402 = vpop.permute.xlu0 %4401
  %4405 = vrot.lane.b32.xlu0 %v4311, 32
  %v4406 = vpop.permute.xlu0 %4405
  %4409 = vrot.lane.b32.xlu0 %v4329, 48
  %v4410 = vpop.permute.xlu0 %4409
  %4413 = vrot.lane.b32.xlu0 %v4320, 64
  %v4414 = vpop.permute.xlu0 %4413
  %4417 = vrot.lane.b32.xlu0 %v4330, 80
  %v4418 = vpop.permute.xlu0 %4417
  %4421 = vrot.lane.b32.xlu0 %v4327, 96
  %v4422 = vpop.permute.xlu0 %4421
  %4425 = vrot.lane.b32.xlu0 %v4331, 112
  %v4426 = vpop.permute.xlu0 %4425
  %4429 = vrot.lane.b32.xlu0 %v4396, 16
  %v4430 = vpop.permute.xlu0 %4429
  %4433 = vrot.lane.b32.xlu0 %v4379, 32
  %v4434 = vpop.permute.xlu0 %4433
  %4437 = vrot.lane.b32.xlu0 %v4397, 48
  %v4438 = vpop.permute.xlu0 %4437
  %4441 = vrot.lane.b32.xlu0 %v4388, 64
  %v4442 = vpop.permute.xlu0 %4441
  %4445 = vrot.lane.b32.xlu0 %v4398, 80
  %v4446 = vpop.permute.xlu0 %4445
  %4449 = vrot.lane.b32.xlu0 %v4395, 96
  %v4450 = vpop.permute.xlu0 %4449
  %4453 = vrot.lane.b32.xlu0 %v4399, 112
  %v4454 = vpop.permute.xlu0 %4453
  %v4456 = vsel %vm342, %v4304, %v4402
  %v4457 = vsel %vm344, %v4456, %v4406
  %v4458 = vsel %vm346, %v4457, %v4410
  %v4459 = vsel %vm348, %v4458, %v4414
  %v4460 = vsel %vm350, %v4459, %v4418
  %v4461 = vsel %vm352, %v4460, %v4422
  %v4462 = vsel %vm354, %v4461, %v4426
  %v4463 = vsel %vm342, %v4372, %v4430
  %v4464 = vsel %vm344, %v4463, %v4434
  %v4465 = vsel %vm346, %v4464, %v4438
  %v4466 = vsel %vm348, %v4465, %v4442
  %v4467 = vsel %vm350, %v4466, %v4446
  %v4468 = vsel %vm352, %v4467, %v4450
  %v4469 = vsel %vm354, %v4468, %v4454
  %v4470 = vld [vmem:[%s1633] sm:$0xff]
  %v4472 = vsel %vm604, %v4470, 0
  %v4475 = vsel %vm608, %v4462, 0
  %v4478 = vsel %vm608, %v4469, 0
  %4480 = vmatprep.subr.mxu0 %v4478
  %4481 = vmatpush1.msra.mxu0 %v4475
  %4482 = vmatprep.subr.mxu0 0.0
  %4483 = vmatpush1.msra.mxu0 0.0
  %4484 = vmatprep.subr.mxu0 0.0
  %4485 = vmatpush1.msra.mxu0 0.0
  %4486 = vmatprep.subr.mxu0 0.0
  %4487 = vmatpush1.msra.mxu0 0.0
  %4488 = vmatprep.subr.mxu0 0.0
  %4489 = vmatpush1.msra.mxu0 0.0
  %4490 = vmatprep.subr.mxu0 0.0
  %4491 = vmatpush1.msra.mxu0 0.0
  %4492 = vmatprep.subr.mxu0 0.0
  %4493 = vmatpush1.msra.mxu0 0.0
  %4494 = vmatprep.subr.mxu0 0.0
  %4495 = vmatpush1.msra.mxu0 0.0
  %4496 = vmatprep.subr.mxu0 0.0
  %4497 = vmatpush1.msra.mxu0 0.0
  %4498 = vmatprep.subr.mxu0 0.0
  %4499 = vmatpush1.msra.mxu0 0.0
  %4500 = vmatprep.subr.mxu0 0.0
  %4501 = vmatpush1.msra.mxu0 0.0
  %4502 = vmatprep.subr.mxu0 0.0
  %4503 = vmatpush1.msra.mxu0 0.0
  %4504 = vmatprep.subr.mxu0 0.0
  %4505 = vmatpush1.msra.mxu0 0.0
  %4506 = vmatprep.subr.mxu0 0.0
  %4507 = vmatpush1.msra.mxu0 0.0
  %4508 = vmatprep.subr.mxu0 0.0
  %4509 = vmatpush1.msra.mxu0 0.0
  %4510 = vmatprep.subr.mxu0 0.0
  %4511 = vmatpush1.msra.mxu0 0.0
  %4512 = vmatprep.subr.mxu0 0.0
  %4513 = vmatpush1.msra.mxu0 0.0
  %4514 = vmatprep.subr.mxu0 0.0
  %4515 = vmatpush1.msra.mxu0 0.0
  %4516 = vmatprep.subr.mxu0 0.0
  %4517 = vmatpush1.msra.mxu0 0.0
  %4518 = vmatprep.subr.mxu0 0.0
  %4519 = vmatpush1.msra.mxu0 0.0
  %4520 = vmatprep.subr.mxu0 0.0
  %4521 = vmatpush1.msra.mxu0 0.0
  %4522 = vmatprep.subr.mxu0 0.0
  %4523 = vmatpush1.msra.mxu0 0.0
  %4524 = vmatprep.subr.mxu0 0.0
  %4525 = vmatpush1.msra.mxu0 0.0
  %4526 = vmatprep.subr.mxu0 0.0
  %4527 = vmatpush1.msra.mxu0 0.0
  %4528 = vmatprep.subr.mxu0 0.0
  %4529 = vmatpush1.msra.mxu0 0.0
  %4530 = vmatprep.subr.mxu0 0.0
  %4531 = vmatpush1.msra.mxu0 0.0
  %4532 = vmatprep.subr.mxu0 0.0
  %4533 = vmatpush1.msra.mxu0 0.0
  %4534 = vmatprep.subr.mxu0 0.0
  %4535 = vmatpush1.msra.mxu0 0.0
  %4536 = vmatprep.subr.mxu0 0.0
  %4537 = vmatpush1.msra.mxu0 0.0
  %4538 = vmatprep.subr.mxu0 0.0
  %4539 = vmatpush1.msra.mxu0 0.0
  %4540 = vmatprep.subr.mxu0 0.0
  %4541 = vmatpush1.msra.mxu0 0.0
  %4542 = vmatprep.subr.mxu0 0.0
  %4543 = vmatpush1.msra.mxu0 0.0
  %4544 = vmatprep.mubr.f32.mxu0 0.0
  %4545 = vmatmul.mubr.f32.gmra.mrb[0].mxu0 %v4472
  %v4546 = vpop.f32.mrb[0].mxu0
  %v4547 = vadd.f32 0.0, %v4546
  %v4548 = vpop.f32.mrb[0].mxu0
  %v4549 = vadd.f32 0.0, %v4548
  %4550 = vdwg.mxu0
  %v4551 = vadd.f32 %v4238, %v4547
  %v4552 = vadd.f32 %v4239, %v4549
  %4553 = vrot.lane.b32.xlu0 %v3925, 126
  %v4554 = vpop.permute.xlu0 %4553
  %4555 = vrot.lane.b32.xlu0 %v3927, 126
  %v4556 = vpop.permute.xlu0 %4555
  %4557 = vrot.lane.b32.xlu0 %v3930, 126
  %v4558 = vpop.permute.xlu0 %4557
  %4559 = vrot.lane.b32.xlu0 %v3932, 126
  %v4560 = vpop.permute.xlu0 %4559
  %4561 = vrot.lane.b32.xlu0 %v3935, 126
  %v4562 = vpop.permute.xlu0 %4561
  %4563 = vrot.lane.b32.xlu0 %v3937, 126
  %v4564 = vpop.permute.xlu0 %4563
  %4565 = vrot.lane.b32.xlu0 %v3940, 126
  %v4566 = vpop.permute.xlu0 %4565
  %4567 = vrot.lane.b32.xlu0 %v3942, 126
  %v4568 = vpop.permute.xlu0 %4567
  %v4577 = vcombine.low %v4554, %v4562
  %v4578 = vcombine.high %v4554, %v4562
  %v4580 = vunpack.c.l.s4 1983009808
  %v4581 = vunpack.c.0.s8 %v4580
  %v4582 = vlaneseq
  %v4583 = vshrl.u32 %v4582, 7
  %v4584 = vsub.s32 %v4581, %v4583
  %v4585 = vrot.slane %v4577, %v4584
  %v4587 = vunpack.c.l.s4 1983009808
  %v4588 = vunpack.c.0.s8 %v4587
  %v4589 = vlaneseq
  %v4590 = vshrl.u32 %v4589, 7
  %v4591 = vsub.s32 %v4588, %v4590
  %v4592 = vrot.slane %v4578, %v4591
  %v4593 = vcombine.low %v4558, %v4566
  %v4594 = vcombine.high %v4558, %v4566
  %v4596 = vunpack.c.l.s4 1983009808
  %v4597 = vunpack.c.0.s8 %v4596
  %v4598 = vlaneseq
  %v4599 = vshrl.u32 %v4598, 7
  %v4600 = vsub.s32 %v4597, %v4599
  %v4601 = vrot.slane %v4593, %v4600
  %v4603 = vunpack.c.l.s4 1983009808
  %v4604 = vunpack.c.0.s8 %v4603
  %v4605 = vlaneseq
  %v4606 = vshrl.u32 %v4605, 7
  %v4607 = vsub.s32 %v4604, %v4606
  %v4608 = vrot.slane %v4594, %v4607
  %v4609 = vcombine.low %v4585, %v4601
  %v4610 = vcombine.high %v4585, %v4601
  %v4612 = vunpack.c.l.s4 1934713408
  %v4613 = vunpack.c.0.s8 %v4612
  %v4614 = vlaneseq
  %v4615 = vshrl.u32 %v4614, 7
  %v4616 = vsub.s32 %v4613, %v4615
  %v4617 = vrot.slane %v4609, %v4616
  %v4619 = vunpack.c.l.s4 1934713408
  %v4620 = vunpack.c.0.s8 %v4619
  %v4621 = vlaneseq
  %v4622 = vshrl.u32 %v4621, 7
  %v4623 = vsub.s32 %v4620, %v4622
  %v4624 = vrot.slane %v4610, %v4623
  %v4625 = vcombine.low %v4592, %v4608
  %v4626 = vcombine.high %v4592, %v4608
  %v4628 = vunpack.c.l.s4 1934713408
  %v4629 = vunpack.c.0.s8 %v4628
  %v4630 = vlaneseq
  %v4631 = vshrl.u32 %v4630, 7
  %v4632 = vsub.s32 %v4629, %v4631
  %v4633 = vrot.slane %v4625, %v4632
  %v4635 = vunpack.c.l.s4 1934713408
  %v4636 = vunpack.c.0.s8 %v4635
  %v4637 = vlaneseq
  %v4638 = vshrl.u32 %v4637, 7
  %v4639 = vsub.s32 %v4636, %v4638
  %v4640 = vrot.slane %v4626, %v4639
  %v4641 = vcombine.high %v4617, 0.0
  %v4642 = vcombine.high %v4624, 0.0
  %v4643 = vcombine.high %v4633, 0.0
  %v4644 = vcombine.high %v4640, 0.0
  %v4645 = vcombine.low %v4556, %v4564
  %v4646 = vcombine.high %v4556, %v4564
  %v4648 = vunpack.c.l.s4 1983009808
  %v4649 = vunpack.c.0.s8 %v4648
  %v4650 = vlaneseq
  %v4651 = vshrl.u32 %v4650, 7
  %v4652 = vsub.s32 %v4649, %v4651
  %v4653 = vrot.slane %v4645, %v4652
  %v4655 = vunpack.c.l.s4 1983009808
  %v4656 = vunpack.c.0.s8 %v4655
  %v4657 = vlaneseq
  %v4658 = vshrl.u32 %v4657, 7
  %v4659 = vsub.s32 %v4656, %v4658
  %v4660 = vrot.slane %v4646, %v4659
  %v4661 = vcombine.low %v4560, %v4568
  %v4662 = vcombine.high %v4560, %v4568
  %v4664 = vunpack.c.l.s4 1983009808
  %v4665 = vunpack.c.0.s8 %v4664
  %v4666 = vlaneseq
  %v4667 = vshrl.u32 %v4666, 7
  %v4668 = vsub.s32 %v4665, %v4667
  %v4669 = vrot.slane %v4661, %v4668
  %v4671 = vunpack.c.l.s4 1983009808
  %v4672 = vunpack.c.0.s8 %v4671
  %v4673 = vlaneseq
  %v4674 = vshrl.u32 %v4673, 7
  %v4675 = vsub.s32 %v4672, %v4674
  %v4676 = vrot.slane %v4662, %v4675
  %v4677 = vcombine.low %v4653, %v4669
  %v4678 = vcombine.high %v4653, %v4669
  %v4680 = vunpack.c.l.s4 1934713408
  %v4681 = vunpack.c.0.s8 %v4680
  %v4682 = vlaneseq
  %v4683 = vshrl.u32 %v4682, 7
  %v4684 = vsub.s32 %v4681, %v4683
  %v4685 = vrot.slane %v4677, %v4684
  %v4687 = vunpack.c.l.s4 1934713408
  %v4688 = vunpack.c.0.s8 %v4687
  %v4689 = vlaneseq
  %v4690 = vshrl.u32 %v4689, 7
  %v4691 = vsub.s32 %v4688, %v4690
  %v4692 = vrot.slane %v4678, %v4691
  %v4693 = vcombine.low %v4660, %v4676
  %v4694 = vcombine.high %v4660, %v4676
  %v4696 = vunpack.c.l.s4 1934713408
  %v4697 = vunpack.c.0.s8 %v4696
  %v4698 = vlaneseq
  %v4699 = vshrl.u32 %v4698, 7
  %v4700 = vsub.s32 %v4697, %v4699
  %v4701 = vrot.slane %v4693, %v4700
  %v4703 = vunpack.c.l.s4 1934713408
  %v4704 = vunpack.c.0.s8 %v4703
  %v4705 = vlaneseq
  %v4706 = vshrl.u32 %v4705, 7
  %v4707 = vsub.s32 %v4704, %v4706
  %v4708 = vrot.slane %v4694, %v4707
  %v4709 = vcombine.high %v4685, 0.0
  %v4710 = vcombine.high %v4692, 0.0
  %v4711 = vcombine.high %v4701, 0.0
  %v4712 = vcombine.high %v4708, 0.0
  %4714 = vrot.lane.b32.xlu0 %v4641, 16
  %v4715 = vpop.permute.xlu0 %4714
  %4718 = vrot.lane.b32.xlu0 %v4624, 32
  %v4719 = vpop.permute.xlu0 %4718
  %4722 = vrot.lane.b32.xlu0 %v4642, 48
  %v4723 = vpop.permute.xlu0 %4722
  %4726 = vrot.lane.b32.xlu0 %v4633, 64
  %v4727 = vpop.permute.xlu0 %4726
  %4730 = vrot.lane.b32.xlu0 %v4643, 80
  %v4731 = vpop.permute.xlu0 %4730
  %4734 = vrot.lane.b32.xlu0 %v4640, 96
  %v4735 = vpop.permute.xlu0 %4734
  %4738 = vrot.lane.b32.xlu0 %v4644, 112
  %v4739 = vpop.permute.xlu0 %4738
  %4742 = vrot.lane.b32.xlu0 %v4709, 16
  %v4743 = vpop.permute.xlu0 %4742
  %4746 = vrot.lane.b32.xlu0 %v4692, 32
  %v4747 = vpop.permute.xlu0 %4746
  %4750 = vrot.lane.b32.xlu0 %v4710, 48
  %v4751 = vpop.permute.xlu0 %4750
  %4754 = vrot.lane.b32.xlu0 %v4701, 64
  %v4755 = vpop.permute.xlu0 %4754
  %4758 = vrot.lane.b32.xlu0 %v4711, 80
  %v4759 = vpop.permute.xlu0 %4758
  %4762 = vrot.lane.b32.xlu0 %v4708, 96
  %v4763 = vpop.permute.xlu0 %4762
  %4766 = vrot.lane.b32.xlu0 %v4712, 112
  %v4767 = vpop.permute.xlu0 %4766
  %v4769 = vsel %vm342, %v4617, %v4715
  %v4770 = vsel %vm344, %v4769, %v4719
  %v4771 = vsel %vm346, %v4770, %v4723
  %v4772 = vsel %vm348, %v4771, %v4727
  %v4773 = vsel %vm350, %v4772, %v4731
  %v4774 = vsel %vm352, %v4773, %v4735
  %v4775 = vsel %vm354, %v4774, %v4739
  %v4776 = vsel %vm342, %v4685, %v4743
  %v4777 = vsel %vm344, %v4776, %v4747
  %v4778 = vsel %vm346, %v4777, %v4751
  %v4779 = vsel %vm348, %v4778, %v4755
  %v4780 = vsel %vm350, %v4779, %v4759
  %v4781 = vsel %vm352, %v4780, %v4763
  %v4782 = vsel %vm354, %v4781, %v4767
  %v4783 = vld [vmem:[%s1947] sm:$0xff]
  %v4785 = vsel %vm604, %v4783, 0
  %v4788 = vsel %vm608, %v4775, 0
  %v4791 = vsel %vm608, %v4782, 0
  %4793 = vmatprep.subr.mxu0 %v4791
  %4794 = vmatpush1.msra.mxu0 %v4788
  %4795 = vmatprep.subr.mxu0 0.0
  %4796 = vmatpush1.msra.mxu0 0.0
  %4797 = vmatprep.subr.mxu0 0.0
  %4798 = vmatpush1.msra.mxu0 0.0
  %4799 = vmatprep.subr.mxu0 0.0
  %4800 = vmatpush1.msra.mxu0 0.0
  %4801 = vmatprep.subr.mxu0 0.0
  %4802 = vmatpush1.msra.mxu0 0.0
  %4803 = vmatprep.subr.mxu0 0.0
  %4804 = vmatpush1.msra.mxu0 0.0
  %4805 = vmatprep.subr.mxu0 0.0
  %4806 = vmatpush1.msra.mxu0 0.0
  %4807 = vmatprep.subr.mxu0 0.0
  %4808 = vmatpush1.msra.mxu0 0.0
  %4809 = vmatprep.subr.mxu0 0.0
  %4810 = vmatpush1.msra.mxu0 0.0
  %4811 = vmatprep.subr.mxu0 0.0
  %4812 = vmatpush1.msra.mxu0 0.0
  %4813 = vmatprep.subr.mxu0 0.0
  %4814 = vmatpush1.msra.mxu0 0.0
  %4815 = vmatprep.subr.mxu0 0.0
  %4816 = vmatpush1.msra.mxu0 0.0
  %4817 = vmatprep.subr.mxu0 0.0
  %4818 = vmatpush1.msra.mxu0 0.0
  %4819 = vmatprep.subr.mxu0 0.0
  %4820 = vmatpush1.msra.mxu0 0.0
  %4821 = vmatprep.subr.mxu0 0.0
  %4822 = vmatpush1.msra.mxu0 0.0
  %4823 = vmatprep.subr.mxu0 0.0
  %4824 = vmatpush1.msra.mxu0 0.0
  %4825 = vmatprep.subr.mxu0 0.0
  %4826 = vmatpush1.msra.mxu0 0.0
  %4827 = vmatprep.subr.mxu0 0.0
  %4828 = vmatpush1.msra.mxu0 0.0
  %4829 = vmatprep.subr.mxu0 0.0
  %4830 = vmatpush1.msra.mxu0 0.0
  %4831 = vmatprep.subr.mxu0 0.0
  %4832 = vmatpush1.msra.mxu0 0.0
  %4833 = vmatprep.subr.mxu0 0.0
  %4834 = vmatpush1.msra.mxu0 0.0
  %4835 = vmatprep.subr.mxu0 0.0
  %4836 = vmatpush1.msra.mxu0 0.0
  %4837 = vmatprep.subr.mxu0 0.0
  %4838 = vmatpush1.msra.mxu0 0.0
  %4839 = vmatprep.subr.mxu0 0.0
  %4840 = vmatpush1.msra.mxu0 0.0
  %4841 = vmatprep.subr.mxu0 0.0
  %4842 = vmatpush1.msra.mxu0 0.0
  %4843 = vmatprep.subr.mxu0 0.0
  %4844 = vmatpush1.msra.mxu0 0.0
  %4845 = vmatprep.subr.mxu0 0.0
  %4846 = vmatpush1.msra.mxu0 0.0
  %4847 = vmatprep.subr.mxu0 0.0
  %4848 = vmatpush1.msra.mxu0 0.0
  %4849 = vmatprep.subr.mxu0 0.0
  %4850 = vmatpush1.msra.mxu0 0.0
  %4851 = vmatprep.subr.mxu0 0.0
  %4852 = vmatpush1.msra.mxu0 0.0
  %4853 = vmatprep.subr.mxu0 0.0
  %4854 = vmatpush1.msra.mxu0 0.0
  %4855 = vmatprep.subr.mxu0 0.0
  %4856 = vmatpush1.msra.mxu0 0.0
  %4857 = vmatprep.mubr.f32.mxu0 0.0
  %4858 = vmatmul.mubr.f32.gmra.mrb[0].mxu0 %v4785
  %v4859 = vpop.f32.mrb[0].mxu0
  %v4860 = vadd.f32 0.0, %v4859
  %v4861 = vpop.f32.mrb[0].mxu0
  %v4862 = vadd.f32 0.0, %v4861
  %4863 = vdwg.mxu0
  %v4864 = vadd.f32 %v4551, %v4860
  %v4865 = vadd.f32 %v4552, %v4862
  %v4866 = vrot.slane %v2988, 2
  %v4867 = vrot.slane %v2989, 2
  %v4868 = vsel %vm2031, %v4866, %v4867
  %v4869 = vrot.slane %v2990, 2
  %v4870 = vsel %vm2031, %v4867, %v4869
  %v4871 = vrot.slane %v2991, 2
  %v4872 = vrot.slane %v2992, 2
  %v4873 = vsel %vm2031, %v4871, %v4872
  %v4874 = vrot.slane %v2993, 2
  %v4875 = vsel %vm2031, %v4872, %v4874
  %v4876 = vrot.slane %v2994, 2
  %v4877 = vrot.slane %v2995, 2
  %v4878 = vsel %vm2031, %v4876, %v4877
  %v4879 = vrot.slane %v2996, 2
  %v4880 = vsel %vm2031, %v4877, %v4879
  %v4881 = vrot.slane %v2997, 2
  %v4882 = vrot.slane %v2998, 2
  %v4883 = vsel %vm2031, %v4881, %v4882
  %v4884 = vrot.slane %v2999, 2
  %v4885 = vsel %vm2031, %v4882, %v4884
  %v4894 = vcombine.low %v4868, %v4878
  %v4895 = vcombine.high %v4868, %v4878
  %v4897 = vunpack.c.l.s4 1983009808
  %v4898 = vunpack.c.0.s8 %v4897
  %v4899 = vlaneseq
  %v4900 = vshrl.u32 %v4899, 7
  %v4901 = vsub.s32 %v4898, %v4900
  %v4902 = vrot.slane %v4894, %v4901
  %v4904 = vunpack.c.l.s4 1983009808
  %v4905 = vunpack.c.0.s8 %v4904
  %v4906 = vlaneseq
  %v4907 = vshrl.u32 %v4906, 7
  %v4908 = vsub.s32 %v4905, %v4907
  %v4909 = vrot.slane %v4895, %v4908
  %v4910 = vcombine.low %v4873, %v4883
  %v4911 = vcombine.high %v4873, %v4883
  %v4913 = vunpack.c.l.s4 1983009808
  %v4914 = vunpack.c.0.s8 %v4913
  %v4915 = vlaneseq
  %v4916 = vshrl.u32 %v4915, 7
  %v4917 = vsub.s32 %v4914, %v4916
  %v4918 = vrot.slane %v4910, %v4917
  %v4920 = vunpack.c.l.s4 1983009808
  %v4921 = vunpack.c.0.s8 %v4920
  %v4922 = vlaneseq
  %v4923 = vshrl.u32 %v4922, 7
  %v4924 = vsub.s32 %v4921, %v4923
  %v4925 = vrot.slane %v4911, %v4924
  %v4926 = vcombine.low %v4902, %v4918
  %v4927 = vcombine.high %v4902, %v4918
  %v4929 = vunpack.c.l.s4 1934713408
  %v4930 = vunpack.c.0.s8 %v4929
  %v4931 = vlaneseq
  %v4932 = vshrl.u32 %v4931, 7
  %v4933 = vsub.s32 %v4930, %v4932
  %v4934 = vrot.slane %v4926, %v4933
  %v4936 = vunpack.c.l.s4 1934713408
  %v4937 = vunpack.c.0.s8 %v4936
  %v4938 = vlaneseq
  %v4939 = vshrl.u32 %v4938, 7
  %v4940 = vsub.s32 %v4937, %v4939
  %v4941 = vrot.slane %v4927, %v4940
  %v4942 = vcombine.low %v4909, %v4925
  %v4943 = vcombine.high %v4909, %v4925
  %v4945 = vunpack.c.l.s4 1934713408
  %v4946 = vunpack.c.0.s8 %v4945
  %v4947 = vlaneseq
  %v4948 = vshrl.u32 %v4947, 7
  %v4949 = vsub.s32 %v4946, %v4948
  %v4950 = vrot.slane %v4942, %v4949
  %v4952 = vunpack.c.l.s4 1934713408
  %v4953 = vunpack.c.0.s8 %v4952
  %v4954 = vlaneseq
  %v4955 = vshrl.u32 %v4954, 7
  %v4956 = vsub.s32 %v4953, %v4955
  %v4957 = vrot.slane %v4943, %v4956
  %v4958 = vcombine.high %v4934, 0.0
  %v4959 = vcombine.high %v4941, 0.0
  %v4960 = vcombine.high %v4950, 0.0
  %v4961 = vcombine.high %v4957, 0.0
  %v4962 = vcombine.low %v4870, %v4880
  %v4963 = vcombine.high %v4870, %v4880
  %v4965 = vunpack.c.l.s4 1983009808
  %v4966 = vunpack.c.0.s8 %v4965
  %v4967 = vlaneseq
  %v4968 = vshrl.u32 %v4967, 7
  %v4969 = vsub.s32 %v4966, %v4968
  %v4970 = vrot.slane %v4962, %v4969
  %v4972 = vunpack.c.l.s4 1983009808
  %v4973 = vunpack.c.0.s8 %v4972
  %v4974 = vlaneseq
  %v4975 = vshrl.u32 %v4974, 7
  %v4976 = vsub.s32 %v4973, %v4975
  %v4977 = vrot.slane %v4963, %v4976
  %v4978 = vcombine.low %v4875, %v4885
  %v4979 = vcombine.high %v4875, %v4885
  %v4981 = vunpack.c.l.s4 1983009808
  %v4982 = vunpack.c.0.s8 %v4981
  %v4983 = vlaneseq
  %v4984 = vshrl.u32 %v4983, 7
  %v4985 = vsub.s32 %v4982, %v4984
  %v4986 = vrot.slane %v4978, %v4985
  %v4988 = vunpack.c.l.s4 1983009808
  %v4989 = vunpack.c.0.s8 %v4988
  %v4990 = vlaneseq
  %v4991 = vshrl.u32 %v4990, 7
  %v4992 = vsub.s32 %v4989, %v4991
  %v4993 = vrot.slane %v4979, %v4992
  %v4994 = vcombine.low %v4970, %v4986
  %v4995 = vcombine.high %v4970, %v4986
  %v4997 = vunpack.c.l.s4 1934713408
  %v4998 = vunpack.c.0.s8 %v4997
  %v4999 = vlaneseq
  %v5000 = vshrl.u32 %v4999, 7
  %v5001 = vsub.s32 %v4998, %v5000
  %v5002 = vrot.slane %v4994, %v5001
  %v5004 = vunpack.c.l.s4 1934713408
  %v5005 = vunpack.c.0.s8 %v5004
  %v5006 = vlaneseq
  %v5007 = vshrl.u32 %v5006, 7
  %v5008 = vsub.s32 %v5005, %v5007
  %v5009 = vrot.slane %v4995, %v5008
  %v5010 = vcombine.low %v4977, %v4993
  %v5011 = vcombine.high %v4977, %v4993
  %v5013 = vunpack.c.l.s4 1934713408
  %v5014 = vunpack.c.0.s8 %v5013
  %v5015 = vlaneseq
  %v5016 = vshrl.u32 %v5015, 7
  %v5017 = vsub.s32 %v5014, %v5016
  %v5018 = vrot.slane %v5010, %v5017
  %v5020 = vunpack.c.l.s4 1934713408
  %v5021 = vunpack.c.0.s8 %v5020
  %v5022 = vlaneseq
  %v5023 = vshrl.u32 %v5022, 7
  %v5024 = vsub.s32 %v5021, %v5023
  %v5025 = vrot.slane %v5011, %v5024
  %v5026 = vcombine.high %v5002, 0.0
  %v5027 = vcombine.high %v5009, 0.0
  %v5028 = vcombine.high %v5018, 0.0
  %v5029 = vcombine.high %v5025, 0.0
  %5031 = vrot.lane.b32.xlu0 %v4958, 16
  %v5032 = vpop.permute.xlu0 %5031
  %5035 = vrot.lane.b32.xlu0 %v4941, 32
  %v5036 = vpop.permute.xlu0 %5035
  %5039 = vrot.lane.b32.xlu0 %v4959, 48
  %v5040 = vpop.permute.xlu0 %5039
  %5043 = vrot.lane.b32.xlu0 %v4950, 64
  %v5044 = vpop.permute.xlu0 %5043
  %5047 = vrot.lane.b32.xlu0 %v4960, 80
  %v5048 = vpop.permute.xlu0 %5047
  %5051 = vrot.lane.b32.xlu0 %v4957, 96
  %v5052 = vpop.permute.xlu0 %5051
  %5055 = vrot.lane.b32.xlu0 %v4961, 112
  %v5056 = vpop.permute.xlu0 %5055
  %5059 = vrot.lane.b32.xlu0 %v5026, 16
  %v5060 = vpop.permute.xlu0 %5059
  %5063 = vrot.lane.b32.xlu0 %v5009, 32
  %v5064 = vpop.permute.xlu0 %5063
  %5067 = vrot.lane.b32.xlu0 %v5027, 48
  %v5068 = vpop.permute.xlu0 %5067
  %5071 = vrot.lane.b32.xlu0 %v5018, 64
  %v5072 = vpop.permute.xlu0 %5071
  %5075 = vrot.lane.b32.xlu0 %v5028, 80
  %v5076 = vpop.permute.xlu0 %5075
  %5079 = vrot.lane.b32.xlu0 %v5025, 96
  %v5080 = vpop.permute.xlu0 %5079
  %5083 = vrot.lane.b32.xlu0 %v5029, 112
  %v5084 = vpop.permute.xlu0 %5083
  %v5086 = vsel %vm342, %v4934, %v5032
  %v5087 = vsel %vm344, %v5086, %v5036
  %v5088 = vsel %vm346, %v5087, %v5040
  %v5089 = vsel %vm348, %v5088, %v5044
  %v5090 = vsel %vm350, %v5089, %v5048
  %v5091 = vsel %vm352, %v5090, %v5052
  %v5092 = vsel %vm354, %v5091, %v5056
  %v5093 = vsel %vm342, %v5002, %v5060
  %v5094 = vsel %vm344, %v5093, %v5064
  %v5095 = vsel %vm346, %v5094, %v5068
  %v5096 = vsel %vm348, %v5095, %v5072
  %v5097 = vsel %vm350, %v5096, %v5076
  %v5098 = vsel %vm352, %v5097, %v5080
  %v5099 = vsel %vm354, %v5098, %v5084
  %v5100 = vld [vmem:[%s2266] sm:$0xff]
  %v5102 = vsel %vm604, %v5100, 0
  %v5105 = vsel %vm608, %v5092, 0
  %v5108 = vsel %vm608, %v5099, 0
  %5110 = vmatprep.subr.mxu0 %v5108
  %5111 = vmatpush1.msra.mxu0 %v5105
  %5112 = vmatprep.subr.mxu0 0.0
  %5113 = vmatpush1.msra.mxu0 0.0
  %5114 = vmatprep.subr.mxu0 0.0
  %5115 = vmatpush1.msra.mxu0 0.0
  %5116 = vmatprep.subr.mxu0 0.0
  %5117 = vmatpush1.msra.mxu0 0.0
  %5118 = vmatprep.subr.mxu0 0.0
  %5119 = vmatpush1.msra.mxu0 0.0
  %5120 = vmatprep.subr.mxu0 0.0
  %5121 = vmatpush1.msra.mxu0 0.0
  %5122 = vmatprep.subr.mxu0 0.0
  %5123 = vmatpush1.msra.mxu0 0.0
  %5124 = vmatprep.subr.mxu0 0.0
  %5125 = vmatpush1.msra.mxu0 0.0
  %5126 = vmatprep.subr.mxu0 0.0
  %5127 = vmatpush1.msra.mxu0 0.0
  %5128 = vmatprep.subr.mxu0 0.0
  %5129 = vmatpush1.msra.mxu0 0.0
  %5130 = vmatprep.subr.mxu0 0.0
  %5131 = vmatpush1.msra.mxu0 0.0
  %5132 = vmatprep.subr.mxu0 0.0
  %5133 = vmatpush1.msra.mxu0 0.0
  %5134 = vmatprep.subr.mxu0 0.0
  %5135 = vmatpush1.msra.mxu0 0.0
  %5136 = vmatprep.subr.mxu0 0.0
  %5137 = vmatpush1.msra.mxu0 0.0
  %5138 = vmatprep.subr.mxu0 0.0
  %5139 = vmatpush1.msra.mxu0 0.0
  %5140 = vmatprep.subr.mxu0 0.0
  %5141 = vmatpush1.msra.mxu0 0.0
  %5142 = vmatprep.subr.mxu0 0.0
  %5143 = vmatpush1.msra.mxu0 0.0
  %5144 = vmatprep.subr.mxu0 0.0
  %5145 = vmatpush1.msra.mxu0 0.0
  %5146 = vmatprep.subr.mxu0 0.0
  %5147 = vmatpush1.msra.mxu0 0.0
  %5148 = vmatprep.subr.mxu0 0.0
  %5149 = vmatpush1.msra.mxu0 0.0
  %5150 = vmatprep.subr.mxu0 0.0
  %5151 = vmatpush1.msra.mxu0 0.0
  %5152 = vmatprep.subr.mxu0 0.0
  %5153 = vmatpush1.msra.mxu0 0.0
  %5154 = vmatprep.subr.mxu0 0.0
  %5155 = vmatpush1.msra.mxu0 0.0
  %5156 = vmatprep.subr.mxu0 0.0
  %5157 = vmatpush1.msra.mxu0 0.0
  %5158 = vmatprep.subr.mxu0 0.0
  %5159 = vmatpush1.msra.mxu0 0.0
  %5160 = vmatprep.subr.mxu0 0.0
  %5161 = vmatpush1.msra.mxu0 0.0
  %5162 = vmatprep.subr.mxu0 0.0
  %5163 = vmatpush1.msra.mxu0 0.0
  %5164 = vmatprep.subr.mxu0 0.0
  %5165 = vmatpush1.msra.mxu0 0.0
  %5166 = vmatprep.subr.mxu0 0.0
  %5167 = vmatpush1.msra.mxu0 0.0
  %5168 = vmatprep.subr.mxu0 0.0
  %5169 = vmatpush1.msra.mxu0 0.0
  %5170 = vmatprep.subr.mxu0 0.0
  %5171 = vmatpush1.msra.mxu0 0.0
  %5172 = vmatprep.subr.mxu0 0.0
  %5173 = vmatpush1.msra.mxu0 0.0
  %5174 = vmatprep.mubr.f32.mxu0 0.0
  %5175 = vmatmul.mubr.f32.gmra.mrb[0].mxu0 %v5102
  %v5176 = vpop.f32.mrb[0].mxu0
  %v5177 = vadd.f32 0.0, %v5176
  %v5178 = vpop.f32.mrb[0].mxu0
  %v5179 = vadd.f32 0.0, %v5178
  %5180 = vdwg.mxu0
  %v5181 = vadd.f32 %v4864, %v5177
  %v5182 = vadd.f32 %v4865, %v5179
  %5183 = vrot.lane.b32.xlu0 %v4868, 127
  %v5184 = vpop.permute.xlu0 %5183
  %5185 = vrot.lane.b32.xlu0 %v4870, 127
  %v5186 = vpop.permute.xlu0 %5185
  %5187 = vrot.lane.b32.xlu0 %v4873, 127
  %v5188 = vpop.permute.xlu0 %5187
  %5189 = vrot.lane.b32.xlu0 %v4875, 127
  %v5190 = vpop.permute.xlu0 %5189
  %5191 = vrot.lane.b32.xlu0 %v4878, 127
  %v5192 = vpop.permute.xlu0 %5191
  %5193 = vrot.lane.b32.xlu0 %v4880, 127
  %v5194 = vpop.permute.xlu0 %5193
  %5195 = vrot.lane.b32.xlu0 %v4883, 127
  %v5196 = vpop.permute.xlu0 %5195
  %5197 = vrot.lane.b32.xlu0 %v4885, 127
  %v5198 = vpop.permute.xlu0 %5197
  %v5207 = vcombine.low %v5184, %v5192
  %v5208 = vcombine.high %v5184, %v5192
  %v5210 = vunpack.c.l.s4 1983009808
  %v5211 = vunpack.c.0.s8 %v5210
  %v5212 = vlaneseq
  %v5213 = vshrl.u32 %v5212, 7
  %v5214 = vsub.s32 %v5211, %v5213
  %v5215 = vrot.slane %v5207, %v5214
  %v5217 = vunpack.c.l.s4 1983009808
  %v5218 = vunpack.c.0.s8 %v5217
  %v5219 = vlaneseq
  %v5220 = vshrl.u32 %v5219, 7
  %v5221 = vsub.s32 %v5218, %v5220
  %v5222 = vrot.slane %v5208, %v5221
  %v5223 = vcombine.low %v5188, %v5196
  %v5224 = vcombine.high %v5188, %v5196
  %v5226 = vunpack.c.l.s4 1983009808
  %v5227 = vunpack.c.0.s8 %v5226
  %v5228 = vlaneseq
  %v5229 = vshrl.u32 %v5228, 7
  %v5230 = vsub.s32 %v5227, %v5229
  %v5231 = vrot.slane %v5223, %v5230
  %v5233 = vunpack.c.l.s4 1983009808
  %v5234 = vunpack.c.0.s8 %v5233
  %v5235 = vlaneseq
  %v5236 = vshrl.u32 %v5235, 7
  %v5237 = vsub.s32 %v5234, %v5236
  %v5238 = vrot.slane %v5224, %v5237
  %v5239 = vcombine.low %v5215, %v5231
  %v5240 = vcombine.high %v5215, %v5231
  %v5242 = vunpack.c.l.s4 1934713408
  %v5243 = vunpack.c.0.s8 %v5242
  %v5244 = vlaneseq
  %v5245 = vshrl.u32 %v5244, 7
  %v5246 = vsub.s32 %v5243, %v5245
  %v5247 = vrot.slane %v5239, %v5246
  %v5249 = vunpack.c.l.s4 1934713408
  %v5250 = vunpack.c.0.s8 %v5249
  %v5251 = vlaneseq
  %v5252 = vshrl.u32 %v5251, 7
  %v5253 = vsub.s32 %v5250, %v5252
  %v5254 = vrot.slane %v5240, %v5253
  %v5255 = vcombine.low %v5222, %v5238
  %v5256 = vcombine.high %v5222, %v5238
  %v5258 = vunpack.c.l.s4 1934713408
  %v5259 = vunpack.c.0.s8 %v5258
  %v5260 = vlaneseq
  %v5261 = vshrl.u32 %v5260, 7
  %v5262 = vsub.s32 %v5259, %v5261
  %v5263 = vrot.slane %v5255, %v5262
  %v5265 = vunpack.c.l.s4 1934713408
  %v5266 = vunpack.c.0.s8 %v5265
  %v5267 = vlaneseq
  %v5268 = vshrl.u32 %v5267, 7
  %v5269 = vsub.s32 %v5266, %v5268
  %v5270 = vrot.slane %v5256, %v5269
  %v5271 = vcombine.high %v5247, 0.0
  %v5272 = vcombine.high %v5254, 0.0
  %v5273 = vcombine.high %v5263, 0.0
  %v5274 = vcombine.high %v5270, 0.0
  %v5275 = vcombine.low %v5186, %v5194
  %v5276 = vcombine.high %v5186, %v5194
  %v5278 = vunpack.c.l.s4 1983009808
  %v5279 = vunpack.c.0.s8 %v5278
  %v5280 = vlaneseq
  %v5281 = vshrl.u32 %v5280, 7
  %v5282 = vsub.s32 %v5279, %v5281
  %v5283 = vrot.slane %v5275, %v5282
  %v5285 = vunpack.c.l.s4 1983009808
  %v5286 = vunpack.c.0.s8 %v5285
  %v5287 = vlaneseq
  %v5288 = vshrl.u32 %v5287, 7
  %v5289 = vsub.s32 %v5286, %v5288
  %v5290 = vrot.slane %v5276, %v5289
  %v5291 = vcombine.low %v5190, %v5198
  %v5292 = vcombine.high %v5190, %v5198
  %v5294 = vunpack.c.l.s4 1983009808
  %v5295 = vunpack.c.0.s8 %v5294
  %v5296 = vlaneseq
  %v5297 = vshrl.u32 %v5296, 7
  %v5298 = vsub.s32 %v5295, %v5297
  %v5299 = vrot.slane %v5291, %v5298
  %v5301 = vunpack.c.l.s4 1983009808
  %v5302 = vunpack.c.0.s8 %v5301
  %v5303 = vlaneseq
  %v5304 = vshrl.u32 %v5303, 7
  %v5305 = vsub.s32 %v5302, %v5304
  %v5306 = vrot.slane %v5292, %v5305
  %v5307 = vcombine.low %v5283, %v5299
  %v5308 = vcombine.high %v5283, %v5299
  %v5310 = vunpack.c.l.s4 1934713408
  %v5311 = vunpack.c.0.s8 %v5310
  %v5312 = vlaneseq
  %v5313 = vshrl.u32 %v5312, 7
  %v5314 = vsub.s32 %v5311, %v5313
  %v5315 = vrot.slane %v5307, %v5314
  %v5317 = vunpack.c.l.s4 1934713408
  %v5318 = vunpack.c.0.s8 %v5317
  %v5319 = vlaneseq
  %v5320 = vshrl.u32 %v5319, 7
  %v5321 = vsub.s32 %v5318, %v5320
  %v5322 = vrot.slane %v5308, %v5321
  %v5323 = vcombine.low %v5290, %v5306
  %v5324 = vcombine.high %v5290, %v5306
  %v5326 = vunpack.c.l.s4 1934713408
  %v5327 = vunpack.c.0.s8 %v5326
  %v5328 = vlaneseq
  %v5329 = vshrl.u32 %v5328, 7
  %v5330 = vsub.s32 %v5327, %v5329
  %v5331 = vrot.slane %v5323, %v5330
  %v5333 = vunpack.c.l.s4 1934713408
  %v5334 = vunpack.c.0.s8 %v5333
  %v5335 = vlaneseq
  %v5336 = vshrl.u32 %v5335, 7
  %v5337 = vsub.s32 %v5334, %v5336
  %v5338 = vrot.slane %v5324, %v5337
  %v5339 = vcombine.high %v5315, 0.0
  %v5340 = vcombine.high %v5322, 0.0
  %v5341 = vcombine.high %v5331, 0.0
  %v5342 = vcombine.high %v5338, 0.0
  %5344 = vrot.lane.b32.xlu0 %v5271, 16
  %v5345 = vpop.permute.xlu0 %5344
  %5348 = vrot.lane.b32.xlu0 %v5254, 32
  %v5349 = vpop.permute.xlu0 %5348
  %5352 = vrot.lane.b32.xlu0 %v5272, 48
  %v5353 = vpop.permute.xlu0 %5352
  %5356 = vrot.lane.b32.xlu0 %v5263, 64
  %v5357 = vpop.permute.xlu0 %5356
  %5360 = vrot.lane.b32.xlu0 %v5273, 80
  %v5361 = vpop.permute.xlu0 %5360
  %5364 = vrot.lane.b32.xlu0 %v5270, 96
  %v5365 = vpop.permute.xlu0 %5364
  %5368 = vrot.lane.b32.xlu0 %v5274, 112
  %v5369 = vpop.permute.xlu0 %5368
  %5372 = vrot.lane.b32.xlu0 %v5339, 16
  %v5373 = vpop.permute.xlu0 %5372
  %5376 = vrot.lane.b32.xlu0 %v5322, 32
  %v5377 = vpop.permute.xlu0 %5376
  %5380 = vrot.lane.b32.xlu0 %v5340, 48
  %v5381 = vpop.permute.xlu0 %5380
  %5384 = vrot.lane.b32.xlu0 %v5331, 64
  %v5385 = vpop.permute.xlu0 %5384
  %5388 = vrot.lane.b32.xlu0 %v5341, 80
  %v5389 = vpop.permute.xlu0 %5388
  %5392 = vrot.lane.b32.xlu0 %v5338, 96
  %v5393 = vpop.permute.xlu0 %5392
  %5396 = vrot.lane.b32.xlu0 %v5342, 112
  %v5397 = vpop.permute.xlu0 %5396
  %v5399 = vsel %vm342, %v5247, %v5345
  %v5400 = vsel %vm344, %v5399, %v5349
  %v5401 = vsel %vm346, %v5400, %v5353
  %v5402 = vsel %vm348, %v5401, %v5357
  %v5403 = vsel %vm350, %v5402, %v5361
  %v5404 = vsel %vm352, %v5403, %v5365
  %v5405 = vsel %vm354, %v5404, %v5369
  %v5406 = vsel %vm342, %v5315, %v5373
  %v5407 = vsel %vm344, %v5406, %v5377
  %v5408 = vsel %vm346, %v5407, %v5381
  %v5409 = vsel %vm348, %v5408, %v5385
  %v5410 = vsel %vm350, %v5409, %v5389
  %v5411 = vsel %vm352, %v5410, %v5393
  %v5412 = vsel %vm354, %v5411, %v5397
  %v5413 = vld [vmem:[%s2580] sm:$0xff]
  %v5415 = vsel %vm604, %v5413, 0
  %v5418 = vsel %vm608, %v5405, 0
  %v5421 = vsel %vm608, %v5412, 0
  %5423 = vmatprep.subr.mxu0 %v5421
  %5424 = vmatpush1.msra.mxu0 %v5418
  %5425 = vmatprep.subr.mxu0 0.0
  %5426 = vmatpush1.msra.mxu0 0.0
  %5427 = vmatprep.subr.mxu0 0.0
  %5428 = vmatpush1.msra.mxu0 0.0
  %5429 = vmatprep.subr.mxu0 0.0
  %5430 = vmatpush1.msra.mxu0 0.0
  %5431 = vmatprep.subr.mxu0 0.0
  %5432 = vmatpush1.msra.mxu0 0.0
  %5433 = vmatprep.subr.mxu0 0.0
  %5434 = vmatpush1.msra.mxu0 0.0
  %5435 = vmatprep.subr.mxu0 0.0
  %5436 = vmatpush1.msra.mxu0 0.0
  %5437 = vmatprep.subr.mxu0 0.0
  %5438 = vmatpush1.msra.mxu0 0.0
  %5439 = vmatprep.subr.mxu0 0.0
  %5440 = vmatpush1.msra.mxu0 0.0
  %5441 = vmatprep.subr.mxu0 0.0
  %5442 = vmatpush1.msra.mxu0 0.0
  %5443 = vmatprep.subr.mxu0 0.0
  %5444 = vmatpush1.msra.mxu0 0.0
  %5445 = vmatprep.subr.mxu0 0.0
  %5446 = vmatpush1.msra.mxu0 0.0
  %5447 = vmatprep.subr.mxu0 0.0
  %5448 = vmatpush1.msra.mxu0 0.0
  %5449 = vmatprep.subr.mxu0 0.0
  %5450 = vmatpush1.msra.mxu0 0.0
  %5451 = vmatprep.subr.mxu0 0.0
  %5452 = vmatpush1.msra.mxu0 0.0
  %5453 = vmatprep.subr.mxu0 0.0
  %5454 = vmatpush1.msra.mxu0 0.0
  %5455 = vmatprep.subr.mxu0 0.0
  %5456 = vmatpush1.msra.mxu0 0.0
  %5457 = vmatprep.subr.mxu0 0.0
  %5458 = vmatpush1.msra.mxu0 0.0
  %5459 = vmatprep.subr.mxu0 0.0
  %5460 = vmatpush1.msra.mxu0 0.0
  %5461 = vmatprep.subr.mxu0 0.0
  %5462 = vmatpush1.msra.mxu0 0.0
  %5463 = vmatprep.subr.mxu0 0.0
  %5464 = vmatpush1.msra.mxu0 0.0
  %5465 = vmatprep.subr.mxu0 0.0
  %5466 = vmatpush1.msra.mxu0 0.0
  %5467 = vmatprep.subr.mxu0 0.0
  %5468 = vmatpush1.msra.mxu0 0.0
  %5469 = vmatprep.subr.mxu0 0.0
  %5470 = vmatpush1.msra.mxu0 0.0
  %5471 = vmatprep.subr.mxu0 0.0
  %5472 = vmatpush1.msra.mxu0 0.0
  %5473 = vmatprep.subr.mxu0 0.0
  %5474 = vmatpush1.msra.mxu0 0.0
  %5475 = vmatprep.subr.mxu0 0.0
  %5476 = vmatpush1.msra.mxu0 0.0
  %5477 = vmatprep.subr.mxu0 0.0
  %5478 = vmatpush1.msra.mxu0 0.0
  %5479 = vmatprep.subr.mxu0 0.0
  %5480 = vmatpush1.msra.mxu0 0.0
  %5481 = vmatprep.subr.mxu0 0.0
  %5482 = vmatpush1.msra.mxu0 0.0
  %5483 = vmatprep.subr.mxu0 0.0
  %5484 = vmatpush1.msra.mxu0 0.0
  %5485 = vmatprep.subr.mxu0 0.0
  %5486 = vmatpush1.msra.mxu0 0.0
  %5487 = vmatprep.mubr.f32.mxu0 0.0
  %5488 = vmatmul.mubr.f32.gmra.mrb[0].mxu0 %v5415
  %v5489 = vpop.f32.mrb[0].mxu0
  %v5490 = vadd.f32 0.0, %v5489
  %v5491 = vpop.f32.mrb[0].mxu0
  %v5492 = vadd.f32 0.0, %v5491
  %5493 = vdwg.mxu0
  %v5494 = vadd.f32 %v5181, %v5490
  %v5495 = vadd.f32 %v5182, %v5492
  %5496 = vrot.lane.b32.xlu0 %v4868, 126
  %v5497 = vpop.permute.xlu0 %5496
  %5498 = vrot.lane.b32.xlu0 %v4870, 126
  %v5499 = vpop.permute.xlu0 %5498
  %5500 = vrot.lane.b32.xlu0 %v4873, 126
  %v5501 = vpop.permute.xlu0 %5500
  %5502 = vrot.lane.b32.xlu0 %v4875, 126
  %v5503 = vpop.permute.xlu0 %5502
  %5504 = vrot.lane.b32.xlu0 %v4878, 126
  %v5505 = vpop.permute.xlu0 %5504
  %5506 = vrot.lane.b32.xlu0 %v4880, 126
  %v5507 = vpop.permute.xlu0 %5506
  %5508 = vrot.lane.b32.xlu0 %v4883, 126
  %v5509 = vpop.permute.xlu0 %5508
  %5510 = vrot.lane.b32.xlu0 %v4885, 126
  %v5511 = vpop.permute.xlu0 %5510
  %v5520 = vcombine.low %v5497, %v5505
  %v5521 = vcombine.high %v5497, %v5505
  %v5523 = vunpack.c.l.s4 1983009808
  %v5524 = vunpack.c.0.s8 %v5523
  %v5525 = vlaneseq
  %v5526 = vshrl.u32 %v5525, 7
  %v5527 = vsub.s32 %v5524, %v5526
  %v5528 = vrot.slane %v5520, %v5527
  %v5530 = vunpack.c.l.s4 1983009808
  %v5531 = vunpack.c.0.s8 %v5530
  %v5532 = vlaneseq
  %v5533 = vshrl.u32 %v5532, 7
  %v5534 = vsub.s32 %v5531, %v5533
  %v5535 = vrot.slane %v5521, %v5534
  %v5536 = vcombine.low %v5501, %v5509
  %v5537 = vcombine.high %v5501, %v5509
  %v5539 = vunpack.c.l.s4 1983009808
  %v5540 = vunpack.c.0.s8 %v5539
  %v5541 = vlaneseq
  %v5542 = vshrl.u32 %v5541, 7
  %v5543 = vsub.s32 %v5540, %v5542
  %v5544 = vrot.slane %v5536, %v5543
  %v5546 = vunpack.c.l.s4 1983009808
  %v5547 = vunpack.c.0.s8 %v5546
  %v5548 = vlaneseq
  %v5549 = vshrl.u32 %v5548, 7
  %v5550 = vsub.s32 %v5547, %v5549
  %v5551 = vrot.slane %v5537, %v5550
  %v5552 = vcombine.low %v5528, %v5544
  %v5553 = vcombine.high %v5528, %v5544
  %v5555 = vunpack.c.l.s4 1934713408
  %v5556 = vunpack.c.0.s8 %v5555
  %v5557 = vlaneseq
  %v5558 = vshrl.u32 %v5557, 7
  %v5559 = vsub.s32 %v5556, %v5558
  %v5560 = vrot.slane %v5552, %v5559
  %v5562 = vunpack.c.l.s4 1934713408
  %v5563 = vunpack.c.0.s8 %v5562
  %v5564 = vlaneseq
  %v5565 = vshrl.u32 %v5564, 7
  %v5566 = vsub.s32 %v5563, %v5565
  %v5567 = vrot.slane %v5553, %v5566
  %v5568 = vcombine.low %v5535, %v5551
  %v5569 = vcombine.high %v5535, %v5551
  %v5571 = vunpack.c.l.s4 1934713408
  %v5572 = vunpack.c.0.s8 %v5571
  %v5573 = vlaneseq
  %v5574 = vshrl.u32 %v5573, 7
  %v5575 = vsub.s32 %v5572, %v5574
  %v5576 = vrot.slane %v5568, %v5575
  %v5578 = vunpack.c.l.s4 1934713408
  %v5579 = vunpack.c.0.s8 %v5578
  %v5580 = vlaneseq
  %v5581 = vshrl.u32 %v5580, 7
  %v5582 = vsub.s32 %v5579, %v5581
  %v5583 = vrot.slane %v5569, %v5582
  %v5584 = vcombine.high %v5560, 0.0
  %v5585 = vcombine.high %v5567, 0.0
  %v5586 = vcombine.high %v5576, 0.0
  %v5587 = vcombine.high %v5583, 0.0
  %v5588 = vcombine.low %v5499, %v5507
  %v5589 = vcombine.high %v5499, %v5507
  %v5591 = vunpack.c.l.s4 1983009808
  %v5592 = vunpack.c.0.s8 %v5591
  %v5593 = vlaneseq
  %v5594 = vshrl.u32 %v5593, 7
  %v5595 = vsub.s32 %v5592, %v5594
  %v5596 = vrot.slane %v5588, %v5595
  %v5598 = vunpack.c.l.s4 1983009808
  %v5599 = vunpack.c.0.s8 %v5598
  %v5600 = vlaneseq
  %v5601 = vshrl.u32 %v5600, 7
  %v5602 = vsub.s32 %v5599, %v5601
  %v5603 = vrot.slane %v5589, %v5602
  %v5604 = vcombine.low %v5503, %v5511
  %v5605 = vcombine.high %v5503, %v5511
  %v5607 = vunpack.c.l.s4 1983009808
  %v5608 = vunpack.c.0.s8 %v5607
  %v5609 = vlaneseq
  %v5610 = vshrl.u32 %v5609, 7
  %v5611 = vsub.s32 %v5608, %v5610
  %v5612 = vrot.slane %v5604, %v5611
  %v5614 = vunpack.c.l.s4 1983009808
  %v5615 = vunpack.c.0.s8 %v5614
  %v5616 = vlaneseq
  %v5617 = vshrl.u32 %v5616, 7
  %v5618 = vsub.s32 %v5615, %v5617
  %v5619 = vrot.slane %v5605, %v5618
  %v5620 = vcombine.low %v5596, %v5612
  %v5621 = vcombine.high %v5596, %v5612
  %v5623 = vunpack.c.l.s4 1934713408
  %v5624 = vunpack.c.0.s8 %v5623
  %v5625 = vlaneseq
  %v5626 = vshrl.u32 %v5625, 7
  %v5627 = vsub.s32 %v5624, %v5626
  %v5628 = vrot.slane %v5620, %v5627
  %v5630 = vunpack.c.l.s4 1934713408
  %v5631 = vunpack.c.0.s8 %v5630
  %v5632 = vlaneseq
  %v5633 = vshrl.u32 %v5632, 7
  %v5634 = vsub.s32 %v5631, %v5633
  %v5635 = vrot.slane %v5621, %v5634
  %v5636 = vcombine.low %v5603, %v5619
  %v5637 = vcombine.high %v5603, %v5619
  %v5639 = vunpack.c.l.s4 1934713408
  %v5640 = vunpack.c.0.s8 %v5639
  %v5641 = vlaneseq
  %v5642 = vshrl.u32 %v5641, 7
  %v5643 = vsub.s32 %v5640, %v5642
  %v5644 = vrot.slane %v5636, %v5643
  %v5646 = vunpack.c.l.s4 1934713408
  %v5647 = vunpack.c.0.s8 %v5646
  %v5648 = vlaneseq
  %v5649 = vshrl.u32 %v5648, 7
  %v5650 = vsub.s32 %v5647, %v5649
  %v5651 = vrot.slane %v5637, %v5650
  %v5652 = vcombine.high %v5628, 0.0
  %v5653 = vcombine.high %v5635, 0.0
  %v5654 = vcombine.high %v5644, 0.0
  %v5655 = vcombine.high %v5651, 0.0
  %5657 = vrot.lane.b32.xlu0 %v5584, 16
  %v5658 = vpop.permute.xlu0 %5657
  %5661 = vrot.lane.b32.xlu0 %v5567, 32
  %v5662 = vpop.permute.xlu0 %5661
  %5665 = vrot.lane.b32.xlu0 %v5585, 48
  %v5666 = vpop.permute.xlu0 %5665
  %5669 = vrot.lane.b32.xlu0 %v5576, 64
  %v5670 = vpop.permute.xlu0 %5669
  %5673 = vrot.lane.b32.xlu0 %v5586, 80
  %v5674 = vpop.permute.xlu0 %5673
  %5677 = vrot.lane.b32.xlu0 %v5583, 96
  %v5678 = vpop.permute.xlu0 %5677
  %5681 = vrot.lane.b32.xlu0 %v5587, 112
  %v5682 = vpop.permute.xlu0 %5681
  %5685 = vrot.lane.b32.xlu0 %v5652, 16
  %v5686 = vpop.permute.xlu0 %5685
  %5689 = vrot.lane.b32.xlu0 %v5635, 32
  %v5690 = vpop.permute.xlu0 %5689
  %5693 = vrot.lane.b32.xlu0 %v5653, 48
  %v5694 = vpop.permute.xlu0 %5693
  %5697 = vrot.lane.b32.xlu0 %v5644, 64
  %v5698 = vpop.permute.xlu0 %5697
  %5701 = vrot.lane.b32.xlu0 %v5654, 80
  %v5702 = vpop.permute.xlu0 %5701
  %5705 = vrot.lane.b32.xlu0 %v5651, 96
  %v5706 = vpop.permute.xlu0 %5705
  %5709 = vrot.lane.b32.xlu0 %v5655, 112
  %v5710 = vpop.permute.xlu0 %5709
  %v5712 = vsel %vm342, %v5560, %v5658
  %v5713 = vsel %vm344, %v5712, %v5662
  %v5714 = vsel %vm346, %v5713, %v5666
  %v5715 = vsel %vm348, %v5714, %v5670
  %v5716 = vsel %vm350, %v5715, %v5674
  %v5717 = vsel %vm352, %v5716, %v5678
  %v5718 = vsel %vm354, %v5717, %v5682
  %v5719 = vsel %vm342, %v5628, %v5686
  %v5720 = vsel %vm344, %v5719, %v5690
  %v5721 = vsel %vm346, %v5720, %v5694
  %v5722 = vsel %vm348, %v5721, %v5698
  %v5723 = vsel %vm350, %v5722, %v5702
  %v5724 = vsel %vm352, %v5723, %v5706
  %v5725 = vsel %vm354, %v5724, %v5710
  %v5726 = vld [vmem:[%s2894] sm:$0xff]
  %v5728 = vsel %vm604, %v5726, 0
  %v5731 = vsel %vm608, %v5718, 0
  %v5734 = vsel %vm608, %v5725, 0
  %5736 = vmatprep.subr.mxu0 %v5734
  %5737 = vmatpush1.msra.mxu0 %v5731
  %5738 = vmatprep.subr.mxu0 0.0
  %5739 = vmatpush1.msra.mxu0 0.0
  %5740 = vmatprep.subr.mxu0 0.0
  %5741 = vmatpush1.msra.mxu0 0.0
  %5742 = vmatprep.subr.mxu0 0.0
  %5743 = vmatpush1.msra.mxu0 0.0
  %5744 = vmatprep.subr.mxu0 0.0
  %5745 = vmatpush1.msra.mxu0 0.0
  %5746 = vmatprep.subr.mxu0 0.0
  %5747 = vmatpush1.msra.mxu0 0.0
  %5748 = vmatprep.subr.mxu0 0.0
  %5749 = vmatpush1.msra.mxu0 0.0
  %5750 = vmatprep.subr.mxu0 0.0
  %5751 = vmatpush1.msra.mxu0 0.0
  %5752 = vmatprep.subr.mxu0 0.0
  %5753 = vmatpush1.msra.mxu0 0.0
  %5754 = vmatprep.subr.mxu0 0.0
  %5755 = vmatpush1.msra.mxu0 0.0
  %5756 = vmatprep.subr.mxu0 0.0
  %5757 = vmatpush1.msra.mxu0 0.0
  %5758 = vmatprep.subr.mxu0 0.0
  %5759 = vmatpush1.msra.mxu0 0.0
  %5760 = vmatprep.subr.mxu0 0.0
  %5761 = vmatpush1.msra.mxu0 0.0
  %5762 = vmatprep.subr.mxu0 0.0
  %5763 = vmatpush1.msra.mxu0 0.0
  %5764 = vmatprep.subr.mxu0 0.0
  %5765 = vmatpush1.msra.mxu0 0.0
  %5766 = vmatprep.subr.mxu0 0.0
  %5767 = vmatpush1.msra.mxu0 0.0
  %5768 = vmatprep.subr.mxu0 0.0
  %5769 = vmatpush1.msra.mxu0 0.0
  %5770 = vmatprep.subr.mxu0 0.0
  %5771 = vmatpush1.msra.mxu0 0.0
  %5772 = vmatprep.subr.mxu0 0.0
  %5773 = vmatpush1.msra.mxu0 0.0
  %5774 = vmatprep.subr.mxu0 0.0
  %5775 = vmatpush1.msra.mxu0 0.0
  %5776 = vmatprep.subr.mxu0 0.0
  %5777 = vmatpush1.msra.mxu0 0.0
  %5778 = vmatprep.subr.mxu0 0.0
  %5779 = vmatpush1.msra.mxu0 0.0
  %5780 = vmatprep.subr.mxu0 0.0
  %5781 = vmatpush1.msra.mxu0 0.0
  %5782 = vmatprep.subr.mxu0 0.0
  %5783 = vmatpush1.msra.mxu0 0.0
  %5784 = vmatprep.subr.mxu0 0.0
  %5785 = vmatpush1.msra.mxu0 0.0
  %5786 = vmatprep.subr.mxu0 0.0
  %5787 = vmatpush1.msra.mxu0 0.0
  %5788 = vmatprep.subr.mxu0 0.0
  %5789 = vmatpush1.msra.mxu0 0.0
  %5790 = vmatprep.subr.mxu0 0.0
  %5791 = vmatpush1.msra.mxu0 0.0
  %5792 = vmatprep.subr.mxu0 0.0
  %5793 = vmatpush1.msra.mxu0 0.0
  %5794 = vmatprep.subr.mxu0 0.0
  %5795 = vmatpush1.msra.mxu0 0.0
  %5796 = vmatprep.subr.mxu0 0.0
  %5797 = vmatpush1.msra.mxu0 0.0
  %5798 = vmatprep.subr.mxu0 0.0
  %5799 = vmatpush1.msra.mxu0 0.0
  %5800 = vmatprep.mubr.f32.mxu0 0.0
  %5801 = vmatmul.mubr.f32.gmra.mrb[0].mxu0 %v5728
  %v5802 = vpop.f32.mrb[0].mxu0
  %v5803 = vadd.f32 0.0, %v5802
  %v5804 = vpop.f32.mrb[0].mxu0
  %v5805 = vadd.f32 0.0, %v5804
  %5806 = vdwg.mxu0
  %v5807 = vadd.f32 %v5494, %v5803
  %v5808 = vadd.f32 %v5495, %v5805
  %v5809 = vadd.f32 %v5807, %v2981
  %v5810 = vadd.f32 %v5808, %v2981
  %s5811 = scalar_lea.vmem %s3, 16
  %5812 = vst [vmem:[%s5811] sm:$0xff] %v5809
  %5813 = vst [vmem:[%s5811 + $0x8] sm:$0xff] %v5810
  // Predicated region
  $region14: #{thermometric_module_forward.1} parent=0 // pred_check
    _
  $region15: #{thermometric_module_forward.1} parent=0 // pred_check_branch
    %5815 = sbr.rel (0) target = $region17
  $region16: #{thermometric_module_forward.1} parent=0 // pred_region
    _
  $region17: #{thermometric_module_forward.1} parent=0 // pred_fallthru
    _
  // Predicated region
  $region18: #{thermometric_module_forward.1} parent=0 // pred_check
    _
  $region19: #{thermometric_module_forward.1} parent=0 // pred_check_branch
    %5817 = sbr.rel (0) target = $region21
  $region20: #{thermometric_module_forward.1} parent=0 // pred_region
    _
  $region21: #{thermometric_module_forward.1} parent=0 // pred_fallthru
    _

</llo_original>
